<compile_context>
chip_gen: v5e
topology: v5e:2x2
jax: 0.10.0
libtpu: 0.0.40
codegen_flags: <defaults>
</compile_context>

<pallas_src>
import jax
import jax.numpy as jnp
from jax.experimental import pallas as pl
from jax.experimental.pallas import tpu as pltpu


def _round_up(n, m):
    return ((n + m - 1) // m) * m


def facenet_kernel(x_ref,
                   w1_ref, b1_ref,
                   w2_ref, b2_ref,
                   w3_ref, b3_ref,
                   w4_ref, b4_ref,
                   out_ref):
    # One batch tile per grid step. bf16 weights are VMEM-resident (constant index_map);
    # all matmuls are bf16 x bf16 with f32 accumulation on the MXU.
    x = x_ref[...].astype(jnp.bfloat16)

    h1 = jnp.dot(x, w1_ref[...], preferred_element_type=jnp.float32) + b1_ref[...]
    h1 = jnp.maximum(h1, 0.0).astype(jnp.bfloat16)

    h2 = jnp.dot(h1, w2_ref[...], preferred_element_type=jnp.float32) + b2_ref[...]
    h2 = jnp.maximum(h2, 0.0).astype(jnp.bfloat16)

    h3 = jnp.dot(h2, w3_ref[...], preferred_element_type=jnp.float32) + b3_ref[...]
    h3 = jnp.maximum(h3, 0.0)  # keep f32 for the VPU reduction below

    # Final layer (256 -> 1): N=1 would waste the MXU result width and leave a lane-sparse
    # output, so compute it on the VPU as a broadcast-multiply + lane reduction.
    w4 = w4_ref[...].astype(jnp.float32)                       # (1, 256)
    y = jnp.sum(h3 * w4, axis=-1, keepdims=True) + b4_ref[...]  # (TB, 1)
    out_ref[...] = y.astype(out_ref.dtype)


def facenet_forward(x, params, *, tb_max=256):
    """x: (B, 512) float32. params: bf16 weights (pre-transposed) + f32 biases."""
    B, IN = x.shape
    w1, b1 = params["w1"], params["b1"]
    w2, b2 = params["w2"], params["b2"]
    w3, b3 = params["w3"], params["b3"]
    w4, b4 = params["w4"], params["b4"]
    H1, H2, H3 = w1.shape[1], w2.shape[1], w3.shape[1]

    # Batch tile: multiple of 8 (sublane), capped at tb_max; pad B up to a tile multiple.
    TB = min(tb_max, _round_up(B, 8))
    B_pad = _round_up(B, TB)
    if B_pad != B:
        x = jnp.pad(x, ((0, B_pad - B), (0, 0)))

    grid = (B_pad // TB,)

    def tiled(shape):          # tiles along batch
        return pl.BlockSpec(shape, lambda i: (i, 0))

    def resident(shape):       # same block every step -> DMA'd once, stays in VMEM
        return pl.BlockSpec(shape, lambda i: (0, 0))

    out_shape = jax.ShapeDtypeStruct((B_pad, 1), jnp.float32)

    out = pl.pallas_call(
        facenet_kernel,
        out_shape=out_shape,
        grid=grid,
        in_specs=[
            tiled((TB, IN)),
            resident((IN, H1)), resident((1, H1)),
            resident((H1, H2)), resident((1, H2)),
            resident((H2, H3)), resident((1, H3)),
            resident((1, H3)), resident((1, 1)),
        ],
        out_specs=tiled((TB, 1)),
        compiler_params=pltpu.CompilerParams(
            dimension_semantics=("parallel",),
            vmem_limit_bytes=24 << 20,
        ),
    )(x, w1, b1, w2, b2, w3, b3, w4, b4)

    return out[:B]


def init_params(key, in_features=512, out_features=1, hidden=1024):
    """PyTorch-style uniform(+-1/sqrt(fan_in)) init.

    Layers 1-3 weights stored as (in_dim, out_dim) = W^T of nn.Linear.weight, cast once
    to bfloat16. Layer 4 weight stored as a (1, 256) bf16 row for the VPU reduction.
    Biases stay float32."""
    dims = [(in_features, hidden),
            (hidden, hidden // 2),
            (hidden // 2, hidden // 4),
            (hidden // 4, out_features)]
    params = {}
    for i, (din, dout) in enumerate(dims, start=1):
        key, kw, kb = jax.random.split(key, 3)
        bound = 1.0 / jnp.sqrt(jnp.float32(din))
        w = jax.random.uniform(kw, (din, dout), jnp.float32, minval=-bound, maxval=bound)
        b = jax.random.uniform(kb, (1, dout), jnp.float32, minval=-bound, maxval=bound)
        if i == 4:
            w = w.T  # (1, 256) row for the final VPU dot-product layer
        params[f"w{i}"] = w.astype(jnp.bfloat16)
        params[f"b{i}"] = b
    return params


def facenet_reference(x, params):
    """Pure-JAX reference mirroring the kernel's bf16/f32 mixed precision."""
    h = x.astype(jnp.bfloat16)
    h = jnp.maximum(jnp.dot(h, params["w1"], preferred_element_type=jnp.float32)
                    + params["b1"], 0.0).astype(jnp.bfloat16)
    h = jnp.maximum(jnp.dot(h, params["w2"], preferred_element_type=jnp.float32)
                    + params["b2"], 0.0).astype(jnp.bfloat16)
    h3 = jnp.maximum(jnp.dot(h, params["w3"], preferred_element_type=jnp.float32)
                     + params["b3"], 0.0)
    w4 = params["w4"].astype(jnp.float32)
    return jnp.sum(h3 * w4, axis=-1, keepdims=True) + params["b4"]


if __name__ == "__main__":
    key = jax.random.PRNGKey(0)
    key, kx = jax.random.split(key)

    B, IN = 8, 512
    x = jax.random.normal(kx, (B, IN), jnp.float32)
    params = init_params(key, in_features=IN, out_features=1, hidden=1024)

    out = facenet_forward(x, params)
    out = jax.block_until_ready(out)

    ref = facenet_reference(x, params)
    assert out.shape == (B, 1)
    assert jnp.allclose(out, ref, atol=1e-3, rtol=1e-3), "mismatch vs reference"

    print("KERNEL_OK")
</pallas_src>

<mosaic_0001>
module attributes {stable_mosaic.version = 11 : i64} {
  func.func @facenet_kernel(%arg0: i32, %arg1: memref<8x512xf32, #tpu.memory_space<vmem>>, %arg2: memref<512x1024xbf16, #tpu.memory_space<vmem>>, %arg3: memref<1x1024xf32, #tpu.memory_space<vmem>>, %arg4: memref<1024x512xbf16, #tpu.memory_space<vmem>>, %arg5: memref<1x512xf32, #tpu.memory_space<vmem>>, %arg6: memref<512x256xbf16, #tpu.memory_space<vmem>>, %arg7: memref<1x256xf32, #tpu.memory_space<vmem>>, %arg8: memref<1x256xbf16, #tpu.memory_space<vmem>>, %arg9: memref<1x1xf32, #tpu.memory_space<vmem>>, %arg10: memref<8x1xf32, #tpu.memory_space<vmem>>) attributes {dimension_semantics = [#tpu.dimension_semantics<parallel>], iteration_bounds = array<i64: 1>, scalar_prefetch = 0 : i64, scratch_operands = 0 : i64, tpu.core_type = #tpu.core_type<tc>, window_params = [{transform_indices = @transform_0, window_bounds = array<i64: 8, 512>}, {pipeline_mode = #tpu.pipeline_mode<synchronous>, transform_indices = @transform_1, window_bounds = array<i64: 512, 1024>}, {pipeline_mode = #tpu.pipeline_mode<synchronous>, transform_indices = @transform_2, window_bounds = array<i64: 1, 1024>}, {pipeline_mode = #tpu.pipeline_mode<synchronous>, transform_indices = @transform_3, window_bounds = array<i64: 1024, 512>}, {pipeline_mode = #tpu.pipeline_mode<synchronous>, transform_indices = @transform_4, window_bounds = array<i64: 1, 512>}, {pipeline_mode = #tpu.pipeline_mode<synchronous>, transform_indices = @transform_5, window_bounds = array<i64: 512, 256>}, {pipeline_mode = #tpu.pipeline_mode<synchronous>, transform_indices = @transform_6, window_bounds = array<i64: 1, 256>}, {pipeline_mode = #tpu.pipeline_mode<synchronous>, transform_indices = @transform_7, window_bounds = array<i64: 1, 256>}, {pipeline_mode = #tpu.pipeline_mode<synchronous>, transform_indices = @transform_8, window_bounds = array<i64: 1, 1>}, {transform_indices = @transform_9, window_bounds = array<i64: 8, 1>}]} {
    %c0 = arith.constant 0 : index
    %c0_0 = arith.constant 0 : index
    %0 = vector.load %arg1[%c0, %c0_0] : memref<8x512xf32, #tpu.memory_space<vmem>>, vector<8x512xf32>
    %1 = arith.truncf %0 : vector<8x512xf32> to vector<8x512xbf16>
    %c0_1 = arith.constant 0 : index
    %c0_2 = arith.constant 0 : index
    %2 = vector.load %arg2[%c0_1, %c0_2] : memref<512x1024xbf16, #tpu.memory_space<vmem>>, vector<512x1024xbf16>
    %cst = arith.constant dense<0.000000e+00> : vector<8x1024xf32>
    %3 = tpu.matmul %1, %2, %cst {dimension_numbers = #tpu.dot_dimension_numbers<[1], [0], [0], [1], [0, 0, 1, 1], [], []>} : vector<8x512xbf16>, vector<512x1024xbf16>, vector<8x1024xf32> -> vector<8x1024xf32>
    %c0_3 = arith.constant 0 : index
    %c0_4 = arith.constant 0 : index
    %4 = vector.load %arg3[%c0_3, %c0_4] : memref<1x1024xf32, #tpu.memory_space<vmem>>, vector<1x1024xf32>
    %5 = vector.broadcast %4 : vector<1x1024xf32> to vector<8x1024xf32>
    %6 = arith.addf %3, %5 : vector<8x1024xf32>
    %cst_5 = arith.constant 0.000000e+00 : f32
    %7 = vector.broadcast %cst_5 : f32 to vector<8x1024xf32>
    %8 = arith.maximumf %6, %7 : vector<8x1024xf32>
    %9 = arith.truncf %8 : vector<8x1024xf32> to vector<8x1024xbf16>
    %c0_6 = arith.constant 0 : index
    %c0_7 = arith.constant 0 : index
    %10 = vector.load %arg4[%c0_6, %c0_7] : memref<1024x512xbf16, #tpu.memory_space<vmem>>, vector<1024x512xbf16>
    %cst_8 = arith.constant dense<0.000000e+00> : vector<8x512xf32>
    %11 = tpu.matmul %9, %10, %cst_8 {dimension_numbers = #tpu.dot_dimension_numbers<[1], [0], [0], [1], [0, 0, 1, 1], [], []>} : vector<8x1024xbf16>, vector<1024x512xbf16>, vector<8x512xf32> -> vector<8x512xf32>
    %c0_9 = arith.constant 0 : index
    %c0_10 = arith.constant 0 : index
    %12 = vector.load %arg5[%c0_9, %c0_10] : memref<1x512xf32, #tpu.memory_space<vmem>>, vector<1x512xf32>
    %13 = vector.broadcast %12 : vector<1x512xf32> to vector<8x512xf32>
    %14 = arith.addf %11, %13 : vector<8x512xf32>
    %cst_11 = arith.constant 0.000000e+00 : f32
    %15 = vector.broadcast %cst_11 : f32 to vector<8x512xf32>
    %16 = arith.maximumf %14, %15 : vector<8x512xf32>
    %17 = arith.truncf %16 : vector<8x512xf32> to vector<8x512xbf16>
    %c0_12 = arith.constant 0 : index
    %c0_13 = arith.constant 0 : index
    %18 = vector.load %arg6[%c0_12, %c0_13] : memref<512x256xbf16, #tpu.memory_space<vmem>>, vector<512x256xbf16>
    %cst_14 = arith.constant dense<0.000000e+00> : vector<8x256xf32>
    %19 = tpu.matmul %17, %18, %cst_14 {dimension_numbers = #tpu.dot_dimension_numbers<[1], [0], [0], [1], [0, 0, 1, 1], [], []>} : vector<8x512xbf16>, vector<512x256xbf16>, vector<8x256xf32> -> vector<8x256xf32>
    %c0_15 = arith.constant 0 : index
    %c0_16 = arith.constant 0 : index
    %20 = vector.load %arg7[%c0_15, %c0_16] : memref<1x256xf32, #tpu.memory_space<vmem>>, vector<1x256xf32>
    %21 = vector.broadcast %20 : vector<1x256xf32> to vector<8x256xf32>
    %22 = arith.addf %19, %21 : vector<8x256xf32>
    %cst_17 = arith.constant 0.000000e+00 : f32
    %23 = vector.broadcast %cst_17 : f32 to vector<8x256xf32>
    %24 = arith.maximumf %22, %23 : vector<8x256xf32>
    %c0_18 = arith.constant 0 : index
    %c0_19 = arith.constant 0 : index
    %25 = vector.load %arg8[%c0_18, %c0_19] : memref<1x256xbf16, #tpu.memory_space<vmem>>, vector<1x256xbf16>
    %26 = arith.extf %25 : vector<1x256xbf16> to vector<1x256xf32>
    %27 = vector.broadcast %26 : vector<1x256xf32> to vector<8x256xf32>
    %28 = arith.mulf %24, %27 : vector<8x256xf32>
    %cst_20 = arith.constant dense<0.000000e+00> : vector<8xf32>
    %29 = vector.multi_reduction <add>, %28, %cst_20 [1] : vector<8x256xf32> to vector<8xf32>
    %30 = vector.shape_cast %29 : vector<8xf32> to vector<8x1xf32>
    %c0_21 = arith.constant 0 : index
    %c0_22 = arith.constant 0 : index
    %31 = vector.load %arg9[%c0_21, %c0_22] : memref<1x1xf32, #tpu.memory_space<vmem>>, vector<1x1xf32>
    %32 = vector.broadcast %31 : vector<1x1xf32> to vector<8x1xf32>
    %33 = arith.addf %30, %32 : vector<8x1xf32>
    %c0_23 = arith.constant 0 : index
    %c0_24 = arith.constant 0 : index
    %34 = vector.load %arg10[%c0_23, %c0_24] : memref<8x1xf32, #tpu.memory_space<vmem>>, vector<8x1xf32>
    tpu.vector_store %arg10[%c0_23, %c0_24], %33 {strides = array<i32>} : memref<8x1xf32, #tpu.memory_space<vmem>>, vector<8x1xf32>,
    return
  }
  func.func @transform_0(%arg0: i32) -> (i32, i32) {
    %c0_i32 = arith.constant 0 : i32
    %c0_i32_0 = arith.constant 0 : i32
    return %arg0, %c0_i32 : i32, i32
  }
  func.func @transform_1(%arg0: i32) -> (i32, i32) {
    %c0_i32 = arith.constant 0 : i32
    %c0_i32_0 = arith.constant 0 : i32
    %c0_i32_1 = arith.constant 0 : i32
    return %c0_i32, %c0_i32_0 : i32, i32
  }
  func.func @transform_2(%arg0: i32) -> (i32, i32) {
    %c0_i32 = arith.constant 0 : i32
    %c0_i32_0 = arith.constant 0 : i32
    %c0_i32_1 = arith.constant 0 : i32
    return %c0_i32, %c0_i32_0 : i32, i32
  }
  func.func @transform_3(%arg0: i32) -> (i32, i32) {
    %c0_i32 = arith.constant 0 : i32
    %c0_i32_0 = arith.constant 0 : i32
    %c0_i32_1 = arith.constant 0 : i32
    return %c0_i32, %c0_i32_0 : i32, i32
  }
  func.func @transform_4(%arg0: i32) -> (i32, i32) {
    %c0_i32 = arith.constant 0 : i32
    %c0_i32_0 = arith.constant 0 : i32
    %c0_i32_1 = arith.constant 0 : i32
    return %c0_i32, %c0_i32_0 : i32, i32
  }
  func.func @transform_5(%arg0: i32) -> (i32, i32) {
    %c0_i32 = arith.constant 0 : i32
    %c0_i32_0 = arith.constant 0 : i32
    %c0_i32_1 = arith.constant 0 : i32
    return %c0_i32, %c0_i32_0 : i32, i32
  }
  func.func @transform_6(%arg0: i32) -> (i32, i32) {
    %c0_i32 = arith.constant 0 : i32
    %c0_i32_0 = arith.constant 0 : i32
    %c0_i32_1 = arith.constant 0 : i32
    return %c0_i32, %c0_i32_0 : i32, i32
  }
  func.func @transform_7(%arg0: i32) -> (i32, i32) {
    %c0_i32 = arith.constant 0 : i32
    %c0_i32_0 = arith.constant 0 : i32
    %c0_i32_1 = arith.constant 0 : i32
    return %c0_i32, %c0_i32_0 : i32, i32
  }
  func.func @transform_8(%arg0: i32) -> (i32, i32) {
    %c0_i32 = arith.constant 0 : i32
    %c0_i32_0 = arith.constant 0 : i32
    %c0_i32_1 = arith.constant 0 : i32
    return %c0_i32, %c0_i32_0 : i32, i32
  }
  func.func @transform_9(%arg0: i32) -> (i32, i32) {
    %c0_i32 = arith.constant 0 : i32
    %c0_i32_0 = arith.constant 0 : i32
    return %arg0, %c0_i32 : i32, i32
  }
}

</mosaic_0001>

<llo_original>
// kernel: tpu_custom_call.1
$region0: #{tpu_custom_call.1}
  #allocation0 [shape = 'u32[]', space=smem, size = 0x4, offset = 0x4, fixed_abs, tag = 'smem constant byte address 0x4 - core index']
  #allocation1 [shape = 'u32[72,128]{1,0:T(1,128)}', space=vmem, size = 0x9000, scoped, tag = 'internal scratch']
  #allocation2 [shape = 'f32[1,1]{1,0:T(1,128)S(1)}', space=vmem, size = 0x200, scoped, tag = 'scoped memory for tpu_custom_call.1']
  %s0 = inlined_call_operand.hbm [shape: f32[8,512], index: 0, kind: input, shape index: {}]
  %s1 = inlined_call_operand.hbm [shape: bf16[512,1024], index: 1, kind: input, shape index: {}]
  %s2 = inlined_call_operand.hbm [shape: f32[1,1024], index: 2, kind: input, shape index: {}]
  %s3 = inlined_call_operand.hbm [shape: bf16[1024,512], index: 3, kind: input, shape index: {}]
  %s4 = inlined_call_operand.vmem [shape: f32[1,512], index: 4, kind: input, shape index: {}]
  %s5 = inlined_call_operand.hbm [shape: bf16[512,256], index: 5, kind: input, shape index: {}]
  %s6 = inlined_call_operand.vmem [shape: f32[1,256], index: 6, kind: input, shape index: {}]
  %s7 = inlined_call_operand.vmem [shape: bf16[1,256], index: 7, kind: input, shape index: {}]
  %s8 = inlined_call_operand.<no memory space> [shape: f32[1,1], index: 8, kind: input, shape index: {}]
  %s9 = inlined_call_operand.vmem [shape: f32[8,1], index: 9, kind: output, shape index: {}]
  %s10 = sld [smem:[#allocation0]]
  $region66: #{tpu_custom_call.1} parent=0
    _
  %s12 = ssub.s32 1, %s10
  %s13 = scalar_select 0, %s12, %s10
  %v14 = vstv %s8
  %15 = vst [vmem:[#allocation2] sm:$0x1] %v14
  $region1: #{tpu_custom_call.1} parent=0
    #allocation3 [shape = 'u8[16384]{0}', space=vmem, size = 0x4000, scoped, tag = 'input window, operand 0, single buffered']
    #allocation4 [shape = 's32[1]{0}', space=sflag, size = 0x4, scoped, tag = 'scoped memory for tpu_custom_call.1']
    #allocation5 [shape = 'u8[1048576]{0}', space=vmem, size = 0x100000, scoped, tag = 'input window, operand 1, single buffered']
    #allocation6 [shape = 's32[1]{0}', space=sflag, size = 0x4, scoped, tag = 'scoped memory for tpu_custom_call.1']
    #allocation7 [shape = 'u8[4096]{0}', space=vmem, size = 0x1000, scoped, tag = 'input window, operand 2, single buffered']
    #allocation8 [shape = 'u8[1048576]{0}', space=vmem, size = 0x100000, scoped, tag = 'input window, operand 3, single buffered']
    #allocation9 [shape = 's32[1]{0}', space=sflag, size = 0x4, scoped, tag = 'scoped memory for tpu_custom_call.1']
    #allocation10 [shape = 'u8[262144]{0}', space=vmem, size = 0x40000, scoped, tag = 'input window, operand 5, single buffered']
    %16 = vsyncpa [#allocation4], 0
    %17 = vsyncpa [#allocation6], 0
    %18 = vsyncpa [#allocation9], 0
    // Predicated region
    $region2: #{tpu_custom_call.1} parent=1 // pred_check
      _
    $region3: #{tpu_custom_call.1} parent=1 // pred_check_branch
      %20 = sbr.rel (0) target = $region5
    $region4: #{tpu_custom_call.1} parent=1 // pred_region
      %22 = vsyncadd [#allocation4], 0
      %s24 = sshll.u32 %s0, 4
      %s25 = int_to_ptr.hbm [resolvable:$true] %s24
      %s26 = sshll.u32 [#allocation3], 4
      %s27 = int_to_ptr.vmem [resolvable:$true] %s26
      %29 = dma.hbm_to_vmem [thread:$0]  %s25, 512, %s27, [#allocation4]
    $region5: #{tpu_custom_call.1} parent=1 // pred_fallthru
      _
    // Predicated region
    $region6: #{tpu_custom_call.1} parent=1 // pred_check
      _
    $region7: #{tpu_custom_call.1} parent=1 // pred_check_branch
      %31 = sbr.rel (0) target = $region9
    $region8: #{tpu_custom_call.1} parent=1 // pred_region
      %33 = vsyncadd [#allocation6], 0
      %s34 = sshll.u32 %s1, 4
      %s35 = int_to_ptr.hbm [resolvable:$true] %s34
      %s36 = sshll.u32 [#allocation5], 4
      %s37 = int_to_ptr.vmem [resolvable:$true] %s36
      %42 = dma.hbm_to_vmem [thread:$0]  %s35, 32768, %s37, [#allocation6], 512, 512, 32
    $region9: #{tpu_custom_call.1} parent=1 // pred_fallthru
      _
    // Predicated region
    $region10: #{tpu_custom_call.1} parent=1 // pred_check
      _
    $region11: #{tpu_custom_call.1} parent=1 // pred_check_branch
      %44 = sbr.rel (0) target = $region13
    $region12: #{tpu_custom_call.1} parent=1 // pred_region
      %46 = vsyncadd [#allocation6], 0
      %s48 = sshll.u32 %s2, 4
      %s49 = int_to_ptr.hbm [resolvable:$true] %s48
      %s50 = sshll.u32 [#allocation7], 4
      %s51 = int_to_ptr.vmem [resolvable:$true] %s50
      %53 = dma.hbm_to_vmem [thread:$0]  %s49, 128, %s51, [#allocation6]
    $region13: #{tpu_custom_call.1} parent=1 // pred_fallthru
      _
    // Predicated region
    $region14: #{tpu_custom_call.1} parent=1 // pred_check
      _
    $region15: #{tpu_custom_call.1} parent=1 // pred_check_branch
      %55 = sbr.rel (0) target = $region17
    $region16: #{tpu_custom_call.1} parent=1 // pred_region
      %57 = vsyncadd [#allocation9], 0
      %s58 = sshll.u32 %s3, 4
      %s59 = int_to_ptr.hbm [resolvable:$true] %s58
      %s60 = sshll.u32 [#allocation8], 4
      %s61 = int_to_ptr.vmem [resolvable:$true] %s60
      %66 = dma.hbm_to_vmem [thread:$0]  %s59, 32768, %s61, [#allocation9], 256, 256, 16
    $region17: #{tpu_custom_call.1} parent=1 // pred_fallthru
      _
    // Predicated region
    $region18: #{tpu_custom_call.1} parent=1 // pred_check
      _
    $region19: #{tpu_custom_call.1} parent=1 // pred_check_branch
      %68 = sbr.rel (0) target = $region21
    $region20: #{tpu_custom_call.1} parent=1 // pred_region
      _
    $region21: #{tpu_custom_call.1} parent=1 // pred_fallthru
      _
    // Predicated region
    $region22: #{tpu_custom_call.1} parent=1 // pred_check
      _
    $region23: #{tpu_custom_call.1} parent=1 // pred_check_branch
      %70 = sbr.rel (0) target = $region25
    $region24: #{tpu_custom_call.1} parent=1 // pred_region
      %72 = vsyncadd [#allocation9], 0
      %s73 = sshll.u32 %s5, 4
      %s74 = int_to_ptr.hbm [resolvable:$true] %s73
      %s75 = sshll.u32 [#allocation10], 4
      %s76 = int_to_ptr.vmem [resolvable:$true] %s75
      %81 = dma.hbm_to_vmem [thread:$0]  %s74, 8192, %s76, [#allocation9], 128, 128, 8
    $region25: #{tpu_custom_call.1} parent=1 // pred_fallthru
      _
    // Predicated region
    $region26: #{tpu_custom_call.1} parent=1 // pred_check
      _
    $region27: #{tpu_custom_call.1} parent=1 // pred_check_branch
      %83 = sbr.rel (0) target = $region29
    $region28: #{tpu_custom_call.1} parent=1 // pred_region
      _
    $region29: #{tpu_custom_call.1} parent=1 // pred_fallthru
      _
    // Predicated region
    $region30: #{tpu_custom_call.1} parent=1 // pred_check
      _
    $region31: #{tpu_custom_call.1} parent=1 // pred_check_branch
      %85 = sbr.rel (0) target = $region33
    $region32: #{tpu_custom_call.1} parent=1 // pred_region
      _
    $region33: #{tpu_custom_call.1} parent=1 // pred_fallthru
      _
    // Predicated region
    $region34: #{tpu_custom_call.1} parent=1 // pred_check
      _
    $region35: #{tpu_custom_call.1} parent=1 // pred_check_branch
      %87 = sbr.rel (0) target = $region37
    $region36: #{tpu_custom_call.1} parent=1 // pred_region
      _
    $region37: #{tpu_custom_call.1} parent=1 // pred_fallthru
      _
    // Predicated region
    $region38: #{tpu_custom_call.1} parent=1 // pred_check
      _
    $region39: #{tpu_custom_call.1} parent=1 // pred_check_branch
      %89 = sbr.rel (0) target = $region41
    $region40: #{tpu_custom_call.1} parent=1 // pred_region
      %91 = dma.done [#allocation4], 512
    $region41: #{tpu_custom_call.1} parent=1 // pred_fallthru
      _
    // Predicated region
    $region42: #{tpu_custom_call.1} parent=1 // pred_check
      _
    $region43: #{tpu_custom_call.1} parent=1 // pred_check_branch
      %93 = sbr.rel (0) target = $region45
    $region44: #{tpu_custom_call.1} parent=1 // pred_region
      %95 = dma.done [#allocation6], 32768
    $region45: #{tpu_custom_call.1} parent=1 // pred_fallthru
      _
    // Predicated region
    $region46: #{tpu_custom_call.1} parent=1 // pred_check
      _
    $region47: #{tpu_custom_call.1} parent=1 // pred_check_branch
      %97 = sbr.rel (0) target = $region49
    $region48: #{tpu_custom_call.1} parent=1 // pred_region
      %99 = dma.done [#allocation6], 128
    $region49: #{tpu_custom_call.1} parent=1 // pred_fallthru
      _
    // Predicated region
    $region50: #{tpu_custom_call.1} parent=1 // pred_check
      _
    $region51: #{tpu_custom_call.1} parent=1 // pred_check_branch
      %101 = sbr.rel (0) target = $region53
    $region52: #{tpu_custom_call.1} parent=1 // pred_region
      %103 = dma.done [#allocation9], 32768
    $region53: #{tpu_custom_call.1} parent=1 // pred_fallthru
      _
    // Predicated region
    $region54: #{tpu_custom_call.1} parent=1 // pred_check
      _
    $region55: #{tpu_custom_call.1} parent=1 // pred_check_branch
      %105 = sbr.rel (0) target = $region57
    $region56: #{tpu_custom_call.1} parent=1 // pred_region
      %107 = dma.done [#allocation9], 8192
    $region57: #{tpu_custom_call.1} parent=1 // pred_fallthru
      _
    %v108 = vld [vmem:[#allocation3] sm:$0xff]
    %v109 = vld [vmem:[#allocation3 + $0x8] sm:$0xff]
    %v110 = vld [vmem:[#allocation3 + $0x10] sm:$0xff]
    %v111 = vld [vmem:[#allocation3 + $0x18] sm:$0xff]
    %v112 = vpack.c.bf16 %v108, %v108
    %v113 = vpack.c.bf16 %v109, %v109
    %v114 = vpack.c.bf16 %v110, %v110
    %v115 = vpack.c.bf16 %v111, %v111
    %v116 = vld [vmem:[#allocation5] sm:$0xff]
    %v117 = vld [vmem:[#allocation5 + $0x8] sm:$0xff]
    %v118 = vld [vmem:[#allocation5 + $0x10] sm:$0xff]
    %v119 = vld [vmem:[#allocation5 + $0x18] sm:$0xff]
    %v120 = vld [vmem:[#allocation5 + $0x20] sm:$0xff]
    %v121 = vld [vmem:[#allocation5 + $0x28] sm:$0xff]
    %v122 = vld [vmem:[#allocation5 + $0x30] sm:$0xff]
    %v123 = vld [vmem:[#allocation5 + $0x38] sm:$0xff]
    %v124 = vld [vmem:[#allocation5 + $0x40] sm:$0xff]
    %v125 = vld [vmem:[#allocation5 + $0x48] sm:$0xff]
    %v126 = vld [vmem:[#allocation5 + $0x50] sm:$0xff]
    %v127 = vld [vmem:[#allocation5 + $0x58] sm:$0xff]
    %v128 = vld [vmem:[#allocation5 + $0x60] sm:$0xff]
    %v129 = vld [vmem:[#allocation5 + $0x68] sm:$0xff]
    %v130 = vld [vmem:[#allocation5 + $0x70] sm:$0xff]
    %v131 = vld [vmem:[#allocation5 + $0x78] sm:$0xff]
    %v132 = vld [vmem:[#allocation5 + $0x80] sm:$0xff]
    %v133 = vld [vmem:[#allocation5 + $0x88] sm:$0xff]
    %v134 = vld [vmem:[#allocation5 + $0x90] sm:$0xff]
    %v135 = vld [vmem:[#allocation5 + $0x98] sm:$0xff]
    %v136 = vld [vmem:[#allocation5 + $0xa0] sm:$0xff]
    %v137 = vld [vmem:[#allocation5 + $0xa8] sm:$0xff]
    %v138 = vld [vmem:[#allocation5 + $0xb0] sm:$0xff]
    %v139 = vld [vmem:[#allocation5 + $0xb8] sm:$0xff]
    %v140 = vld [vmem:[#allocation5 + $0xc0] sm:$0xff]
    %v141 = vld [vmem:[#allocation5 + $0xc8] sm:$0xff]
    %v142 = vld [vmem:[#allocation5 + $0xd0] sm:$0xff]
    %v143 = vld [vmem:[#allocation5 + $0xd8] sm:$0xff]
    %v144 = vld [vmem:[#allocation5 + $0xe0] sm:$0xff]
    %v145 = vld [vmem:[#allocation5 + $0xe8] sm:$0xff]
    %v146 = vld [vmem:[#allocation5 + $0xf0] sm:$0xff]
    %v147 = vld [vmem:[#allocation5 + $0xf8] sm:$0xff]
    %v148 = vld [vmem:[#allocation5 + $0x100] sm:$0xff]
    %v149 = vld [vmem:[#allocation5 + $0x108] sm:$0xff]
    %v150 = vld [vmem:[#allocation5 + $0x110] sm:$0xff]
    %v151 = vld [vmem:[#allocation5 + $0x118] sm:$0xff]
    %v152 = vld [vmem:[#allocation5 + $0x120] sm:$0xff]
    %v153 = vld [vmem:[#allocation5 + $0x128] sm:$0xff]
    %v154 = vld [vmem:[#allocation5 + $0x130] sm:$0xff]
    %v155 = vld [vmem:[#allocation5 + $0x138] sm:$0xff]
    %v156 = vld [vmem:[#allocation5 + $0x140] sm:$0xff]
    %v157 = vld [vmem:[#allocation5 + $0x148] sm:$0xff]
    %v158 = vld [vmem:[#allocation5 + $0x150] sm:$0xff]
    %v159 = vld [vmem:[#allocation5 + $0x158] sm:$0xff]
    %v160 = vld [vmem:[#allocation5 + $0x160] sm:$0xff]
    %v161 = vld [vmem:[#allocation5 + $0x168] sm:$0xff]
    %v162 = vld [vmem:[#allocation5 + $0x170] sm:$0xff]
    %v163 = vld [vmem:[#allocation5 + $0x178] sm:$0xff]
    %v164 = vld [vmem:[#allocation5 + $0x180] sm:$0xff]
    %v165 = vld [vmem:[#allocation5 + $0x188] sm:$0xff]
    %v166 = vld [vmem:[#allocation5 + $0x190] sm:$0xff]
    %v167 = vld [vmem:[#allocation5 + $0x198] sm:$0xff]
    %v168 = vld [vmem:[#allocation5 + $0x1a0] sm:$0xff]
    %v169 = vld [vmem:[#allocation5 + $0x1a8] sm:$0xff]
    %v170 = vld [vmem:[#allocation5 + $0x1b0] sm:$0xff]
    %v171 = vld [vmem:[#allocation5 + $0x1b8] sm:$0xff]
    %v172 = vld [vmem:[#allocation5 + $0x1c0] sm:$0xff]
    %v173 = vld [vmem:[#allocation5 + $0x1c8] sm:$0xff]
    %v174 = vld [vmem:[#allocation5 + $0x1d0] sm:$0xff]
    %v175 = vld [vmem:[#allocation5 + $0x1d8] sm:$0xff]
    %v176 = vld [vmem:[#allocation5 + $0x1e0] sm:$0xff]
    %v177 = vld [vmem:[#allocation5 + $0x1e8] sm:$0xff]
    %v178 = vld [vmem:[#allocation5 + $0x1f0] sm:$0xff]
    %v179 = vld [vmem:[#allocation5 + $0x1f8] sm:$0xff]
    %v180 = vld [vmem:[#allocation5 + $0x200] sm:$0xff]
    %v181 = vld [vmem:[#allocation5 + $0x208] sm:$0xff]
    %v182 = vld [vmem:[#allocation5 + $0x210] sm:$0xff]
    %v183 = vld [vmem:[#allocation5 + $0x218] sm:$0xff]
    %v184 = vld [vmem:[#allocation5 + $0x220] sm:$0xff]
    %v185 = vld [vmem:[#allocation5 + $0x228] sm:$0xff]
    %v186 = vld [vmem:[#allocation5 + $0x230] sm:$0xff]
    %v187 = vld [vmem:[#allocation5 + $0x238] sm:$0xff]
    %v188 = vld [vmem:[#allocation5 + $0x240] sm:$0xff]
    %v189 = vld [vmem:[#allocation5 + $0x248] sm:$0xff]
    %v190 = vld [vmem:[#allocation5 + $0x250] sm:$0xff]
    %v191 = vld [vmem:[#allocation5 + $0x258] sm:$0xff]
    %v192 = vld [vmem:[#allocation5 + $0x260] sm:$0xff]
    %v193 = vld [vmem:[#allocation5 + $0x268] sm:$0xff]
    %v194 = vld [vmem:[#allocation5 + $0x270] sm:$0xff]
    %v195 = vld [vmem:[#allocation5 + $0x278] sm:$0xff]
    %v196 = vld [vmem:[#allocation5 + $0x280] sm:$0xff]
    %v197 = vld [vmem:[#allocation5 + $0x288] sm:$0xff]
    %v198 = vld [vmem:[#allocation5 + $0x290] sm:$0xff]
    %v199 = vld [vmem:[#allocation5 + $0x298] sm:$0xff]
    %v200 = vld [vmem:[#allocation5 + $0x2a0] sm:$0xff]
    %v201 = vld [vmem:[#allocation5 + $0x2a8] sm:$0xff]
    %v202 = vld [vmem:[#allocation5 + $0x2b0] sm:$0xff]
    %v203 = vld [vmem:[#allocation5 + $0x2b8] sm:$0xff]
    %v204 = vld [vmem:[#allocation5 + $0x2c0] sm:$0xff]
    %v205 = vld [vmem:[#allocation5 + $0x2c8] sm:$0xff]
    %v206 = vld [vmem:[#allocation5 + $0x2d0] sm:$0xff]
    %v207 = vld [vmem:[#allocation5 + $0x2d8] sm:$0xff]
    %v208 = vld [vmem:[#allocation5 + $0x2e0] sm:$0xff]
    %v209 = vld [vmem:[#allocation5 + $0x2e8] sm:$0xff]
    %v210 = vld [vmem:[#allocation5 + $0x2f0] sm:$0xff]
    %v211 = vld [vmem:[#allocation5 + $0x2f8] sm:$0xff]
    %v212 = vld [vmem:[#allocation5 + $0x300] sm:$0xff]
    %v213 = vld [vmem:[#allocation5 + $0x308] sm:$0xff]
    %v214 = vld [vmem:[#allocation5 + $0x310] sm:$0xff]
    %v215 = vld [vmem:[#allocation5 + $0x318] sm:$0xff]
    %v216 = vld [vmem:[#allocation5 + $0x320] sm:$0xff]
    %v217 = vld [vmem:[#allocation5 + $0x328] sm:$0xff]
    %v218 = vld [vmem:[#allocation5 + $0x330] sm:$0xff]
    %v219 = vld [vmem:[#allocation5 + $0x338] sm:$0xff]
    %v220 = vld [vmem:[#allocation5 + $0x340] sm:$0xff]
    %v221 = vld [vmem:[#allocation5 + $0x348] sm:$0xff]
    %v222 = vld [vmem:[#allocation5 + $0x350] sm:$0xff]
    %v223 = vld [vmem:[#allocation5 + $0x358] sm:$0xff]
    %v224 = vld [vmem:[#allocation5 + $0x360] sm:$0xff]
    %v225 = vld [vmem:[#allocation5 + $0x368] sm:$0xff]
    %v226 = vld [vmem:[#allocation5 + $0x370] sm:$0xff]
    %v227 = vld [vmem:[#allocation5 + $0x378] sm:$0xff]
    %v228 = vld [vmem:[#allocation5 + $0x380] sm:$0xff]
    %v229 = vld [vmem:[#allocation5 + $0x388] sm:$0xff]
    %v230 = vld [vmem:[#allocation5 + $0x390] sm:$0xff]
    %v231 = vld [vmem:[#allocation5 + $0x398] sm:$0xff]
    %v232 = vld [vmem:[#allocation5 + $0x3a0] sm:$0xff]
    %v233 = vld [vmem:[#allocation5 + $0x3a8] sm:$0xff]
    %v234 = vld [vmem:[#allocation5 + $0x3b0] sm:$0xff]
    %v235 = vld [vmem:[#allocation5 + $0x3b8] sm:$0xff]
    %v236 = vld [vmem:[#allocation5 + $0x3c0] sm:$0xff]
    %v237 = vld [vmem:[#allocation5 + $0x3c8] sm:$0xff]
    %v238 = vld [vmem:[#allocation5 + $0x3d0] sm:$0xff]
    %v239 = vld [vmem:[#allocation5 + $0x3d8] sm:$0xff]
    %v240 = vld [vmem:[#allocation5 + $0x3e0] sm:$0xff]
    %v241 = vld [vmem:[#allocation5 + $0x3e8] sm:$0xff]
    %v242 = vld [vmem:[#allocation5 + $0x3f0] sm:$0xff]
    %v243 = vld [vmem:[#allocation5 + $0x3f8] sm:$0xff]
    %v244 = vld [vmem:[#allocation5 + $0x400] sm:$0xff]
    %v245 = vld [vmem:[#allocation5 + $0x408] sm:$0xff]
    %v246 = vld [vmem:[#allocation5 + $0x410] sm:$0xff]
    %v247 = vld [vmem:[#allocation5 + $0x418] sm:$0xff]
    %v248 = vld [vmem:[#allocation5 + $0x420] sm:$0xff]
    %v249 = vld [vmem:[#allocation5 + $0x428] sm:$0xff]
    %v250 = vld [vmem:[#allocation5 + $0x430] sm:$0xff]
    %v251 = vld [vmem:[#allocation5 + $0x438] sm:$0xff]
    %v252 = vld [vmem:[#allocation5 + $0x440] sm:$0xff]
    %v253 = vld [vmem:[#allocation5 + $0x448] sm:$0xff]
    %v254 = vld [vmem:[#allocation5 + $0x450] sm:$0xff]
    %v255 = vld [vmem:[#allocation5 + $0x458] sm:$0xff]
    %v256 = vld [vmem:[#allocation5 + $0x460] sm:$0xff]
    %v257 = vld [vmem:[#allocation5 + $0x468] sm:$0xff]
    %v258 = vld [vmem:[#allocation5 + $0x470] sm:$0xff]
    %v259 = vld [vmem:[#allocation5 + $0x478] sm:$0xff]
    %v260 = vld [vmem:[#allocation5 + $0x480] sm:$0xff]
    %v261 = vld [vmem:[#allocation5 + $0x488] sm:$0xff]
    %v262 = vld [vmem:[#allocation5 + $0x490] sm:$0xff]
    %v263 = vld [vmem:[#allocation5 + $0x498] sm:$0xff]
    %v264 = vld [vmem:[#allocation5 + $0x4a0] sm:$0xff]
    %v265 = vld [vmem:[#allocation5 + $0x4a8] sm:$0xff]
    %v266 = vld [vmem:[#allocation5 + $0x4b0] sm:$0xff]
    %v267 = vld [vmem:[#allocation5 + $0x4b8] sm:$0xff]
    %v268 = vld [vmem:[#allocation5 + $0x4c0] sm:$0xff]
    %v269 = vld [vmem:[#allocation5 + $0x4c8] sm:$0xff]
    %v270 = vld [vmem:[#allocation5 + $0x4d0] sm:$0xff]
    %v271 = vld [vmem:[#allocation5 + $0x4d8] sm:$0xff]
    %v272 = vld [vmem:[#allocation5 + $0x4e0] sm:$0xff]
    %v273 = vld [vmem:[#allocation5 + $0x4e8] sm:$0xff]
    %v274 = vld [vmem:[#allocation5 + $0x4f0] sm:$0xff]
    %v275 = vld [vmem:[#allocation5 + $0x4f8] sm:$0xff]
    %v276 = vld [vmem:[#allocation5 + $0x500] sm:$0xff]
    %v277 = vld [vmem:[#allocation5 + $0x508] sm:$0xff]
    %v278 = vld [vmem:[#allocation5 + $0x510] sm:$0xff]
    %v279 = vld [vmem:[#allocation5 + $0x518] sm:$0xff]
    %v280 = vld [vmem:[#allocation5 + $0x520] sm:$0xff]
    %v281 = vld [vmem:[#allocation5 + $0x528] sm:$0xff]
    %v282 = vld [vmem:[#allocation5 + $0x530] sm:$0xff]
    %v283 = vld [vmem:[#allocation5 + $0x538] sm:$0xff]
    %v284 = vld [vmem:[#allocation5 + $0x540] sm:$0xff]
    %v285 = vld [vmem:[#allocation5 + $0x548] sm:$0xff]
    %v286 = vld [vmem:[#allocation5 + $0x550] sm:$0xff]
    %v287 = vld [vmem:[#allocation5 + $0x558] sm:$0xff]
    %v288 = vld [vmem:[#allocation5 + $0x560] sm:$0xff]
    %v289 = vld [vmem:[#allocation5 + $0x568] sm:$0xff]
    %v290 = vld [vmem:[#allocation5 + $0x570] sm:$0xff]
    %v291 = vld [vmem:[#allocation5 + $0x578] sm:$0xff]
    %v292 = vld [vmem:[#allocation5 + $0x580] sm:$0xff]
    %v293 = vld [vmem:[#allocation5 + $0x588] sm:$0xff]
    %v294 = vld [vmem:[#allocation5 + $0x590] sm:$0xff]
    %v295 = vld [vmem:[#allocation5 + $0x598] sm:$0xff]
    %v296 = vld [vmem:[#allocation5 + $0x5a0] sm:$0xff]
    %v297 = vld [vmem:[#allocation5 + $0x5a8] sm:$0xff]
    %v298 = vld [vmem:[#allocation5 + $0x5b0] sm:$0xff]
    %v299 = vld [vmem:[#allocation5 + $0x5b8] sm:$0xff]
    %v300 = vld [vmem:[#allocation5 + $0x5c0] sm:$0xff]
    %v301 = vld [vmem:[#allocation5 + $0x5c8] sm:$0xff]
    %v302 = vld [vmem:[#allocation5 + $0x5d0] sm:$0xff]
    %v303 = vld [vmem:[#allocation5 + $0x5d8] sm:$0xff]
    %v304 = vld [vmem:[#allocation5 + $0x5e0] sm:$0xff]
    %v305 = vld [vmem:[#allocation5 + $0x5e8] sm:$0xff]
    %v306 = vld [vmem:[#allocation5 + $0x5f0] sm:$0xff]
    %v307 = vld [vmem:[#allocation5 + $0x5f8] sm:$0xff]
    %v308 = vld [vmem:[#allocation5 + $0x600] sm:$0xff]
    %v309 = vld [vmem:[#allocation5 + $0x608] sm:$0xff]
    %v310 = vld [vmem:[#allocation5 + $0x610] sm:$0xff]
    %v311 = vld [vmem:[#allocation5 + $0x618] sm:$0xff]
    %v312 = vld [vmem:[#allocation5 + $0x620] sm:$0xff]
    %v313 = vld [vmem:[#allocation5 + $0x628] sm:$0xff]
    %v314 = vld [vmem:[#allocation5 + $0x630] sm:$0xff]
    %v315 = vld [vmem:[#allocation5 + $0x638] sm:$0xff]
    %v316 = vld [vmem:[#allocation5 + $0x640] sm:$0xff]
    %v317 = vld [vmem:[#allocation5 + $0x648] sm:$0xff]
    %v318 = vld [vmem:[#allocation5 + $0x650] sm:$0xff]
    %v319 = vld [vmem:[#allocation5 + $0x658] sm:$0xff]
    %v320 = vld [vmem:[#allocation5 + $0x660] sm:$0xff]
    %v321 = vld [vmem:[#allocation5 + $0x668] sm:$0xff]
    %v322 = vld [vmem:[#allocation5 + $0x670] sm:$0xff]
    %v323 = vld [vmem:[#allocation5 + $0x678] sm:$0xff]
    %v324 = vld [vmem:[#allocation5 + $0x680] sm:$0xff]
    %v325 = vld [vmem:[#allocation5 + $0x688] sm:$0xff]
    %v326 = vld [vmem:[#allocation5 + $0x690] sm:$0xff]
    %v327 = vld [vmem:[#allocation5 + $0x698] sm:$0xff]
    %v328 = vld [vmem:[#allocation5 + $0x6a0] sm:$0xff]
    %v329 = vld [vmem:[#allocation5 + $0x6a8] sm:$0xff]
    %v330 = vld [vmem:[#allocation5 + $0x6b0] sm:$0xff]
    %v331 = vld [vmem:[#allocation5 + $0x6b8] sm:$0xff]
    %v332 = vld [vmem:[#allocation5 + $0x6c0] sm:$0xff]
    %v333 = vld [vmem:[#allocation5 + $0x6c8] sm:$0xff]
    %v334 = vld [vmem:[#allocation5 + $0x6d0] sm:$0xff]
    %v335 = vld [vmem:[#allocation5 + $0x6d8] sm:$0xff]
    %v336 = vld [vmem:[#allocation5 + $0x6e0] sm:$0xff]
    %v337 = vld [vmem:[#allocation5 + $0x6e8] sm:$0xff]
    %v338 = vld [vmem:[#allocation5 + $0x6f0] sm:$0xff]
    %v339 = vld [vmem:[#allocation5 + $0x6f8] sm:$0xff]
    %v340 = vld [vmem:[#allocation5 + $0x700] sm:$0xff]
    %v341 = vld [vmem:[#allocation5 + $0x708] sm:$0xff]
    %v342 = vld [vmem:[#allocation5 + $0x710] sm:$0xff]
    %v343 = vld [vmem:[#allocation5 + $0x718] sm:$0xff]
    %v344 = vld [vmem:[#allocation5 + $0x720] sm:$0xff]
    %v345 = vld [vmem:[#allocation5 + $0x728] sm:$0xff]
    %v346 = vld [vmem:[#allocation5 + $0x730] sm:$0xff]
    %v347 = vld [vmem:[#allocation5 + $0x738] sm:$0xff]
    %v348 = vld [vmem:[#allocation5 + $0x740] sm:$0xff]
    %v349 = vld [vmem:[#allocation5 + $0x748] sm:$0xff]
    %v350 = vld [vmem:[#allocation5 + $0x750] sm:$0xff]
    %v351 = vld [vmem:[#allocation5 + $0x758] sm:$0xff]
    %v352 = vld [vmem:[#allocation5 + $0x760] sm:$0xff]
    %v353 = vld [vmem:[#allocation5 + $0x768] sm:$0xff]
    %v354 = vld [vmem:[#allocation5 + $0x770] sm:$0xff]
    %v355 = vld [vmem:[#allocation5 + $0x778] sm:$0xff]
    %v356 = vld [vmem:[#allocation5 + $0x780] sm:$0xff]
    %v357 = vld [vmem:[#allocation5 + $0x788] sm:$0xff]
    %v358 = vld [vmem:[#allocation5 + $0x790] sm:$0xff]
    %v359 = vld [vmem:[#allocation5 + $0x798] sm:$0xff]
    %v360 = vld [vmem:[#allocation5 + $0x7a0] sm:$0xff]
    %v361 = vld [vmem:[#allocation5 + $0x7a8] sm:$0xff]
    %v362 = vld [vmem:[#allocation5 + $0x7b0] sm:$0xff]
    %v363 = vld [vmem:[#allocation5 + $0x7b8] sm:$0xff]
    %v364 = vld [vmem:[#allocation5 + $0x7c0] sm:$0xff]
    %v365 = vld [vmem:[#allocation5 + $0x7c8] sm:$0xff]
    %v366 = vld [vmem:[#allocation5 + $0x7d0] sm:$0xff]
    %v367 = vld [vmem:[#allocation5 + $0x7d8] sm:$0xff]
    %v368 = vld [vmem:[#allocation5 + $0x7e0] sm:$0xff]
    %v369 = vld [vmem:[#allocation5 + $0x7e8] sm:$0xff]
    %v370 = vld [vmem:[#allocation5 + $0x7f0] sm:$0xff]
    %v371 = vld [vmem:[#allocation5 + $0x7f8] sm:$0xff]
    %v372 = vld [vmem:[#allocation7] sm:$0xff]
    %v374 = vperm.slane %v372, 0
    %v375 = vperm.slane %v372, 1
    %v376 = vperm.slane %v372, 2
    %v377 = vperm.slane %v372, 3
    %v378 = vperm.slane %v372, 4
    %v379 = vperm.slane %v372, 5
    %v380 = vperm.slane %v372, 6
    %v381 = vperm.slane %v372, 7
    %v646 = vunpack.c.l.b16 %v116
    %v647 = vunpack.c.h.b16 %v116
    %v648 = vunpack.c.l.b16 %v117
    %v649 = vunpack.c.h.b16 %v117
    %v650 = vunpack.c.l.b16 %v118
    %v651 = vunpack.c.h.b16 %v118
    %v652 = vunpack.c.l.b16 %v119
    %v653 = vunpack.c.h.b16 %v119
    %v654 = vunpack.c.l.b16 %v120
    %v655 = vunpack.c.h.b16 %v120
    %v656 = vunpack.c.l.b16 %v121
    %v657 = vunpack.c.h.b16 %v121
    %v658 = vunpack.c.l.b16 %v122
    %v659 = vunpack.c.h.b16 %v122
    %v660 = vunpack.c.l.b16 %v123
    %v661 = vunpack.c.h.b16 %v123
    %v662 = vunpack.c.l.b16 %v124
    %v663 = vunpack.c.h.b16 %v124
    %v664 = vunpack.c.l.b16 %v125
    %v665 = vunpack.c.h.b16 %v125
    %v666 = vunpack.c.l.b16 %v126
    %v667 = vunpack.c.h.b16 %v126
    %v668 = vunpack.c.l.b16 %v127
    %v669 = vunpack.c.h.b16 %v127
    %v670 = vunpack.c.l.b16 %v128
    %v671 = vunpack.c.h.b16 %v128
    %v672 = vunpack.c.l.b16 %v129
    %v673 = vunpack.c.h.b16 %v129
    %v674 = vunpack.c.l.b16 %v130
    %v675 = vunpack.c.h.b16 %v130
    %v676 = vunpack.c.l.b16 %v131
    %v677 = vunpack.c.h.b16 %v131
    %v678 = vunpack.c.l.b16 %v132
    %v679 = vunpack.c.h.b16 %v132
    %v680 = vunpack.c.l.b16 %v133
    %v681 = vunpack.c.h.b16 %v133
    %v682 = vunpack.c.l.b16 %v134
    %v683 = vunpack.c.h.b16 %v134
    %v684 = vunpack.c.l.b16 %v135
    %v685 = vunpack.c.h.b16 %v135
    %v686 = vunpack.c.l.b16 %v136
    %v687 = vunpack.c.h.b16 %v136
    %v688 = vunpack.c.l.b16 %v137
    %v689 = vunpack.c.h.b16 %v137
    %v690 = vunpack.c.l.b16 %v138
    %v691 = vunpack.c.h.b16 %v138
    %v692 = vunpack.c.l.b16 %v139
    %v693 = vunpack.c.h.b16 %v139
    %v694 = vunpack.c.l.b16 %v140
    %v695 = vunpack.c.h.b16 %v140
    %v696 = vunpack.c.l.b16 %v141
    %v697 = vunpack.c.h.b16 %v141
    %v698 = vunpack.c.l.b16 %v142
    %v699 = vunpack.c.h.b16 %v142
    %v700 = vunpack.c.l.b16 %v143
    %v701 = vunpack.c.h.b16 %v143
    %v702 = vunpack.c.l.b16 %v144
    %v703 = vunpack.c.h.b16 %v144
    %v704 = vunpack.c.l.b16 %v145
    %v705 = vunpack.c.h.b16 %v145
    %v706 = vunpack.c.l.b16 %v146
    %v707 = vunpack.c.h.b16 %v146
    %v708 = vunpack.c.l.b16 %v147
    %v709 = vunpack.c.h.b16 %v147
    %v710 = vunpack.c.l.b16 %v148
    %v711 = vunpack.c.h.b16 %v148
    %v712 = vunpack.c.l.b16 %v149
    %v713 = vunpack.c.h.b16 %v149
    %v714 = vunpack.c.l.b16 %v150
    %v715 = vunpack.c.h.b16 %v150
    %v716 = vunpack.c.l.b16 %v151
    %v717 = vunpack.c.h.b16 %v151
    %v718 = vunpack.c.l.b16 %v152
    %v719 = vunpack.c.h.b16 %v152
    %v720 = vunpack.c.l.b16 %v153
    %v721 = vunpack.c.h.b16 %v153
    %v722 = vunpack.c.l.b16 %v154
    %v723 = vunpack.c.h.b16 %v154
    %v724 = vunpack.c.l.b16 %v155
    %v725 = vunpack.c.h.b16 %v155
    %v726 = vunpack.c.l.b16 %v156
    %v727 = vunpack.c.h.b16 %v156
    %v728 = vunpack.c.l.b16 %v157
    %v729 = vunpack.c.h.b16 %v157
    %v730 = vunpack.c.l.b16 %v158
    %v731 = vunpack.c.h.b16 %v158
    %v732 = vunpack.c.l.b16 %v159
    %v733 = vunpack.c.h.b16 %v159
    %v734 = vunpack.c.l.b16 %v160
    %v735 = vunpack.c.h.b16 %v160
    %v736 = vunpack.c.l.b16 %v161
    %v737 = vunpack.c.h.b16 %v161
    %v738 = vunpack.c.l.b16 %v162
    %v739 = vunpack.c.h.b16 %v162
    %v740 = vunpack.c.l.b16 %v163
    %v741 = vunpack.c.h.b16 %v163
    %v742 = vunpack.c.l.b16 %v164
    %v743 = vunpack.c.h.b16 %v164
    %v744 = vunpack.c.l.b16 %v165
    %v745 = vunpack.c.h.b16 %v165
    %v746 = vunpack.c.l.b16 %v166
    %v747 = vunpack.c.h.b16 %v166
    %v748 = vunpack.c.l.b16 %v167
    %v749 = vunpack.c.h.b16 %v167
    %v750 = vunpack.c.l.b16 %v168
    %v751 = vunpack.c.h.b16 %v168
    %v752 = vunpack.c.l.b16 %v169
    %v753 = vunpack.c.h.b16 %v169
    %v754 = vunpack.c.l.b16 %v170
    %v755 = vunpack.c.h.b16 %v170
    %v756 = vunpack.c.l.b16 %v171
    %v757 = vunpack.c.h.b16 %v171
    %v758 = vunpack.c.l.b16 %v172
    %v759 = vunpack.c.h.b16 %v172
    %v760 = vunpack.c.l.b16 %v173
    %v761 = vunpack.c.h.b16 %v173
    %v762 = vunpack.c.l.b16 %v174
    %v763 = vunpack.c.h.b16 %v174
    %v764 = vunpack.c.l.b16 %v175
    %v765 = vunpack.c.h.b16 %v175
    %v766 = vunpack.c.l.b16 %v176
    %v767 = vunpack.c.h.b16 %v176
    %v768 = vunpack.c.l.b16 %v177
    %v769 = vunpack.c.h.b16 %v177
    %v770 = vunpack.c.l.b16 %v178
    %v771 = vunpack.c.h.b16 %v178
    %v772 = vunpack.c.l.b16 %v179
    %v773 = vunpack.c.h.b16 %v179
    %v774 = vunpack.c.l.b16 %v180
    %v775 = vunpack.c.h.b16 %v180
    %v776 = vunpack.c.l.b16 %v181
    %v777 = vunpack.c.h.b16 %v181
    %v778 = vunpack.c.l.b16 %v182
    %v779 = vunpack.c.h.b16 %v182
    %v780 = vunpack.c.l.b16 %v183
    %v781 = vunpack.c.h.b16 %v183
    %v782 = vunpack.c.l.b16 %v184
    %v783 = vunpack.c.h.b16 %v184
    %v784 = vunpack.c.l.b16 %v185
    %v785 = vunpack.c.h.b16 %v185
    %v786 = vunpack.c.l.b16 %v186
    %v787 = vunpack.c.h.b16 %v186
    %v788 = vunpack.c.l.b16 %v187
    %v789 = vunpack.c.h.b16 %v187
    %v790 = vunpack.c.l.b16 %v188
    %v791 = vunpack.c.h.b16 %v188
    %v792 = vunpack.c.l.b16 %v189
    %v793 = vunpack.c.h.b16 %v189
    %v794 = vunpack.c.l.b16 %v190
    %v795 = vunpack.c.h.b16 %v190
    %v796 = vunpack.c.l.b16 %v191
    %v797 = vunpack.c.h.b16 %v191
    %v798 = vunpack.c.l.b16 %v192
    %v799 = vunpack.c.h.b16 %v192
    %v800 = vunpack.c.l.b16 %v193
    %v801 = vunpack.c.h.b16 %v193
    %v802 = vunpack.c.l.b16 %v194
    %v803 = vunpack.c.h.b16 %v194
    %v804 = vunpack.c.l.b16 %v195
    %v805 = vunpack.c.h.b16 %v195
    %v806 = vunpack.c.l.b16 %v196
    %v807 = vunpack.c.h.b16 %v196
    %v808 = vunpack.c.l.b16 %v197
    %v809 = vunpack.c.h.b16 %v197
    %v810 = vunpack.c.l.b16 %v198
    %v811 = vunpack.c.h.b16 %v198
    %v812 = vunpack.c.l.b16 %v199
    %v813 = vunpack.c.h.b16 %v199
    %v814 = vunpack.c.l.b16 %v200
    %v815 = vunpack.c.h.b16 %v200
    %v816 = vunpack.c.l.b16 %v201
    %v817 = vunpack.c.h.b16 %v201
    %v818 = vunpack.c.l.b16 %v202
    %v819 = vunpack.c.h.b16 %v202
    %v820 = vunpack.c.l.b16 %v203
    %v821 = vunpack.c.h.b16 %v203
    %v822 = vunpack.c.l.b16 %v204
    %v823 = vunpack.c.h.b16 %v204
    %v824 = vunpack.c.l.b16 %v205
    %v825 = vunpack.c.h.b16 %v205
    %v826 = vunpack.c.l.b16 %v206
    %v827 = vunpack.c.h.b16 %v206
    %v828 = vunpack.c.l.b16 %v207
    %v829 = vunpack.c.h.b16 %v207
    %v830 = vunpack.c.l.b16 %v208
    %v831 = vunpack.c.h.b16 %v208
    %v832 = vunpack.c.l.b16 %v209
    %v833 = vunpack.c.h.b16 %v209
    %v834 = vunpack.c.l.b16 %v210
    %v835 = vunpack.c.h.b16 %v210
    %v836 = vunpack.c.l.b16 %v211
    %v837 = vunpack.c.h.b16 %v211
    %v838 = vunpack.c.l.b16 %v212
    %v839 = vunpack.c.h.b16 %v212
    %v840 = vunpack.c.l.b16 %v213
    %v841 = vunpack.c.h.b16 %v213
    %v842 = vunpack.c.l.b16 %v214
    %v843 = vunpack.c.h.b16 %v214
    %v844 = vunpack.c.l.b16 %v215
    %v845 = vunpack.c.h.b16 %v215
    %v846 = vunpack.c.l.b16 %v216
    %v847 = vunpack.c.h.b16 %v216
    %v848 = vunpack.c.l.b16 %v217
    %v849 = vunpack.c.h.b16 %v217
    %v850 = vunpack.c.l.b16 %v218
    %v851 = vunpack.c.h.b16 %v218
    %v852 = vunpack.c.l.b16 %v219
    %v853 = vunpack.c.h.b16 %v219
    %v854 = vunpack.c.l.b16 %v220
    %v855 = vunpack.c.h.b16 %v220
    %v856 = vunpack.c.l.b16 %v221
    %v857 = vunpack.c.h.b16 %v221
    %v858 = vunpack.c.l.b16 %v222
    %v859 = vunpack.c.h.b16 %v222
    %v860 = vunpack.c.l.b16 %v223
    %v861 = vunpack.c.h.b16 %v223
    %v862 = vunpack.c.l.b16 %v224
    %v863 = vunpack.c.h.b16 %v224
    %v864 = vunpack.c.l.b16 %v225
    %v865 = vunpack.c.h.b16 %v225
    %v866 = vunpack.c.l.b16 %v226
    %v867 = vunpack.c.h.b16 %v226
    %v868 = vunpack.c.l.b16 %v227
    %v869 = vunpack.c.h.b16 %v227
    %v870 = vunpack.c.l.b16 %v228
    %v871 = vunpack.c.h.b16 %v228
    %v872 = vunpack.c.l.b16 %v229
    %v873 = vunpack.c.h.b16 %v229
    %v874 = vunpack.c.l.b16 %v230
    %v875 = vunpack.c.h.b16 %v230
    %v876 = vunpack.c.l.b16 %v231
    %v877 = vunpack.c.h.b16 %v231
    %v878 = vunpack.c.l.b16 %v232
    %v879 = vunpack.c.h.b16 %v232
    %v880 = vunpack.c.l.b16 %v233
    %v881 = vunpack.c.h.b16 %v233
    %v882 = vunpack.c.l.b16 %v234
    %v883 = vunpack.c.h.b16 %v234
    %v884 = vunpack.c.l.b16 %v235
    %v885 = vunpack.c.h.b16 %v235
    %v886 = vunpack.c.l.b16 %v236
    %v887 = vunpack.c.h.b16 %v236
    %v888 = vunpack.c.l.b16 %v237
    %v889 = vunpack.c.h.b16 %v237
    %v890 = vunpack.c.l.b16 %v238
    %v891 = vunpack.c.h.b16 %v238
    %v892 = vunpack.c.l.b16 %v239
    %v893 = vunpack.c.h.b16 %v239
    %v894 = vunpack.c.l.b16 %v240
    %v895 = vunpack.c.h.b16 %v240
    %v896 = vunpack.c.l.b16 %v241
    %v897 = vunpack.c.h.b16 %v241
    %v898 = vunpack.c.l.b16 %v242
    %v899 = vunpack.c.h.b16 %v242
    %v900 = vunpack.c.l.b16 %v243
    %v901 = vunpack.c.h.b16 %v243
    %v902 = vunpack.c.l.b16 %v244
    %v903 = vunpack.c.h.b16 %v244
    %v904 = vunpack.c.l.b16 %v245
    %v905 = vunpack.c.h.b16 %v245
    %v906 = vunpack.c.l.b16 %v246
    %v907 = vunpack.c.h.b16 %v246
    %v908 = vunpack.c.l.b16 %v247
    %v909 = vunpack.c.h.b16 %v247
    %v910 = vunpack.c.l.b16 %v248
    %v911 = vunpack.c.h.b16 %v248
    %v912 = vunpack.c.l.b16 %v249
    %v913 = vunpack.c.h.b16 %v249
    %v914 = vunpack.c.l.b16 %v250
    %v915 = vunpack.c.h.b16 %v250
    %v916 = vunpack.c.l.b16 %v251
    %v917 = vunpack.c.h.b16 %v251
    %v918 = vunpack.c.l.b16 %v252
    %v919 = vunpack.c.h.b16 %v252
    %v920 = vunpack.c.l.b16 %v253
    %v921 = vunpack.c.h.b16 %v253
    %v922 = vunpack.c.l.b16 %v254
    %v923 = vunpack.c.h.b16 %v254
    %v924 = vunpack.c.l.b16 %v255
    %v925 = vunpack.c.h.b16 %v255
    %v926 = vunpack.c.l.b16 %v256
    %v927 = vunpack.c.h.b16 %v256
    %v928 = vunpack.c.l.b16 %v257
    %v929 = vunpack.c.h.b16 %v257
    %v930 = vunpack.c.l.b16 %v258
    %v931 = vunpack.c.h.b16 %v258
    %v932 = vunpack.c.l.b16 %v259
    %v933 = vunpack.c.h.b16 %v259
    %v934 = vunpack.c.l.b16 %v260
    %v935 = vunpack.c.h.b16 %v260
    %v936 = vunpack.c.l.b16 %v261
    %v937 = vunpack.c.h.b16 %v261
    %v938 = vunpack.c.l.b16 %v262
    %v939 = vunpack.c.h.b16 %v262
    %v940 = vunpack.c.l.b16 %v263
    %v941 = vunpack.c.h.b16 %v263
    %v942 = vunpack.c.l.b16 %v264
    %v943 = vunpack.c.h.b16 %v264
    %v944 = vunpack.c.l.b16 %v265
    %v945 = vunpack.c.h.b16 %v265
    %v946 = vunpack.c.l.b16 %v266
    %v947 = vunpack.c.h.b16 %v266
    %v948 = vunpack.c.l.b16 %v267
    %v949 = vunpack.c.h.b16 %v267
    %v950 = vunpack.c.l.b16 %v268
    %v951 = vunpack.c.h.b16 %v268
    %v952 = vunpack.c.l.b16 %v269
    %v953 = vunpack.c.h.b16 %v269
    %v954 = vunpack.c.l.b16 %v270
    %v955 = vunpack.c.h.b16 %v270
    %v956 = vunpack.c.l.b16 %v271
    %v957 = vunpack.c.h.b16 %v271
    %v958 = vunpack.c.l.b16 %v272
    %v959 = vunpack.c.h.b16 %v272
    %v960 = vunpack.c.l.b16 %v273
    %v961 = vunpack.c.h.b16 %v273
    %v962 = vunpack.c.l.b16 %v274
    %v963 = vunpack.c.h.b16 %v274
    %v964 = vunpack.c.l.b16 %v275
    %v965 = vunpack.c.h.b16 %v275
    %v966 = vunpack.c.l.b16 %v276
    %v967 = vunpack.c.h.b16 %v276
    %v968 = vunpack.c.l.b16 %v277
    %v969 = vunpack.c.h.b16 %v277
    %v970 = vunpack.c.l.b16 %v278
    %v971 = vunpack.c.h.b16 %v278
    %v972 = vunpack.c.l.b16 %v279
    %v973 = vunpack.c.h.b16 %v279
    %v974 = vunpack.c.l.b16 %v280
    %v975 = vunpack.c.h.b16 %v280
    %v976 = vunpack.c.l.b16 %v281
    %v977 = vunpack.c.h.b16 %v281
    %v978 = vunpack.c.l.b16 %v282
    %v979 = vunpack.c.h.b16 %v282
    %v980 = vunpack.c.l.b16 %v283
    %v981 = vunpack.c.h.b16 %v283
    %v982 = vunpack.c.l.b16 %v284
    %v983 = vunpack.c.h.b16 %v284
    %v984 = vunpack.c.l.b16 %v285
    %v985 = vunpack.c.h.b16 %v285
    %v986 = vunpack.c.l.b16 %v286
    %v987 = vunpack.c.h.b16 %v286
    %v988 = vunpack.c.l.b16 %v287
    %v989 = vunpack.c.h.b16 %v287
    %v990 = vunpack.c.l.b16 %v288
    %v991 = vunpack.c.h.b16 %v288
    %v992 = vunpack.c.l.b16 %v289
    %v993 = vunpack.c.h.b16 %v289
    %v994 = vunpack.c.l.b16 %v290
    %v995 = vunpack.c.h.b16 %v290
    %v996 = vunpack.c.l.b16 %v291
    %v997 = vunpack.c.h.b16 %v291
    %v998 = vunpack.c.l.b16 %v292
    %v999 = vunpack.c.h.b16 %v292
    %v1000 = vunpack.c.l.b16 %v293
    %v1001 = vunpack.c.h.b16 %v293
    %v1002 = vunpack.c.l.b16 %v294
    %v1003 = vunpack.c.h.b16 %v294
    %v1004 = vunpack.c.l.b16 %v295
    %v1005 = vunpack.c.h.b16 %v295
    %v1006 = vunpack.c.l.b16 %v296
    %v1007 = vunpack.c.h.b16 %v296
    %v1008 = vunpack.c.l.b16 %v297
    %v1009 = vunpack.c.h.b16 %v297
    %v1010 = vunpack.c.l.b16 %v298
    %v1011 = vunpack.c.h.b16 %v298
    %v1012 = vunpack.c.l.b16 %v299
    %v1013 = vunpack.c.h.b16 %v299
    %v1014 = vunpack.c.l.b16 %v300
    %v1015 = vunpack.c.h.b16 %v300
    %v1016 = vunpack.c.l.b16 %v301
    %v1017 = vunpack.c.h.b16 %v301
    %v1018 = vunpack.c.l.b16 %v302
    %v1019 = vunpack.c.h.b16 %v302
    %v1020 = vunpack.c.l.b16 %v303
    %v1021 = vunpack.c.h.b16 %v303
    %v1022 = vunpack.c.l.b16 %v304
    %v1023 = vunpack.c.h.b16 %v304
    %v1024 = vunpack.c.l.b16 %v305
    %v1025 = vunpack.c.h.b16 %v305
    %v1026 = vunpack.c.l.b16 %v306
    %v1027 = vunpack.c.h.b16 %v306
    %v1028 = vunpack.c.l.b16 %v307
    %v1029 = vunpack.c.h.b16 %v307
    %v1030 = vunpack.c.l.b16 %v308
    %v1031 = vunpack.c.h.b16 %v308
    %v1032 = vunpack.c.l.b16 %v309
    %v1033 = vunpack.c.h.b16 %v309
    %v1034 = vunpack.c.l.b16 %v310
    %v1035 = vunpack.c.h.b16 %v310
    %v1036 = vunpack.c.l.b16 %v311
    %v1037 = vunpack.c.h.b16 %v311
    %v1038 = vunpack.c.l.b16 %v312
    %v1039 = vunpack.c.h.b16 %v312
    %v1040 = vunpack.c.l.b16 %v313
    %v1041 = vunpack.c.h.b16 %v313
    %v1042 = vunpack.c.l.b16 %v314
    %v1043 = vunpack.c.h.b16 %v314
    %v1044 = vunpack.c.l.b16 %v315
    %v1045 = vunpack.c.h.b16 %v315
    %v1046 = vunpack.c.l.b16 %v316
    %v1047 = vunpack.c.h.b16 %v316
    %v1048 = vunpack.c.l.b16 %v317
    %v1049 = vunpack.c.h.b16 %v317
    %v1050 = vunpack.c.l.b16 %v318
    %v1051 = vunpack.c.h.b16 %v318
    %v1052 = vunpack.c.l.b16 %v319
    %v1053 = vunpack.c.h.b16 %v319
    %v1054 = vunpack.c.l.b16 %v320
    %v1055 = vunpack.c.h.b16 %v320
    %v1056 = vunpack.c.l.b16 %v321
    %v1057 = vunpack.c.h.b16 %v321
    %v1058 = vunpack.c.l.b16 %v322
    %v1059 = vunpack.c.h.b16 %v322
    %v1060 = vunpack.c.l.b16 %v323
    %v1061 = vunpack.c.h.b16 %v323
    %v1062 = vunpack.c.l.b16 %v324
    %v1063 = vunpack.c.h.b16 %v324
    %v1064 = vunpack.c.l.b16 %v325
    %v1065 = vunpack.c.h.b16 %v325
    %v1066 = vunpack.c.l.b16 %v326
    %v1067 = vunpack.c.h.b16 %v326
    %v1068 = vunpack.c.l.b16 %v327
    %v1069 = vunpack.c.h.b16 %v327
    %v1070 = vunpack.c.l.b16 %v328
    %v1071 = vunpack.c.h.b16 %v328
    %v1072 = vunpack.c.l.b16 %v329
    %v1073 = vunpack.c.h.b16 %v329
    %v1074 = vunpack.c.l.b16 %v330
    %v1075 = vunpack.c.h.b16 %v330
    %v1076 = vunpack.c.l.b16 %v331
    %v1077 = vunpack.c.h.b16 %v331
    %v1078 = vunpack.c.l.b16 %v332
    %v1079 = vunpack.c.h.b16 %v332
    %v1080 = vunpack.c.l.b16 %v333
    %v1081 = vunpack.c.h.b16 %v333
    %v1082 = vunpack.c.l.b16 %v334
    %v1083 = vunpack.c.h.b16 %v334
    %v1084 = vunpack.c.l.b16 %v335
    %v1085 = vunpack.c.h.b16 %v335
    %v1086 = vunpack.c.l.b16 %v336
    %v1087 = vunpack.c.h.b16 %v336
    %v1088 = vunpack.c.l.b16 %v337
    %v1089 = vunpack.c.h.b16 %v337
    %v1090 = vunpack.c.l.b16 %v338
    %v1091 = vunpack.c.h.b16 %v338
    %v1092 = vunpack.c.l.b16 %v339
    %v1093 = vunpack.c.h.b16 %v339
    %v1094 = vunpack.c.l.b16 %v340
    %v1095 = vunpack.c.h.b16 %v340
    %v1096 = vunpack.c.l.b16 %v341
    %v1097 = vunpack.c.h.b16 %v341
    %v1098 = vunpack.c.l.b16 %v342
    %v1099 = vunpack.c.h.b16 %v342
    %v1100 = vunpack.c.l.b16 %v343
    %v1101 = vunpack.c.h.b16 %v343
    %v1102 = vunpack.c.l.b16 %v344
    %v1103 = vunpack.c.h.b16 %v344
    %v1104 = vunpack.c.l.b16 %v345
    %v1105 = vunpack.c.h.b16 %v345
    %v1106 = vunpack.c.l.b16 %v346
    %v1107 = vunpack.c.h.b16 %v346
    %v1108 = vunpack.c.l.b16 %v347
    %v1109 = vunpack.c.h.b16 %v347
    %v1110 = vunpack.c.l.b16 %v348
    %v1111 = vunpack.c.h.b16 %v348
    %v1112 = vunpack.c.l.b16 %v349
    %v1113 = vunpack.c.h.b16 %v349
    %v1114 = vunpack.c.l.b16 %v350
    %v1115 = vunpack.c.h.b16 %v350
    %v1116 = vunpack.c.l.b16 %v351
    %v1117 = vunpack.c.h.b16 %v351
    %v1118 = vunpack.c.l.b16 %v352
    %v1119 = vunpack.c.h.b16 %v352
    %v1120 = vunpack.c.l.b16 %v353
    %v1121 = vunpack.c.h.b16 %v353
    %v1122 = vunpack.c.l.b16 %v354
    %v1123 = vunpack.c.h.b16 %v354
    %v1124 = vunpack.c.l.b16 %v355
    %v1125 = vunpack.c.h.b16 %v355
    %v1126 = vunpack.c.l.b16 %v356
    %v1127 = vunpack.c.h.b16 %v356
    %v1128 = vunpack.c.l.b16 %v357
    %v1129 = vunpack.c.h.b16 %v357
    %v1130 = vunpack.c.l.b16 %v358
    %v1131 = vunpack.c.h.b16 %v358
    %v1132 = vunpack.c.l.b16 %v359
    %v1133 = vunpack.c.h.b16 %v359
    %v1134 = vunpack.c.l.b16 %v360
    %v1135 = vunpack.c.h.b16 %v360
    %v1136 = vunpack.c.l.b16 %v361
    %v1137 = vunpack.c.h.b16 %v361
    %v1138 = vunpack.c.l.b16 %v362
    %v1139 = vunpack.c.h.b16 %v362
    %v1140 = vunpack.c.l.b16 %v363
    %v1141 = vunpack.c.h.b16 %v363
    %v1142 = vunpack.c.l.b16 %v364
    %v1143 = vunpack.c.h.b16 %v364
    %v1144 = vunpack.c.l.b16 %v365
    %v1145 = vunpack.c.h.b16 %v365
    %v1146 = vunpack.c.l.b16 %v366
    %v1147 = vunpack.c.h.b16 %v366
    %v1148 = vunpack.c.l.b16 %v367
    %v1149 = vunpack.c.h.b16 %v367
    %v1150 = vunpack.c.l.b16 %v368
    %v1151 = vunpack.c.h.b16 %v368
    %v1152 = vunpack.c.l.b16 %v369
    %v1153 = vunpack.c.h.b16 %v369
    %v1154 = vunpack.c.l.b16 %v370
    %v1155 = vunpack.c.h.b16 %v370
    %v1156 = vunpack.c.l.b16 %v371
    %v1157 = vunpack.c.h.b16 %v371
    %v1158 = vpack.c.b16 %v654, %v646
    %v1159 = vpack.c.b16 %v655, %v647
    %v1160 = vpack.c.b16 %v656, %v648
    %v1161 = vpack.c.b16 %v657, %v649
    %v1162 = vpack.c.b16 %v658, %v650
    %v1163 = vpack.c.b16 %v659, %v651
    %v1164 = vpack.c.b16 %v660, %v652
    %v1165 = vpack.c.b16 %v661, %v653
    %v1166 = vpack.c.b16 %v670, %v662
    %v1167 = vpack.c.b16 %v671, %v663
    %v1168 = vpack.c.b16 %v672, %v664
    %v1169 = vpack.c.b16 %v673, %v665
    %v1170 = vpack.c.b16 %v674, %v666
    %v1171 = vpack.c.b16 %v675, %v667
    %v1172 = vpack.c.b16 %v676, %v668
    %v1173 = vpack.c.b16 %v677, %v669
    %v1174 = vpack.c.b16 %v686, %v678
    %v1175 = vpack.c.b16 %v687, %v679
    %v1176 = vpack.c.b16 %v688, %v680
    %v1177 = vpack.c.b16 %v689, %v681
    %v1178 = vpack.c.b16 %v690, %v682
    %v1179 = vpack.c.b16 %v691, %v683
    %v1180 = vpack.c.b16 %v692, %v684
    %v1181 = vpack.c.b16 %v693, %v685
    %v1182 = vpack.c.b16 %v702, %v694
    %v1183 = vpack.c.b16 %v703, %v695
    %v1184 = vpack.c.b16 %v704, %v696
    %v1185 = vpack.c.b16 %v705, %v697
    %v1186 = vpack.c.b16 %v706, %v698
    %v1187 = vpack.c.b16 %v707, %v699
    %v1188 = vpack.c.b16 %v708, %v700
    %v1189 = vpack.c.b16 %v709, %v701
    %v1190 = vpack.c.b16 %v718, %v710
    %v1191 = vpack.c.b16 %v719, %v711
    %v1192 = vpack.c.b16 %v720, %v712
    %v1193 = vpack.c.b16 %v721, %v713
    %v1194 = vpack.c.b16 %v722, %v714
    %v1195 = vpack.c.b16 %v723, %v715
    %v1196 = vpack.c.b16 %v724, %v716
    %v1197 = vpack.c.b16 %v725, %v717
    %v1198 = vpack.c.b16 %v734, %v726
    %v1199 = vpack.c.b16 %v735, %v727
    %v1200 = vpack.c.b16 %v736, %v728
    %v1201 = vpack.c.b16 %v737, %v729
    %v1202 = vpack.c.b16 %v738, %v730
    %v1203 = vpack.c.b16 %v739, %v731
    %v1204 = vpack.c.b16 %v740, %v732
    %v1205 = vpack.c.b16 %v741, %v733
    %v1206 = vpack.c.b16 %v750, %v742
    %v1207 = vpack.c.b16 %v751, %v743
    %v1208 = vpack.c.b16 %v752, %v744
    %v1209 = vpack.c.b16 %v753, %v745
    %v1210 = vpack.c.b16 %v754, %v746
    %v1211 = vpack.c.b16 %v755, %v747
    %v1212 = vpack.c.b16 %v756, %v748
    %v1213 = vpack.c.b16 %v757, %v749
    %v1214 = vpack.c.b16 %v766, %v758
    %v1215 = vpack.c.b16 %v767, %v759
    %v1216 = vpack.c.b16 %v768, %v760
    %v1217 = vpack.c.b16 %v769, %v761
    %v1218 = vpack.c.b16 %v770, %v762
    %v1219 = vpack.c.b16 %v771, %v763
    %v1220 = vpack.c.b16 %v772, %v764
    %v1221 = vpack.c.b16 %v773, %v765
    %v1222 = vpack.c.b16 %v782, %v774
    %v1223 = vpack.c.b16 %v783, %v775
    %v1224 = vpack.c.b16 %v784, %v776
    %v1225 = vpack.c.b16 %v785, %v777
    %v1226 = vpack.c.b16 %v786, %v778
    %v1227 = vpack.c.b16 %v787, %v779
    %v1228 = vpack.c.b16 %v788, %v780
    %v1229 = vpack.c.b16 %v789, %v781
    %v1230 = vpack.c.b16 %v798, %v790
    %v1231 = vpack.c.b16 %v799, %v791
    %v1232 = vpack.c.b16 %v800, %v792
    %v1233 = vpack.c.b16 %v801, %v793
    %v1234 = vpack.c.b16 %v802, %v794
    %v1235 = vpack.c.b16 %v803, %v795
    %v1236 = vpack.c.b16 %v804, %v796
    %v1237 = vpack.c.b16 %v805, %v797
    %v1238 = vpack.c.b16 %v814, %v806
    %v1239 = vpack.c.b16 %v815, %v807
    %v1240 = vpack.c.b16 %v816, %v808
    %v1241 = vpack.c.b16 %v817, %v809
    %v1242 = vpack.c.b16 %v818, %v810
    %v1243 = vpack.c.b16 %v819, %v811
    %v1244 = vpack.c.b16 %v820, %v812
    %v1245 = vpack.c.b16 %v821, %v813
    %v1246 = vpack.c.b16 %v830, %v822
    %v1247 = vpack.c.b16 %v831, %v823
    %v1248 = vpack.c.b16 %v832, %v824
    %v1249 = vpack.c.b16 %v833, %v825
    %v1250 = vpack.c.b16 %v834, %v826
    %v1251 = vpack.c.b16 %v835, %v827
    %v1252 = vpack.c.b16 %v836, %v828
    %v1253 = vpack.c.b16 %v837, %v829
    %v1254 = vpack.c.b16 %v846, %v838
    %v1255 = vpack.c.b16 %v847, %v839
    %v1256 = vpack.c.b16 %v848, %v840
    %v1257 = vpack.c.b16 %v849, %v841
    %v1258 = vpack.c.b16 %v850, %v842
    %v1259 = vpack.c.b16 %v851, %v843
    %v1260 = vpack.c.b16 %v852, %v844
    %v1261 = vpack.c.b16 %v853, %v845
    %v1262 = vpack.c.b16 %v862, %v854
    %v1263 = vpack.c.b16 %v863, %v855
    %v1264 = vpack.c.b16 %v864, %v856
    %v1265 = vpack.c.b16 %v865, %v857
    %v1266 = vpack.c.b16 %v866, %v858
    %v1267 = vpack.c.b16 %v867, %v859
    %v1268 = vpack.c.b16 %v868, %v860
    %v1269 = vpack.c.b16 %v869, %v861
    %v1270 = vpack.c.b16 %v878, %v870
    %v1271 = vpack.c.b16 %v879, %v871
    %v1272 = vpack.c.b16 %v880, %v872
    %v1273 = vpack.c.b16 %v881, %v873
    %v1274 = vpack.c.b16 %v882, %v874
    %v1275 = vpack.c.b16 %v883, %v875
    %v1276 = vpack.c.b16 %v884, %v876
    %v1277 = vpack.c.b16 %v885, %v877
    %v1278 = vpack.c.b16 %v894, %v886
    %v1279 = vpack.c.b16 %v895, %v887
    %v1280 = vpack.c.b16 %v896, %v888
    %v1281 = vpack.c.b16 %v897, %v889
    %v1282 = vpack.c.b16 %v898, %v890
    %v1283 = vpack.c.b16 %v899, %v891
    %v1284 = vpack.c.b16 %v900, %v892
    %v1285 = vpack.c.b16 %v901, %v893
    %v1286 = vpack.c.b16 %v910, %v902
    %v1287 = vpack.c.b16 %v911, %v903
    %v1288 = vpack.c.b16 %v912, %v904
    %v1289 = vpack.c.b16 %v913, %v905
    %v1290 = vpack.c.b16 %v914, %v906
    %v1291 = vpack.c.b16 %v915, %v907
    %v1292 = vpack.c.b16 %v916, %v908
    %v1293 = vpack.c.b16 %v917, %v909
    %v1294 = vpack.c.b16 %v926, %v918
    %v1295 = vpack.c.b16 %v927, %v919
    %v1296 = vpack.c.b16 %v928, %v920
    %v1297 = vpack.c.b16 %v929, %v921
    %v1298 = vpack.c.b16 %v930, %v922
    %v1299 = vpack.c.b16 %v931, %v923
    %v1300 = vpack.c.b16 %v932, %v924
    %v1301 = vpack.c.b16 %v933, %v925
    %v1302 = vpack.c.b16 %v942, %v934
    %v1303 = vpack.c.b16 %v943, %v935
    %v1304 = vpack.c.b16 %v944, %v936
    %v1305 = vpack.c.b16 %v945, %v937
    %v1306 = vpack.c.b16 %v946, %v938
    %v1307 = vpack.c.b16 %v947, %v939
    %v1308 = vpack.c.b16 %v948, %v940
    %v1309 = vpack.c.b16 %v949, %v941
    %v1310 = vpack.c.b16 %v958, %v950
    %v1311 = vpack.c.b16 %v959, %v951
    %v1312 = vpack.c.b16 %v960, %v952
    %v1313 = vpack.c.b16 %v961, %v953
    %v1314 = vpack.c.b16 %v962, %v954
    %v1315 = vpack.c.b16 %v963, %v955
    %v1316 = vpack.c.b16 %v964, %v956
    %v1317 = vpack.c.b16 %v965, %v957
    %v1318 = vpack.c.b16 %v974, %v966
    %v1319 = vpack.c.b16 %v975, %v967
    %v1320 = vpack.c.b16 %v976, %v968
    %v1321 = vpack.c.b16 %v977, %v969
    %v1322 = vpack.c.b16 %v978, %v970
    %v1323 = vpack.c.b16 %v979, %v971
    %v1324 = vpack.c.b16 %v980, %v972
    %v1325 = vpack.c.b16 %v981, %v973
    %v1326 = vpack.c.b16 %v990, %v982
    %v1327 = vpack.c.b16 %v991, %v983
    %v1328 = vpack.c.b16 %v992, %v984
    %v1329 = vpack.c.b16 %v993, %v985
    %v1330 = vpack.c.b16 %v994, %v986
    %v1331 = vpack.c.b16 %v995, %v987
    %v1332 = vpack.c.b16 %v996, %v988
    %v1333 = vpack.c.b16 %v997, %v989
    %v1334 = vpack.c.b16 %v1006, %v998
    %v1335 = vpack.c.b16 %v1007, %v999
    %v1336 = vpack.c.b16 %v1008, %v1000
    %v1337 = vpack.c.b16 %v1009, %v1001
    %v1338 = vpack.c.b16 %v1010, %v1002
    %v1339 = vpack.c.b16 %v1011, %v1003
    %v1340 = vpack.c.b16 %v1012, %v1004
    %v1341 = vpack.c.b16 %v1013, %v1005
    %v1342 = vpack.c.b16 %v1022, %v1014
    %v1343 = vpack.c.b16 %v1023, %v1015
    %v1344 = vpack.c.b16 %v1024, %v1016
    %v1345 = vpack.c.b16 %v1025, %v1017
    %v1346 = vpack.c.b16 %v1026, %v1018
    %v1347 = vpack.c.b16 %v1027, %v1019
    %v1348 = vpack.c.b16 %v1028, %v1020
    %v1349 = vpack.c.b16 %v1029, %v1021
    %v1350 = vpack.c.b16 %v1038, %v1030
    %v1351 = vpack.c.b16 %v1039, %v1031
    %v1352 = vpack.c.b16 %v1040, %v1032
    %v1353 = vpack.c.b16 %v1041, %v1033
    %v1354 = vpack.c.b16 %v1042, %v1034
    %v1355 = vpack.c.b16 %v1043, %v1035
    %v1356 = vpack.c.b16 %v1044, %v1036
    %v1357 = vpack.c.b16 %v1045, %v1037
    %v1358 = vpack.c.b16 %v1054, %v1046
    %v1359 = vpack.c.b16 %v1055, %v1047
    %v1360 = vpack.c.b16 %v1056, %v1048
    %v1361 = vpack.c.b16 %v1057, %v1049
    %v1362 = vpack.c.b16 %v1058, %v1050
    %v1363 = vpack.c.b16 %v1059, %v1051
    %v1364 = vpack.c.b16 %v1060, %v1052
    %v1365 = vpack.c.b16 %v1061, %v1053
    %v1366 = vpack.c.b16 %v1070, %v1062
    %v1367 = vpack.c.b16 %v1071, %v1063
    %v1368 = vpack.c.b16 %v1072, %v1064
    %v1369 = vpack.c.b16 %v1073, %v1065
    %v1370 = vpack.c.b16 %v1074, %v1066
    %v1371 = vpack.c.b16 %v1075, %v1067
    %v1372 = vpack.c.b16 %v1076, %v1068
    %v1373 = vpack.c.b16 %v1077, %v1069
    %v1374 = vpack.c.b16 %v1086, %v1078
    %v1375 = vpack.c.b16 %v1087, %v1079
    %v1376 = vpack.c.b16 %v1088, %v1080
    %v1377 = vpack.c.b16 %v1089, %v1081
    %v1378 = vpack.c.b16 %v1090, %v1082
    %v1379 = vpack.c.b16 %v1091, %v1083
    %v1380 = vpack.c.b16 %v1092, %v1084
    %v1381 = vpack.c.b16 %v1093, %v1085
    %v1382 = vpack.c.b16 %v1102, %v1094
    %v1383 = vpack.c.b16 %v1103, %v1095
    %v1384 = vpack.c.b16 %v1104, %v1096
    %v1385 = vpack.c.b16 %v1105, %v1097
    %v1386 = vpack.c.b16 %v1106, %v1098
    %v1387 = vpack.c.b16 %v1107, %v1099
    %v1388 = vpack.c.b16 %v1108, %v1100
    %v1389 = vpack.c.b16 %v1109, %v1101
    %v1390 = vpack.c.b16 %v1118, %v1110
    %v1391 = vpack.c.b16 %v1119, %v1111
    %v1392 = vpack.c.b16 %v1120, %v1112
    %v1393 = vpack.c.b16 %v1121, %v1113
    %v1394 = vpack.c.b16 %v1122, %v1114
    %v1395 = vpack.c.b16 %v1123, %v1115
    %v1396 = vpack.c.b16 %v1124, %v1116
    %v1397 = vpack.c.b16 %v1125, %v1117
    %v1398 = vpack.c.b16 %v1134, %v1126
    %v1399 = vpack.c.b16 %v1135, %v1127
    %v1400 = vpack.c.b16 %v1136, %v1128
    %v1401 = vpack.c.b16 %v1137, %v1129
    %v1402 = vpack.c.b16 %v1138, %v1130
    %v1403 = vpack.c.b16 %v1139, %v1131
    %v1404 = vpack.c.b16 %v1140, %v1132
    %v1405 = vpack.c.b16 %v1141, %v1133
    %v1406 = vpack.c.b16 %v1150, %v1142
    %v1407 = vpack.c.b16 %v1151, %v1143
    %v1408 = vpack.c.b16 %v1152, %v1144
    %v1409 = vpack.c.b16 %v1153, %v1145
    %v1410 = vpack.c.b16 %v1154, %v1146
    %v1411 = vpack.c.b16 %v1155, %v1147
    %v1412 = vpack.c.b16 %v1156, %v1148
    %v1413 = vpack.c.b16 %v1157, %v1149
    %1670 = vmatpush.bf16.msra.mxu0 %v1214
    %1671 = vmatpush.bf16.msra.mxu0 %v1206
    %1672 = vmatpush.bf16.msra.mxu0 %v1198
    %1673 = vmatpush.bf16.msra.mxu0 %v1190
    %1674 = vmatpush.bf16.msra.mxu0 %v1182
    %1675 = vmatpush.bf16.msra.mxu0 %v1174
    %1676 = vmatpush.bf16.msra.mxu0 %v1166
    %1677 = vmatpush.bf16.msra.mxu0 %v1158
    %1678 = vmatmul.bf16.gmra.mxu0 %v112
    %v1679 = vpop.f32.mrf.mxu0
    %v1680 = vadd.f32 %v374, %v1679
    %v1681 = vpop.f32.mrf.mxu0
    %1682 = vdwg.mxu0
    %1683 = vmatpush.bf16.msra.mxu0 %v1278
    %1684 = vmatpush.bf16.msra.mxu0 %v1270
    %1685 = vmatpush.bf16.msra.mxu0 %v1262
    %1686 = vmatpush.bf16.msra.mxu0 %v1254
    %1687 = vmatpush.bf16.msra.mxu0 %v1246
    %1688 = vmatpush.bf16.msra.mxu0 %v1238
    %1689 = vmatpush.bf16.msra.mxu0 %v1230
    %1690 = vmatpush.bf16.msra.mxu0 %v1222
    %1691 = vmatmul.bf16.gmra.mxu0 %v113
    %v1692 = vpop.f32.mrf.mxu0
    %v1693 = vadd.f32 %v1680, %v1692
    %v1694 = vpop.f32.mrf.mxu0
    %1695 = vdwg.mxu0
    %1696 = vmatpush.bf16.msra.mxu0 %v1342
    %1697 = vmatpush.bf16.msra.mxu0 %v1334
    %1698 = vmatpush.bf16.msra.mxu0 %v1326
    %1699 = vmatpush.bf16.msra.mxu0 %v1318
    %1700 = vmatpush.bf16.msra.mxu0 %v1310
    %1701 = vmatpush.bf16.msra.mxu0 %v1302
    %1702 = vmatpush.bf16.msra.mxu0 %v1294
    %1703 = vmatpush.bf16.msra.mxu0 %v1286
    %1704 = vmatmul.bf16.gmra.mxu0 %v114
    %v1705 = vpop.f32.mrf.mxu0
    %v1706 = vadd.f32 %v1693, %v1705
    %v1707 = vpop.f32.mrf.mxu0
    %1708 = vdwg.mxu0
    %1709 = vmatpush.bf16.msra.mxu0 %v1406
    %1710 = vmatpush.bf16.msra.mxu0 %v1398
    %1711 = vmatpush.bf16.msra.mxu0 %v1390
    %1712 = vmatpush.bf16.msra.mxu0 %v1382
    %1713 = vmatpush.bf16.msra.mxu0 %v1374
    %1714 = vmatpush.bf16.msra.mxu0 %v1366
    %1715 = vmatpush.bf16.msra.mxu0 %v1358
    %1716 = vmatpush.bf16.msra.mxu0 %v1350
    %1717 = vmatmul.bf16.gmra.mxu0 %v115
    %v1718 = vpop.f32.mrf.mxu0
    %v1719 = vadd.f32 %v1706, %v1718
    %v1720 = vpop.f32.mrf.mxu0
    %1721 = vdwg.mxu0
    %1722 = vmatpush.bf16.msra.mxu0 %v1215
    %1723 = vmatpush.bf16.msra.mxu0 %v1207
    %1724 = vmatpush.bf16.msra.mxu0 %v1199
    %1725 = vmatpush.bf16.msra.mxu0 %v1191
    %1726 = vmatpush.bf16.msra.mxu0 %v1183
    %1727 = vmatpush.bf16.msra.mxu0 %v1175
    %1728 = vmatpush.bf16.msra.mxu0 %v1167
    %1729 = vmatpush.bf16.msra.mxu0 %v1159
    %1730 = vmatmul.bf16.gmra.mxu0 %v112
    %v1731 = vpop.f32.mrf.mxu0
    %v1732 = vadd.f32 %v375, %v1731
    %v1733 = vpop.f32.mrf.mxu0
    %1734 = vdwg.mxu0
    %1735 = vmatpush.bf16.msra.mxu0 %v1279
    %1736 = vmatpush.bf16.msra.mxu0 %v1271
    %1737 = vmatpush.bf16.msra.mxu0 %v1263
    %1738 = vmatpush.bf16.msra.mxu0 %v1255
    %1739 = vmatpush.bf16.msra.mxu0 %v1247
    %1740 = vmatpush.bf16.msra.mxu0 %v1239
    %1741 = vmatpush.bf16.msra.mxu0 %v1231
    %1742 = vmatpush.bf16.msra.mxu0 %v1223
    %1743 = vmatmul.bf16.gmra.mxu0 %v113
    %v1744 = vpop.f32.mrf.mxu0
    %v1745 = vadd.f32 %v1732, %v1744
    %v1746 = vpop.f32.mrf.mxu0
    %1747 = vdwg.mxu0
    %1748 = vmatpush.bf16.msra.mxu0 %v1343
    %1749 = vmatpush.bf16.msra.mxu0 %v1335
    %1750 = vmatpush.bf16.msra.mxu0 %v1327
    %1751 = vmatpush.bf16.msra.mxu0 %v1319
    %1752 = vmatpush.bf16.msra.mxu0 %v1311
    %1753 = vmatpush.bf16.msra.mxu0 %v1303
    %1754 = vmatpush.bf16.msra.mxu0 %v1295
    %1755 = vmatpush.bf16.msra.mxu0 %v1287
    %1756 = vmatmul.bf16.gmra.mxu0 %v114
    %v1757 = vpop.f32.mrf.mxu0
    %v1758 = vadd.f32 %v1745, %v1757
    %v1759 = vpop.f32.mrf.mxu0
    %1760 = vdwg.mxu0
    %1761 = vmatpush.bf16.msra.mxu0 %v1407
    %1762 = vmatpush.bf16.msra.mxu0 %v1399
    %1763 = vmatpush.bf16.msra.mxu0 %v1391
    %1764 = vmatpush.bf16.msra.mxu0 %v1383
    %1765 = vmatpush.bf16.msra.mxu0 %v1375
    %1766 = vmatpush.bf16.msra.mxu0 %v1367
    %1767 = vmatpush.bf16.msra.mxu0 %v1359
    %1768 = vmatpush.bf16.msra.mxu0 %v1351
    %1769 = vmatmul.bf16.gmra.mxu0 %v115
    %v1770 = vpop.f32.mrf.mxu0
    %v1771 = vadd.f32 %v1758, %v1770
    %v1772 = vpop.f32.mrf.mxu0
    %1773 = vdwg.mxu0
    %1774 = vmatpush.bf16.msra.mxu0 %v1216
    %1775 = vmatpush.bf16.msra.mxu0 %v1208
    %1776 = vmatpush.bf16.msra.mxu0 %v1200
    %1777 = vmatpush.bf16.msra.mxu0 %v1192
    %1778 = vmatpush.bf16.msra.mxu0 %v1184
    %1779 = vmatpush.bf16.msra.mxu0 %v1176
    %1780 = vmatpush.bf16.msra.mxu0 %v1168
    %1781 = vmatpush.bf16.msra.mxu0 %v1160
    %1782 = vmatmul.bf16.gmra.mxu0 %v112
    %v1783 = vpop.f32.mrf.mxu0
    %v1784 = vadd.f32 %v376, %v1783
    %v1785 = vpop.f32.mrf.mxu0
    %1786 = vdwg.mxu0
    %1787 = vmatpush.bf16.msra.mxu0 %v1280
    %1788 = vmatpush.bf16.msra.mxu0 %v1272
    %1789 = vmatpush.bf16.msra.mxu0 %v1264
    %1790 = vmatpush.bf16.msra.mxu0 %v1256
    %1791 = vmatpush.bf16.msra.mxu0 %v1248
    %1792 = vmatpush.bf16.msra.mxu0 %v1240
    %1793 = vmatpush.bf16.msra.mxu0 %v1232
    %1794 = vmatpush.bf16.msra.mxu0 %v1224
    %1795 = vmatmul.bf16.gmra.mxu0 %v113
    %v1796 = vpop.f32.mrf.mxu0
    %v1797 = vadd.f32 %v1784, %v1796
    %v1798 = vpop.f32.mrf.mxu0
    %1799 = vdwg.mxu0
    %1800 = vmatpush.bf16.msra.mxu0 %v1344
    %1801 = vmatpush.bf16.msra.mxu0 %v1336
    %1802 = vmatpush.bf16.msra.mxu0 %v1328
    %1803 = vmatpush.bf16.msra.mxu0 %v1320
    %1804 = vmatpush.bf16.msra.mxu0 %v1312
    %1805 = vmatpush.bf16.msra.mxu0 %v1304
    %1806 = vmatpush.bf16.msra.mxu0 %v1296
    %1807 = vmatpush.bf16.msra.mxu0 %v1288
    %1808 = vmatmul.bf16.gmra.mxu0 %v114
    %v1809 = vpop.f32.mrf.mxu0
    %v1810 = vadd.f32 %v1797, %v1809
    %v1811 = vpop.f32.mrf.mxu0
    %1812 = vdwg.mxu0
    %1813 = vmatpush.bf16.msra.mxu0 %v1408
    %1814 = vmatpush.bf16.msra.mxu0 %v1400
    %1815 = vmatpush.bf16.msra.mxu0 %v1392
    %1816 = vmatpush.bf16.msra.mxu0 %v1384
    %1817 = vmatpush.bf16.msra.mxu0 %v1376
    %1818 = vmatpush.bf16.msra.mxu0 %v1368
    %1819 = vmatpush.bf16.msra.mxu0 %v1360
    %1820 = vmatpush.bf16.msra.mxu0 %v1352
    %1821 = vmatmul.bf16.gmra.mxu0 %v115
    %v1822 = vpop.f32.mrf.mxu0
    %v1823 = vadd.f32 %v1810, %v1822
    %v1824 = vpop.f32.mrf.mxu0
    %1825 = vdwg.mxu0
    %1826 = vmatpush.bf16.msra.mxu0 %v1217
    %1827 = vmatpush.bf16.msra.mxu0 %v1209
    %1828 = vmatpush.bf16.msra.mxu0 %v1201
    %1829 = vmatpush.bf16.msra.mxu0 %v1193
    %1830 = vmatpush.bf16.msra.mxu0 %v1185
    %1831 = vmatpush.bf16.msra.mxu0 %v1177
    %1832 = vmatpush.bf16.msra.mxu0 %v1169
    %1833 = vmatpush.bf16.msra.mxu0 %v1161
    %1834 = vmatmul.bf16.gmra.mxu0 %v112
    %v1835 = vpop.f32.mrf.mxu0
    %v1836 = vadd.f32 %v377, %v1835
    %v1837 = vpop.f32.mrf.mxu0
    %1838 = vdwg.mxu0
    %1839 = vmatpush.bf16.msra.mxu0 %v1281
    %1840 = vmatpush.bf16.msra.mxu0 %v1273
    %1841 = vmatpush.bf16.msra.mxu0 %v1265
    %1842 = vmatpush.bf16.msra.mxu0 %v1257
    %1843 = vmatpush.bf16.msra.mxu0 %v1249
    %1844 = vmatpush.bf16.msra.mxu0 %v1241
    %1845 = vmatpush.bf16.msra.mxu0 %v1233
    %1846 = vmatpush.bf16.msra.mxu0 %v1225
    %1847 = vmatmul.bf16.gmra.mxu0 %v113
    %v1848 = vpop.f32.mrf.mxu0
    %v1849 = vadd.f32 %v1836, %v1848
    %v1850 = vpop.f32.mrf.mxu0
    %1851 = vdwg.mxu0
    %1852 = vmatpush.bf16.msra.mxu0 %v1345
    %1853 = vmatpush.bf16.msra.mxu0 %v1337
    %1854 = vmatpush.bf16.msra.mxu0 %v1329
    %1855 = vmatpush.bf16.msra.mxu0 %v1321
    %1856 = vmatpush.bf16.msra.mxu0 %v1313
    %1857 = vmatpush.bf16.msra.mxu0 %v1305
    %1858 = vmatpush.bf16.msra.mxu0 %v1297
    %1859 = vmatpush.bf16.msra.mxu0 %v1289
    %1860 = vmatmul.bf16.gmra.mxu0 %v114
    %v1861 = vpop.f32.mrf.mxu0
    %v1862 = vadd.f32 %v1849, %v1861
    %v1863 = vpop.f32.mrf.mxu0
    %1864 = vdwg.mxu0
    %1865 = vmatpush.bf16.msra.mxu0 %v1409
    %1866 = vmatpush.bf16.msra.mxu0 %v1401
    %1867 = vmatpush.bf16.msra.mxu0 %v1393
    %1868 = vmatpush.bf16.msra.mxu0 %v1385
    %1869 = vmatpush.bf16.msra.mxu0 %v1377
    %1870 = vmatpush.bf16.msra.mxu0 %v1369
    %1871 = vmatpush.bf16.msra.mxu0 %v1361
    %1872 = vmatpush.bf16.msra.mxu0 %v1353
    %1873 = vmatmul.bf16.gmra.mxu0 %v115
    %v1874 = vpop.f32.mrf.mxu0
    %v1875 = vadd.f32 %v1862, %v1874
    %v1876 = vpop.f32.mrf.mxu0
    %1877 = vdwg.mxu0
    %1878 = vmatpush.bf16.msra.mxu0 %v1218
    %1879 = vmatpush.bf16.msra.mxu0 %v1210
    %1880 = vmatpush.bf16.msra.mxu0 %v1202
    %1881 = vmatpush.bf16.msra.mxu0 %v1194
    %1882 = vmatpush.bf16.msra.mxu0 %v1186
    %1883 = vmatpush.bf16.msra.mxu0 %v1178
    %1884 = vmatpush.bf16.msra.mxu0 %v1170
    %1885 = vmatpush.bf16.msra.mxu0 %v1162
    %1886 = vmatmul.bf16.gmra.mxu0 %v112
    %v1887 = vpop.f32.mrf.mxu0
    %v1888 = vadd.f32 %v378, %v1887
    %v1889 = vpop.f32.mrf.mxu0
    %1890 = vdwg.mxu0
    %1891 = vmatpush.bf16.msra.mxu0 %v1282
    %1892 = vmatpush.bf16.msra.mxu0 %v1274
    %1893 = vmatpush.bf16.msra.mxu0 %v1266
    %1894 = vmatpush.bf16.msra.mxu0 %v1258
    %1895 = vmatpush.bf16.msra.mxu0 %v1250
    %1896 = vmatpush.bf16.msra.mxu0 %v1242
    %1897 = vmatpush.bf16.msra.mxu0 %v1234
    %1898 = vmatpush.bf16.msra.mxu0 %v1226
    %1899 = vmatmul.bf16.gmra.mxu0 %v113
    %v1900 = vpop.f32.mrf.mxu0
    %v1901 = vadd.f32 %v1888, %v1900
    %v1902 = vpop.f32.mrf.mxu0
    %1903 = vdwg.mxu0
    %1904 = vmatpush.bf16.msra.mxu0 %v1346
    %1905 = vmatpush.bf16.msra.mxu0 %v1338
    %1906 = vmatpush.bf16.msra.mxu0 %v1330
    %1907 = vmatpush.bf16.msra.mxu0 %v1322
    %1908 = vmatpush.bf16.msra.mxu0 %v1314
    %1909 = vmatpush.bf16.msra.mxu0 %v1306
    %1910 = vmatpush.bf16.msra.mxu0 %v1298
    %1911 = vmatpush.bf16.msra.mxu0 %v1290
    %1912 = vmatmul.bf16.gmra.mxu0 %v114
    %v1913 = vpop.f32.mrf.mxu0
    %v1914 = vadd.f32 %v1901, %v1913
    %v1915 = vpop.f32.mrf.mxu0
    %1916 = vdwg.mxu0
    %1917 = vmatpush.bf16.msra.mxu0 %v1410
    %1918 = vmatpush.bf16.msra.mxu0 %v1402
    %1919 = vmatpush.bf16.msra.mxu0 %v1394
    %1920 = vmatpush.bf16.msra.mxu0 %v1386
    %1921 = vmatpush.bf16.msra.mxu0 %v1378
    %1922 = vmatpush.bf16.msra.mxu0 %v1370
    %1923 = vmatpush.bf16.msra.mxu0 %v1362
    %1924 = vmatpush.bf16.msra.mxu0 %v1354
    %1925 = vmatmul.bf16.gmra.mxu0 %v115
    %v1926 = vpop.f32.mrf.mxu0
    %v1927 = vadd.f32 %v1914, %v1926
    %v1928 = vpop.f32.mrf.mxu0
    %1929 = vdwg.mxu0
    %1930 = vmatpush.bf16.msra.mxu0 %v1219
    %1931 = vmatpush.bf16.msra.mxu0 %v1211
    %1932 = vmatpush.bf16.msra.mxu0 %v1203
    %1933 = vmatpush.bf16.msra.mxu0 %v1195
    %1934 = vmatpush.bf16.msra.mxu0 %v1187
    %1935 = vmatpush.bf16.msra.mxu0 %v1179
    %1936 = vmatpush.bf16.msra.mxu0 %v1171
    %1937 = vmatpush.bf16.msra.mxu0 %v1163
    %1938 = vmatmul.bf16.gmra.mxu0 %v112
    %v1939 = vpop.f32.mrf.mxu0
    %v1940 = vadd.f32 %v379, %v1939
    %v1941 = vpop.f32.mrf.mxu0
    %1942 = vdwg.mxu0
    %1943 = vmatpush.bf16.msra.mxu0 %v1283
    %1944 = vmatpush.bf16.msra.mxu0 %v1275
    %1945 = vmatpush.bf16.msra.mxu0 %v1267
    %1946 = vmatpush.bf16.msra.mxu0 %v1259
    %1947 = vmatpush.bf16.msra.mxu0 %v1251
    %1948 = vmatpush.bf16.msra.mxu0 %v1243
    %1949 = vmatpush.bf16.msra.mxu0 %v1235
    %1950 = vmatpush.bf16.msra.mxu0 %v1227
    %1951 = vmatmul.bf16.gmra.mxu0 %v113
    %v1952 = vpop.f32.mrf.mxu0
    %v1953 = vadd.f32 %v1940, %v1952
    %v1954 = vpop.f32.mrf.mxu0
    %1955 = vdwg.mxu0
    %1956 = vmatpush.bf16.msra.mxu0 %v1347
    %1957 = vmatpush.bf16.msra.mxu0 %v1339
    %1958 = vmatpush.bf16.msra.mxu0 %v1331
    %1959 = vmatpush.bf16.msra.mxu0 %v1323
    %1960 = vmatpush.bf16.msra.mxu0 %v1315
    %1961 = vmatpush.bf16.msra.mxu0 %v1307
    %1962 = vmatpush.bf16.msra.mxu0 %v1299
    %1963 = vmatpush.bf16.msra.mxu0 %v1291
    %1964 = vmatmul.bf16.gmra.mxu0 %v114
    %v1965 = vpop.f32.mrf.mxu0
    %v1966 = vadd.f32 %v1953, %v1965
    %v1967 = vpop.f32.mrf.mxu0
    %1968 = vdwg.mxu0
    %1969 = vmatpush.bf16.msra.mxu0 %v1411
    %1970 = vmatpush.bf16.msra.mxu0 %v1403
    %1971 = vmatpush.bf16.msra.mxu0 %v1395
    %1972 = vmatpush.bf16.msra.mxu0 %v1387
    %1973 = vmatpush.bf16.msra.mxu0 %v1379
    %1974 = vmatpush.bf16.msra.mxu0 %v1371
    %1975 = vmatpush.bf16.msra.mxu0 %v1363
    %1976 = vmatpush.bf16.msra.mxu0 %v1355
    %1977 = vmatmul.bf16.gmra.mxu0 %v115
    %v1978 = vpop.f32.mrf.mxu0
    %v1979 = vadd.f32 %v1966, %v1978
    %v1980 = vpop.f32.mrf.mxu0
    %1981 = vdwg.mxu0
    %1982 = vmatpush.bf16.msra.mxu0 %v1220
    %1983 = vmatpush.bf16.msra.mxu0 %v1212
    %1984 = vmatpush.bf16.msra.mxu0 %v1204
    %1985 = vmatpush.bf16.msra.mxu0 %v1196
    %1986 = vmatpush.bf16.msra.mxu0 %v1188
    %1987 = vmatpush.bf16.msra.mxu0 %v1180
    %1988 = vmatpush.bf16.msra.mxu0 %v1172
    %1989 = vmatpush.bf16.msra.mxu0 %v1164
    %1990 = vmatmul.bf16.gmra.mxu0 %v112
    %v1991 = vpop.f32.mrf.mxu0
    %v1992 = vadd.f32 %v380, %v1991
    %v1993 = vpop.f32.mrf.mxu0
    %1994 = vdwg.mxu0
    %1995 = vmatpush.bf16.msra.mxu0 %v1284
    %1996 = vmatpush.bf16.msra.mxu0 %v1276
    %1997 = vmatpush.bf16.msra.mxu0 %v1268
    %1998 = vmatpush.bf16.msra.mxu0 %v1260
    %1999 = vmatpush.bf16.msra.mxu0 %v1252
    %2000 = vmatpush.bf16.msra.mxu0 %v1244
    %2001 = vmatpush.bf16.msra.mxu0 %v1236
    %2002 = vmatpush.bf16.msra.mxu0 %v1228
    %2003 = vmatmul.bf16.gmra.mxu0 %v113
    %v2004 = vpop.f32.mrf.mxu0
    %v2005 = vadd.f32 %v1992, %v2004
    %v2006 = vpop.f32.mrf.mxu0
    %2007 = vdwg.mxu0
    %2008 = vmatpush.bf16.msra.mxu0 %v1348
    %2009 = vmatpush.bf16.msra.mxu0 %v1340
    %2010 = vmatpush.bf16.msra.mxu0 %v1332
    %2011 = vmatpush.bf16.msra.mxu0 %v1324
    %2012 = vmatpush.bf16.msra.mxu0 %v1316
    %2013 = vmatpush.bf16.msra.mxu0 %v1308
    %2014 = vmatpush.bf16.msra.mxu0 %v1300
    %2015 = vmatpush.bf16.msra.mxu0 %v1292
    %2016 = vmatmul.bf16.gmra.mxu0 %v114
    %v2017 = vpop.f32.mrf.mxu0
    %v2018 = vadd.f32 %v2005, %v2017
    %v2019 = vpop.f32.mrf.mxu0
    %2020 = vdwg.mxu0
    %2021 = vmatpush.bf16.msra.mxu0 %v1412
    %2022 = vmatpush.bf16.msra.mxu0 %v1404
    %2023 = vmatpush.bf16.msra.mxu0 %v1396
    %2024 = vmatpush.bf16.msra.mxu0 %v1388
    %2025 = vmatpush.bf16.msra.mxu0 %v1380
    %2026 = vmatpush.bf16.msra.mxu0 %v1372
    %2027 = vmatpush.bf16.msra.mxu0 %v1364
    %2028 = vmatpush.bf16.msra.mxu0 %v1356
    %2029 = vmatmul.bf16.gmra.mxu0 %v115
    %v2030 = vpop.f32.mrf.mxu0
    %v2031 = vadd.f32 %v2018, %v2030
    %v2032 = vpop.f32.mrf.mxu0
    %2033 = vdwg.mxu0
    %2034 = vmatpush.bf16.msra.mxu0 %v1221
    %2035 = vmatpush.bf16.msra.mxu0 %v1213
    %2036 = vmatpush.bf16.msra.mxu0 %v1205
    %2037 = vmatpush.bf16.msra.mxu0 %v1197
    %2038 = vmatpush.bf16.msra.mxu0 %v1189
    %2039 = vmatpush.bf16.msra.mxu0 %v1181
    %2040 = vmatpush.bf16.msra.mxu0 %v1173
    %2041 = vmatpush.bf16.msra.mxu0 %v1165
    %2042 = vmatmul.bf16.gmra.mxu0 %v112
    %v2043 = vpop.f32.mrf.mxu0
    %v2044 = vadd.f32 %v381, %v2043
    %v2045 = vpop.f32.mrf.mxu0
    %2046 = vdwg.mxu0
    %2047 = vmatpush.bf16.msra.mxu0 %v1285
    %2048 = vmatpush.bf16.msra.mxu0 %v1277
    %2049 = vmatpush.bf16.msra.mxu0 %v1269
    %2050 = vmatpush.bf16.msra.mxu0 %v1261
    %2051 = vmatpush.bf16.msra.mxu0 %v1253
    %2052 = vmatpush.bf16.msra.mxu0 %v1245
    %2053 = vmatpush.bf16.msra.mxu0 %v1237
    %2054 = vmatpush.bf16.msra.mxu0 %v1229
    %2055 = vmatmul.bf16.gmra.mxu0 %v113
    %v2056 = vpop.f32.mrf.mxu0
    %v2057 = vadd.f32 %v2044, %v2056
    %v2058 = vpop.f32.mrf.mxu0
    %2059 = vdwg.mxu0
    %2060 = vmatpush.bf16.msra.mxu0 %v1349
    %2061 = vmatpush.bf16.msra.mxu0 %v1341
    %2062 = vmatpush.bf16.msra.mxu0 %v1333
    %2063 = vmatpush.bf16.msra.mxu0 %v1325
    %2064 = vmatpush.bf16.msra.mxu0 %v1317
    %2065 = vmatpush.bf16.msra.mxu0 %v1309
    %2066 = vmatpush.bf16.msra.mxu0 %v1301
    %2067 = vmatpush.bf16.msra.mxu0 %v1293
    %2068 = vmatmul.bf16.gmra.mxu0 %v114
    %v2069 = vpop.f32.mrf.mxu0
    %v2070 = vadd.f32 %v2057, %v2069
    %v2071 = vpop.f32.mrf.mxu0
    %2072 = vdwg.mxu0
    %2073 = vmatpush.bf16.msra.mxu0 %v1413
    %2074 = vmatpush.bf16.msra.mxu0 %v1405
    %2075 = vmatpush.bf16.msra.mxu0 %v1397
    %2076 = vmatpush.bf16.msra.mxu0 %v1389
    %2077 = vmatpush.bf16.msra.mxu0 %v1381
    %2078 = vmatpush.bf16.msra.mxu0 %v1373
    %2079 = vmatpush.bf16.msra.mxu0 %v1365
    %2080 = vmatpush.bf16.msra.mxu0 %v1357
    %2081 = vmatmul.bf16.gmra.mxu0 %v115
    %v2082 = vpop.f32.mrf.mxu0
    %v2083 = vadd.f32 %v2070, %v2082
    %v2084 = vpop.f32.mrf.mxu0
    %2085 = vdwg.mxu0
    %v2086 = vmax.f32 %v1719, 0.0
    %v2087 = vmax.f32 %v1771, 0.0
    %v2088 = vmax.f32 %v1823, 0.0
    %v2089 = vmax.f32 %v1875, 0.0
    %v2090 = vmax.f32 %v1927, 0.0
    %v2091 = vmax.f32 %v1979, 0.0
    %v2092 = vmax.f32 %v2031, 0.0
    %v2093 = vmax.f32 %v2083, 0.0
    %v2094 = vpack.c.bf16 %v2086, %v2086
    %v2095 = vpack.c.bf16 %v2087, %v2087
    %v2096 = vpack.c.bf16 %v2088, %v2088
    %v2097 = vpack.c.bf16 %v2089, %v2089
    %v2098 = vpack.c.bf16 %v2090, %v2090
    %v2099 = vpack.c.bf16 %v2091, %v2091
    %v2100 = vpack.c.bf16 %v2092, %v2092
    %v2101 = vpack.c.bf16 %v2093, %v2093
    %v2102 = vld [vmem:[#allocation8] sm:$0xff]
    %v2103 = vld [vmem:[#allocation8 + $0x8] sm:$0xff]
    %v2104 = vld [vmem:[#allocation8 + $0x10] sm:$0xff]
    %v2105 = vld [vmem:[#allocation8 + $0x18] sm:$0xff]
    %v2106 = vld [vmem:[#allocation8 + $0x20] sm:$0xff]
    %v2107 = vld [vmem:[#allocation8 + $0x28] sm:$0xff]
    %v2108 = vld [vmem:[#allocation8 + $0x30] sm:$0xff]
    %v2109 = vld [vmem:[#allocation8 + $0x38] sm:$0xff]
    %v2110 = vld [vmem:[#allocation8 + $0x40] sm:$0xff]
    %v2111 = vld [vmem:[#allocation8 + $0x48] sm:$0xff]
    %v2112 = vld [vmem:[#allocation8 + $0x50] sm:$0xff]
    %v2113 = vld [vmem:[#allocation8 + $0x58] sm:$0xff]
    %v2114 = vld [vmem:[#allocation8 + $0x60] sm:$0xff]
    %v2115 = vld [vmem:[#allocation8 + $0x68] sm:$0xff]
    %v2116 = vld [vmem:[#allocation8 + $0x70] sm:$0xff]
    %v2117 = vld [vmem:[#allocation8 + $0x78] sm:$0xff]
    %v2118 = vld [vmem:[#allocation8 + $0x80] sm:$0xff]
    %v2119 = vld [vmem:[#allocation8 + $0x88] sm:$0xff]
    %v2120 = vld [vmem:[#allocation8 + $0x90] sm:$0xff]
    %v2121 = vld [vmem:[#allocation8 + $0x98] sm:$0xff]
    %v2122 = vld [vmem:[#allocation8 + $0xa0] sm:$0xff]
    %v2123 = vld [vmem:[#allocation8 + $0xa8] sm:$0xff]
    %v2124 = vld [vmem:[#allocation8 + $0xb0] sm:$0xff]
    %v2125 = vld [vmem:[#allocation8 + $0xb8] sm:$0xff]
    %v2126 = vld [vmem:[#allocation8 + $0xc0] sm:$0xff]
    %v2127 = vld [vmem:[#allocation8 + $0xc8] sm:$0xff]
    %v2128 = vld [vmem:[#allocation8 + $0xd0] sm:$0xff]
    %v2129 = vld [vmem:[#allocation8 + $0xd8] sm:$0xff]
    %v2130 = vld [vmem:[#allocation8 + $0xe0] sm:$0xff]
    %v2131 = vld [vmem:[#allocation8 + $0xe8] sm:$0xff]
    %v2132 = vld [vmem:[#allocation8 + $0xf0] sm:$0xff]
    %v2133 = vld [vmem:[#allocation8 + $0xf8] sm:$0xff]
    %v2134 = vld [vmem:[#allocation8 + $0x100] sm:$0xff]
    %v2135 = vld [vmem:[#allocation8 + $0x108] sm:$0xff]
    %v2136 = vld [vmem:[#allocation8 + $0x110] sm:$0xff]
    %v2137 = vld [vmem:[#allocation8 + $0x118] sm:$0xff]
    %v2138 = vld [vmem:[#allocation8 + $0x120] sm:$0xff]
    %v2139 = vld [vmem:[#allocation8 + $0x128] sm:$0xff]
    %v2140 = vld [vmem:[#allocation8 + $0x130] sm:$0xff]
    %v2141 = vld [vmem:[#allocation8 + $0x138] sm:$0xff]
    %v2142 = vld [vmem:[#allocation8 + $0x140] sm:$0xff]
    %v2143 = vld [vmem:[#allocation8 + $0x148] sm:$0xff]
    %v2144 = vld [vmem:[#allocation8 + $0x150] sm:$0xff]
    %v2145 = vld [vmem:[#allocation8 + $0x158] sm:$0xff]
    %v2146 = vld [vmem:[#allocation8 + $0x160] sm:$0xff]
    %v2147 = vld [vmem:[#allocation8 + $0x168] sm:$0xff]
    %v2148 = vld [vmem:[#allocation8 + $0x170] sm:$0xff]
    %v2149 = vld [vmem:[#allocation8 + $0x178] sm:$0xff]
    %v2150 = vld [vmem:[#allocation8 + $0x180] sm:$0xff]
    %v2151 = vld [vmem:[#allocation8 + $0x188] sm:$0xff]
    %v2152 = vld [vmem:[#allocation8 + $0x190] sm:$0xff]
    %v2153 = vld [vmem:[#allocation8 + $0x198] sm:$0xff]
    %v2154 = vld [vmem:[#allocation8 + $0x1a0] sm:$0xff]
    %v2155 = vld [vmem:[#allocation8 + $0x1a8] sm:$0xff]
    %v2156 = vld [vmem:[#allocation8 + $0x1b0] sm:$0xff]
    %v2157 = vld [vmem:[#allocation8 + $0x1b8] sm:$0xff]
    %v2158 = vld [vmem:[#allocation8 + $0x1c0] sm:$0xff]
    %v2159 = vld [vmem:[#allocation8 + $0x1c8] sm:$0xff]
    %v2160 = vld [vmem:[#allocation8 + $0x1d0] sm:$0xff]
    %v2161 = vld [vmem:[#allocation8 + $0x1d8] sm:$0xff]
    %v2162 = vld [vmem:[#allocation8 + $0x1e0] sm:$0xff]
    %v2163 = vld [vmem:[#allocation8 + $0x1e8] sm:$0xff]
    %v2164 = vld [vmem:[#allocation8 + $0x1f0] sm:$0xff]
    %v2165 = vld [vmem:[#allocation8 + $0x1f8] sm:$0xff]
    %v2166 = vld [vmem:[#allocation8 + $0x200] sm:$0xff]
    %v2167 = vld [vmem:[#allocation8 + $0x208] sm:$0xff]
    %v2168 = vld [vmem:[#allocation8 + $0x210] sm:$0xff]
    %v2169 = vld [vmem:[#allocation8 + $0x218] sm:$0xff]
    %v2170 = vld [vmem:[#allocation8 + $0x220] sm:$0xff]
    %v2171 = vld [vmem:[#allocation8 + $0x228] sm:$0xff]
    %v2172 = vld [vmem:[#allocation8 + $0x230] sm:$0xff]
    %v2173 = vld [vmem:[#allocation8 + $0x238] sm:$0xff]
    %v2174 = vld [vmem:[#allocation8 + $0x240] sm:$0xff]
    %v2175 = vld [vmem:[#allocation8 + $0x248] sm:$0xff]
    %v2176 = vld [vmem:[#allocation8 + $0x250] sm:$0xff]
    %v2177 = vld [vmem:[#allocation8 + $0x258] sm:$0xff]
    %v2178 = vld [vmem:[#allocation8 + $0x260] sm:$0xff]
    %v2179 = vld [vmem:[#allocation8 + $0x268] sm:$0xff]
    %v2180 = vld [vmem:[#allocation8 + $0x270] sm:$0xff]
    %v2181 = vld [vmem:[#allocation8 + $0x278] sm:$0xff]
    %v2182 = vld [vmem:[#allocation8 + $0x280] sm:$0xff]
    %v2183 = vld [vmem:[#allocation8 + $0x288] sm:$0xff]
    %v2184 = vld [vmem:[#allocation8 + $0x290] sm:$0xff]
    %v2185 = vld [vmem:[#allocation8 + $0x298] sm:$0xff]
    %v2186 = vld [vmem:[#allocation8 + $0x2a0] sm:$0xff]
    %v2187 = vld [vmem:[#allocation8 + $0x2a8] sm:$0xff]
    %v2188 = vld [vmem:[#allocation8 + $0x2b0] sm:$0xff]
    %v2189 = vld [vmem:[#allocation8 + $0x2b8] sm:$0xff]
    %v2190 = vld [vmem:[#allocation8 + $0x2c0] sm:$0xff]
    %v2191 = vld [vmem:[#allocation8 + $0x2c8] sm:$0xff]
    %v2192 = vld [vmem:[#allocation8 + $0x2d0] sm:$0xff]
    %v2193 = vld [vmem:[#allocation8 + $0x2d8] sm:$0xff]
    %v2194 = vld [vmem:[#allocation8 + $0x2e0] sm:$0xff]
    %v2195 = vld [vmem:[#allocation8 + $0x2e8] sm:$0xff]
    %v2196 = vld [vmem:[#allocation8 + $0x2f0] sm:$0xff]
    %v2197 = vld [vmem:[#allocation8 + $0x2f8] sm:$0xff]
    %v2198 = vld [vmem:[#allocation8 + $0x300] sm:$0xff]
    %v2199 = vld [vmem:[#allocation8 + $0x308] sm:$0xff]
    %v2200 = vld [vmem:[#allocation8 + $0x310] sm:$0xff]
    %v2201 = vld [vmem:[#allocation8 + $0x318] sm:$0xff]
    %v2202 = vld [vmem:[#allocation8 + $0x320] sm:$0xff]
    %v2203 = vld [vmem:[#allocation8 + $0x328] sm:$0xff]
    %v2204 = vld [vmem:[#allocation8 + $0x330] sm:$0xff]
    %v2205 = vld [vmem:[#allocation8 + $0x338] sm:$0xff]
    %v2206 = vld [vmem:[#allocation8 + $0x340] sm:$0xff]
    %v2207 = vld [vmem:[#allocation8 + $0x348] sm:$0xff]
    %v2208 = vld [vmem:[#allocation8 + $0x350] sm:$0xff]
    %v2209 = vld [vmem:[#allocation8 + $0x358] sm:$0xff]
    %v2210 = vld [vmem:[#allocation8 + $0x360] sm:$0xff]
    %v2211 = vld [vmem:[#allocation8 + $0x368] sm:$0xff]
    %v2212 = vld [vmem:[#allocation8 + $0x370] sm:$0xff]
    %v2213 = vld [vmem:[#allocation8 + $0x378] sm:$0xff]
    %v2214 = vld [vmem:[#allocation8 + $0x380] sm:$0xff]
    %v2215 = vld [vmem:[#allocation8 + $0x388] sm:$0xff]
    %v2216 = vld [vmem:[#allocation8 + $0x390] sm:$0xff]
    %v2217 = vld [vmem:[#allocation8 + $0x398] sm:$0xff]
    %v2218 = vld [vmem:[#allocation8 + $0x3a0] sm:$0xff]
    %v2219 = vld [vmem:[#allocation8 + $0x3a8] sm:$0xff]
    %v2220 = vld [vmem:[#allocation8 + $0x3b0] sm:$0xff]
    %v2221 = vld [vmem:[#allocation8 + $0x3b8] sm:$0xff]
    %v2222 = vld [vmem:[#allocation8 + $0x3c0] sm:$0xff]
    %v2223 = vld [vmem:[#allocation8 + $0x3c8] sm:$0xff]
    %v2224 = vld [vmem:[#allocation8 + $0x3d0] sm:$0xff]
    %v2225 = vld [vmem:[#allocation8 + $0x3d8] sm:$0xff]
    %v2226 = vld [vmem:[#allocation8 + $0x3e0] sm:$0xff]
    %v2227 = vld [vmem:[#allocation8 + $0x3e8] sm:$0xff]
    %v2228 = vld [vmem:[#allocation8 + $0x3f0] sm:$0xff]
    %v2229 = vld [vmem:[#allocation8 + $0x3f8] sm:$0xff]
    %v2230 = vld [vmem:[#allocation8 + $0x400] sm:$0xff]
    %v2231 = vld [vmem:[#allocation8 + $0x408] sm:$0xff]
    %v2232 = vld [vmem:[#allocation8 + $0x410] sm:$0xff]
    %v2233 = vld [vmem:[#allocation8 + $0x418] sm:$0xff]
    %v2234 = vld [vmem:[#allocation8 + $0x420] sm:$0xff]
    %v2235 = vld [vmem:[#allocation8 + $0x428] sm:$0xff]
    %v2236 = vld [vmem:[#allocation8 + $0x430] sm:$0xff]
    %v2237 = vld [vmem:[#allocation8 + $0x438] sm:$0xff]
    %v2238 = vld [vmem:[#allocation8 + $0x440] sm:$0xff]
    %v2239 = vld [vmem:[#allocation8 + $0x448] sm:$0xff]
    %v2240 = vld [vmem:[#allocation8 + $0x450] sm:$0xff]
    %v2241 = vld [vmem:[#allocation8 + $0x458] sm:$0xff]
    %v2242 = vld [vmem:[#allocation8 + $0x460] sm:$0xff]
    %v2243 = vld [vmem:[#allocation8 + $0x468] sm:$0xff]
    %v2244 = vld [vmem:[#allocation8 + $0x470] sm:$0xff]
    %v2245 = vld [vmem:[#allocation8 + $0x478] sm:$0xff]
    %v2246 = vld [vmem:[#allocation8 + $0x480] sm:$0xff]
    %v2247 = vld [vmem:[#allocation8 + $0x488] sm:$0xff]
    %v2248 = vld [vmem:[#allocation8 + $0x490] sm:$0xff]
    %v2249 = vld [vmem:[#allocation8 + $0x498] sm:$0xff]
    %v2250 = vld [vmem:[#allocation8 + $0x4a0] sm:$0xff]
    %v2251 = vld [vmem:[#allocation8 + $0x4a8] sm:$0xff]
    %v2252 = vld [vmem:[#allocation8 + $0x4b0] sm:$0xff]
    %v2253 = vld [vmem:[#allocation8 + $0x4b8] sm:$0xff]
    %v2254 = vld [vmem:[#allocation8 + $0x4c0] sm:$0xff]
    %v2255 = vld [vmem:[#allocation8 + $0x4c8] sm:$0xff]
    %v2256 = vld [vmem:[#allocation8 + $0x4d0] sm:$0xff]
    %v2257 = vld [vmem:[#allocation8 + $0x4d8] sm:$0xff]
    %v2258 = vld [vmem:[#allocation8 + $0x4e0] sm:$0xff]
    %v2259 = vld [vmem:[#allocation8 + $0x4e8] sm:$0xff]
    %v2260 = vld [vmem:[#allocation8 + $0x4f0] sm:$0xff]
    %v2261 = vld [vmem:[#allocation8 + $0x4f8] sm:$0xff]
    %v2262 = vld [vmem:[#allocation8 + $0x500] sm:$0xff]
    %v2263 = vld [vmem:[#allocation8 + $0x508] sm:$0xff]
    %v2264 = vld [vmem:[#allocation8 + $0x510] sm:$0xff]
    %v2265 = vld [vmem:[#allocation8 + $0x518] sm:$0xff]
    %v2266 = vld [vmem:[#allocation8 + $0x520] sm:$0xff]
    %v2267 = vld [vmem:[#allocation8 + $0x528] sm:$0xff]
    %v2268 = vld [vmem:[#allocation8 + $0x530] sm:$0xff]
    %v2269 = vld [vmem:[#allocation8 + $0x538] sm:$0xff]
    %v2270 = vld [vmem:[#allocation8 + $0x540] sm:$0xff]
    %v2271 = vld [vmem:[#allocation8 + $0x548] sm:$0xff]
    %v2272 = vld [vmem:[#allocation8 + $0x550] sm:$0xff]
    %v2273 = vld [vmem:[#allocation8 + $0x558] sm:$0xff]
    %v2274 = vld [vmem:[#allocation8 + $0x560] sm:$0xff]
    %v2275 = vld [vmem:[#allocation8 + $0x568] sm:$0xff]
    %v2276 = vld [vmem:[#allocation8 + $0x570] sm:$0xff]
    %v2277 = vld [vmem:[#allocation8 + $0x578] sm:$0xff]
    %v2278 = vld [vmem:[#allocation8 + $0x580] sm:$0xff]
    %v2279 = vld [vmem:[#allocation8 + $0x588] sm:$0xff]
    %v2280 = vld [vmem:[#allocation8 + $0x590] sm:$0xff]
    %v2281 = vld [vmem:[#allocation8 + $0x598] sm:$0xff]
    %v2282 = vld [vmem:[#allocation8 + $0x5a0] sm:$0xff]
    %v2283 = vld [vmem:[#allocation8 + $0x5a8] sm:$0xff]
    %v2284 = vld [vmem:[#allocation8 + $0x5b0] sm:$0xff]
    %v2285 = vld [vmem:[#allocation8 + $0x5b8] sm:$0xff]
    %v2286 = vld [vmem:[#allocation8 + $0x5c0] sm:$0xff]
    %v2287 = vld [vmem:[#allocation8 + $0x5c8] sm:$0xff]
    %v2288 = vld [vmem:[#allocation8 + $0x5d0] sm:$0xff]
    %v2289 = vld [vmem:[#allocation8 + $0x5d8] sm:$0xff]
    %v2290 = vld [vmem:[#allocation8 + $0x5e0] sm:$0xff]
    %v2291 = vld [vmem:[#allocation8 + $0x5e8] sm:$0xff]
    %v2292 = vld [vmem:[#allocation8 + $0x5f0] sm:$0xff]
    %v2293 = vld [vmem:[#allocation8 + $0x5f8] sm:$0xff]
    %v2294 = vld [vmem:[#allocation8 + $0x600] sm:$0xff]
    %v2295 = vld [vmem:[#allocation8 + $0x608] sm:$0xff]
    %v2296 = vld [vmem:[#allocation8 + $0x610] sm:$0xff]
    %v2297 = vld [vmem:[#allocation8 + $0x618] sm:$0xff]
    %v2298 = vld [vmem:[#allocation8 + $0x620] sm:$0xff]
    %v2299 = vld [vmem:[#allocation8 + $0x628] sm:$0xff]
    %v2300 = vld [vmem:[#allocation8 + $0x630] sm:$0xff]
    %v2301 = vld [vmem:[#allocation8 + $0x638] sm:$0xff]
    %v2302 = vld [vmem:[#allocation8 + $0x640] sm:$0xff]
    %v2303 = vld [vmem:[#allocation8 + $0x648] sm:$0xff]
    %v2304 = vld [vmem:[#allocation8 + $0x650] sm:$0xff]
    %v2305 = vld [vmem:[#allocation8 + $0x658] sm:$0xff]
    %v2306 = vld [vmem:[#allocation8 + $0x660] sm:$0xff]
    %v2307 = vld [vmem:[#allocation8 + $0x668] sm:$0xff]
    %v2308 = vld [vmem:[#allocation8 + $0x670] sm:$0xff]
    %v2309 = vld [vmem:[#allocation8 + $0x678] sm:$0xff]
    %v2310 = vld [vmem:[#allocation8 + $0x680] sm:$0xff]
    %v2311 = vld [vmem:[#allocation8 + $0x688] sm:$0xff]
    %v2312 = vld [vmem:[#allocation8 + $0x690] sm:$0xff]
    %v2313 = vld [vmem:[#allocation8 + $0x698] sm:$0xff]
    %v2314 = vld [vmem:[#allocation8 + $0x6a0] sm:$0xff]
    %v2315 = vld [vmem:[#allocation8 + $0x6a8] sm:$0xff]
    %v2316 = vld [vmem:[#allocation8 + $0x6b0] sm:$0xff]
    %v2317 = vld [vmem:[#allocation8 + $0x6b8] sm:$0xff]
    %v2318 = vld [vmem:[#allocation8 + $0x6c0] sm:$0xff]
    %v2319 = vld [vmem:[#allocation8 + $0x6c8] sm:$0xff]
    %v2320 = vld [vmem:[#allocation8 + $0x6d0] sm:$0xff]
    %v2321 = vld [vmem:[#allocation8 + $0x6d8] sm:$0xff]
    %v2322 = vld [vmem:[#allocation8 + $0x6e0] sm:$0xff]
    %v2323 = vld [vmem:[#allocation8 + $0x6e8] sm:$0xff]
    %v2324 = vld [vmem:[#allocation8 + $0x6f0] sm:$0xff]
    %v2325 = vld [vmem:[#allocation8 + $0x6f8] sm:$0xff]
    %v2326 = vld [vmem:[#allocation8 + $0x700] sm:$0xff]
    %v2327 = vld [vmem:[#allocation8 + $0x708] sm:$0xff]
    %v2328 = vld [vmem:[#allocation8 + $0x710] sm:$0xff]
    %v2329 = vld [vmem:[#allocation8 + $0x718] sm:$0xff]
    %v2330 = vld [vmem:[#allocation8 + $0x720] sm:$0xff]
    %v2331 = vld [vmem:[#allocation8 + $0x728] sm:$0xff]
    %v2332 = vld [vmem:[#allocation8 + $0x730] sm:$0xff]
    %v2333 = vld [vmem:[#allocation8 + $0x738] sm:$0xff]
    %v2334 = vld [vmem:[#allocation8 + $0x740] sm:$0xff]
    %v2335 = vld [vmem:[#allocation8 + $0x748] sm:$0xff]
    %v2336 = vld [vmem:[#allocation8 + $0x750] sm:$0xff]
    %v2337 = vld [vmem:[#allocation8 + $0x758] sm:$0xff]
    %v2338 = vld [vmem:[#allocation8 + $0x760] sm:$0xff]
    %v2339 = vld [vmem:[#allocation8 + $0x768] sm:$0xff]
    %v2340 = vld [vmem:[#allocation8 + $0x770] sm:$0xff]
    %v2341 = vld [vmem:[#allocation8 + $0x778] sm:$0xff]
    %v2342 = vld [vmem:[#allocation8 + $0x780] sm:$0xff]
    %v2343 = vld [vmem:[#allocation8 + $0x788] sm:$0xff]
    %v2344 = vld [vmem:[#allocation8 + $0x790] sm:$0xff]
    %v2345 = vld [vmem:[#allocation8 + $0x798] sm:$0xff]
    %v2346 = vld [vmem:[#allocation8 + $0x7a0] sm:$0xff]
    %v2347 = vld [vmem:[#allocation8 + $0x7a8] sm:$0xff]
    %v2348 = vld [vmem:[#allocation8 + $0x7b0] sm:$0xff]
    %v2349 = vld [vmem:[#allocation8 + $0x7b8] sm:$0xff]
    %v2350 = vld [vmem:[#allocation8 + $0x7c0] sm:$0xff]
    %v2351 = vld [vmem:[#allocation8 + $0x7c8] sm:$0xff]
    %v2352 = vld [vmem:[#allocation8 + $0x7d0] sm:$0xff]
    %v2353 = vld [vmem:[#allocation8 + $0x7d8] sm:$0xff]
    %v2354 = vld [vmem:[#allocation8 + $0x7e0] sm:$0xff]
    %v2355 = vld [vmem:[#allocation8 + $0x7e8] sm:$0xff]
    %v2356 = vld [vmem:[#allocation8 + $0x7f0] sm:$0xff]
    %v2357 = vld [vmem:[#allocation8 + $0x7f8] sm:$0xff]
    %v2358 = vld [vmem:[%s4] sm:$0xf]
    %v2360 = vperm.slane %v2358, 0
    %v2361 = vperm.slane %v2358, 1
    %v2362 = vperm.slane %v2358, 2
    %v2363 = vperm.slane %v2358, 3
    %v2624 = vunpack.c.l.b16 %v2102
    %v2625 = vunpack.c.h.b16 %v2102
    %v2626 = vunpack.c.l.b16 %v2103
    %v2627 = vunpack.c.h.b16 %v2103
    %v2628 = vunpack.c.l.b16 %v2104
    %v2629 = vunpack.c.h.b16 %v2104
    %v2630 = vunpack.c.l.b16 %v2105
    %v2631 = vunpack.c.h.b16 %v2105
    %v2632 = vunpack.c.l.b16 %v2106
    %v2633 = vunpack.c.h.b16 %v2106
    %v2634 = vunpack.c.l.b16 %v2107
    %v2635 = vunpack.c.h.b16 %v2107
    %v2636 = vunpack.c.l.b16 %v2108
    %v2637 = vunpack.c.h.b16 %v2108
    %v2638 = vunpack.c.l.b16 %v2109
    %v2639 = vunpack.c.h.b16 %v2109
    %v2640 = vunpack.c.l.b16 %v2110
    %v2641 = vunpack.c.h.b16 %v2110
    %v2642 = vunpack.c.l.b16 %v2111
    %v2643 = vunpack.c.h.b16 %v2111
    %v2644 = vunpack.c.l.b16 %v2112
    %v2645 = vunpack.c.h.b16 %v2112
    %v2646 = vunpack.c.l.b16 %v2113
    %v2647 = vunpack.c.h.b16 %v2113
    %v2648 = vunpack.c.l.b16 %v2114
    %v2649 = vunpack.c.h.b16 %v2114
    %v2650 = vunpack.c.l.b16 %v2115
    %v2651 = vunpack.c.h.b16 %v2115
    %v2652 = vunpack.c.l.b16 %v2116
    %v2653 = vunpack.c.h.b16 %v2116
    %v2654 = vunpack.c.l.b16 %v2117
    %v2655 = vunpack.c.h.b16 %v2117
    %v2656 = vunpack.c.l.b16 %v2118
    %v2657 = vunpack.c.h.b16 %v2118
    %v2658 = vunpack.c.l.b16 %v2119
    %v2659 = vunpack.c.h.b16 %v2119
    %v2660 = vunpack.c.l.b16 %v2120
    %v2661 = vunpack.c.h.b16 %v2120
    %v2662 = vunpack.c.l.b16 %v2121
    %v2663 = vunpack.c.h.b16 %v2121
    %v2664 = vunpack.c.l.b16 %v2122
    %v2665 = vunpack.c.h.b16 %v2122
    %v2666 = vunpack.c.l.b16 %v2123
    %v2667 = vunpack.c.h.b16 %v2123
    %v2668 = vunpack.c.l.b16 %v2124
    %v2669 = vunpack.c.h.b16 %v2124
    %v2670 = vunpack.c.l.b16 %v2125
    %v2671 = vunpack.c.h.b16 %v2125
    %v2672 = vunpack.c.l.b16 %v2126
    %v2673 = vunpack.c.h.b16 %v2126
    %v2674 = vunpack.c.l.b16 %v2127
    %v2675 = vunpack.c.h.b16 %v2127
    %v2676 = vunpack.c.l.b16 %v2128
    %v2677 = vunpack.c.h.b16 %v2128
    %v2678 = vunpack.c.l.b16 %v2129
    %v2679 = vunpack.c.h.b16 %v2129
    %v2680 = vunpack.c.l.b16 %v2130
    %v2681 = vunpack.c.h.b16 %v2130
    %v2682 = vunpack.c.l.b16 %v2131
    %v2683 = vunpack.c.h.b16 %v2131
    %v2684 = vunpack.c.l.b16 %v2132
    %v2685 = vunpack.c.h.b16 %v2132
    %v2686 = vunpack.c.l.b16 %v2133
    %v2687 = vunpack.c.h.b16 %v2133
    %v2688 = vunpack.c.l.b16 %v2134
    %v2689 = vunpack.c.h.b16 %v2134
    %v2690 = vunpack.c.l.b16 %v2135
    %v2691 = vunpack.c.h.b16 %v2135
    %v2692 = vunpack.c.l.b16 %v2136
    %v2693 = vunpack.c.h.b16 %v2136
    %v2694 = vunpack.c.l.b16 %v2137
    %v2695 = vunpack.c.h.b16 %v2137
    %v2696 = vunpack.c.l.b16 %v2138
    %v2697 = vunpack.c.h.b16 %v2138
    %v2698 = vunpack.c.l.b16 %v2139
    %v2699 = vunpack.c.h.b16 %v2139
    %v2700 = vunpack.c.l.b16 %v2140
    %v2701 = vunpack.c.h.b16 %v2140
    %v2702 = vunpack.c.l.b16 %v2141
    %v2703 = vunpack.c.h.b16 %v2141
    %v2704 = vunpack.c.l.b16 %v2142
    %v2705 = vunpack.c.h.b16 %v2142
    %v2706 = vunpack.c.l.b16 %v2143
    %v2707 = vunpack.c.h.b16 %v2143
    %v2708 = vunpack.c.l.b16 %v2144
    %v2709 = vunpack.c.h.b16 %v2144
    %v2710 = vunpack.c.l.b16 %v2145
    %v2711 = vunpack.c.h.b16 %v2145
    %v2712 = vunpack.c.l.b16 %v2146
    %v2713 = vunpack.c.h.b16 %v2146
    %v2714 = vunpack.c.l.b16 %v2147
    %v2715 = vunpack.c.h.b16 %v2147
    %v2716 = vunpack.c.l.b16 %v2148
    %v2717 = vunpack.c.h.b16 %v2148
    %v2718 = vunpack.c.l.b16 %v2149
    %v2719 = vunpack.c.h.b16 %v2149
    %v2720 = vunpack.c.l.b16 %v2150
    %v2721 = vunpack.c.h.b16 %v2150
    %v2722 = vunpack.c.l.b16 %v2151
    %v2723 = vunpack.c.h.b16 %v2151
    %v2724 = vunpack.c.l.b16 %v2152
    %v2725 = vunpack.c.h.b16 %v2152
    %v2726 = vunpack.c.l.b16 %v2153
    %v2727 = vunpack.c.h.b16 %v2153
    %v2728 = vunpack.c.l.b16 %v2154
    %v2729 = vunpack.c.h.b16 %v2154
    %v2730 = vunpack.c.l.b16 %v2155
    %v2731 = vunpack.c.h.b16 %v2155
    %v2732 = vunpack.c.l.b16 %v2156
    %v2733 = vunpack.c.h.b16 %v2156
    %v2734 = vunpack.c.l.b16 %v2157
    %v2735 = vunpack.c.h.b16 %v2157
    %v2736 = vunpack.c.l.b16 %v2158
    %v2737 = vunpack.c.h.b16 %v2158
    %v2738 = vunpack.c.l.b16 %v2159
    %v2739 = vunpack.c.h.b16 %v2159
    %v2740 = vunpack.c.l.b16 %v2160
    %v2741 = vunpack.c.h.b16 %v2160
    %v2742 = vunpack.c.l.b16 %v2161
    %v2743 = vunpack.c.h.b16 %v2161
    %v2744 = vunpack.c.l.b16 %v2162
    %v2745 = vunpack.c.h.b16 %v2162
    %v2746 = vunpack.c.l.b16 %v2163
    %v2747 = vunpack.c.h.b16 %v2163
    %v2748 = vunpack.c.l.b16 %v2164
    %v2749 = vunpack.c.h.b16 %v2164
    %v2750 = vunpack.c.l.b16 %v2165
    %v2751 = vunpack.c.h.b16 %v2165
    %v2752 = vunpack.c.l.b16 %v2166
    %v2753 = vunpack.c.h.b16 %v2166
    %v2754 = vunpack.c.l.b16 %v2167
    %v2755 = vunpack.c.h.b16 %v2167
    %v2756 = vunpack.c.l.b16 %v2168
    %v2757 = vunpack.c.h.b16 %v2168
    %v2758 = vunpack.c.l.b16 %v2169
    %v2759 = vunpack.c.h.b16 %v2169
    %v2760 = vunpack.c.l.b16 %v2170
    %v2761 = vunpack.c.h.b16 %v2170
    %v2762 = vunpack.c.l.b16 %v2171
    %v2763 = vunpack.c.h.b16 %v2171
    %v2764 = vunpack.c.l.b16 %v2172
    %v2765 = vunpack.c.h.b16 %v2172
    %v2766 = vunpack.c.l.b16 %v2173
    %v2767 = vunpack.c.h.b16 %v2173
    %v2768 = vunpack.c.l.b16 %v2174
    %v2769 = vunpack.c.h.b16 %v2174
    %v2770 = vunpack.c.l.b16 %v2175
    %v2771 = vunpack.c.h.b16 %v2175
    %v2772 = vunpack.c.l.b16 %v2176
    %v2773 = vunpack.c.h.b16 %v2176
    %v2774 = vunpack.c.l.b16 %v2177
    %v2775 = vunpack.c.h.b16 %v2177
    %v2776 = vunpack.c.l.b16 %v2178
    %v2777 = vunpack.c.h.b16 %v2178
    %v2778 = vunpack.c.l.b16 %v2179
    %v2779 = vunpack.c.h.b16 %v2179
    %v2780 = vunpack.c.l.b16 %v2180
    %v2781 = vunpack.c.h.b16 %v2180
    %v2782 = vunpack.c.l.b16 %v2181
    %v2783 = vunpack.c.h.b16 %v2181
    %v2784 = vunpack.c.l.b16 %v2182
    %v2785 = vunpack.c.h.b16 %v2182
    %v2786 = vunpack.c.l.b16 %v2183
    %v2787 = vunpack.c.h.b16 %v2183
    %v2788 = vunpack.c.l.b16 %v2184
    %v2789 = vunpack.c.h.b16 %v2184
    %v2790 = vunpack.c.l.b16 %v2185
    %v2791 = vunpack.c.h.b16 %v2185
    %v2792 = vunpack.c.l.b16 %v2186
    %v2793 = vunpack.c.h.b16 %v2186
    %v2794 = vunpack.c.l.b16 %v2187
    %v2795 = vunpack.c.h.b16 %v2187
    %v2796 = vunpack.c.l.b16 %v2188
    %v2797 = vunpack.c.h.b16 %v2188
    %v2798 = vunpack.c.l.b16 %v2189
    %v2799 = vunpack.c.h.b16 %v2189
    %v2800 = vunpack.c.l.b16 %v2190
    %v2801 = vunpack.c.h.b16 %v2190
    %v2802 = vunpack.c.l.b16 %v2191
    %v2803 = vunpack.c.h.b16 %v2191
    %v2804 = vunpack.c.l.b16 %v2192
    %v2805 = vunpack.c.h.b16 %v2192
    %v2806 = vunpack.c.l.b16 %v2193
    %v2807 = vunpack.c.h.b16 %v2193
    %v2808 = vunpack.c.l.b16 %v2194
    %v2809 = vunpack.c.h.b16 %v2194
    %v2810 = vunpack.c.l.b16 %v2195
    %v2811 = vunpack.c.h.b16 %v2195
    %v2812 = vunpack.c.l.b16 %v2196
    %v2813 = vunpack.c.h.b16 %v2196
    %v2814 = vunpack.c.l.b16 %v2197
    %v2815 = vunpack.c.h.b16 %v2197
    %v2816 = vunpack.c.l.b16 %v2198
    %v2817 = vunpack.c.h.b16 %v2198
    %v2818 = vunpack.c.l.b16 %v2199
    %v2819 = vunpack.c.h.b16 %v2199
    %v2820 = vunpack.c.l.b16 %v2200
    %v2821 = vunpack.c.h.b16 %v2200
    %v2822 = vunpack.c.l.b16 %v2201
    %v2823 = vunpack.c.h.b16 %v2201
    %v2824 = vunpack.c.l.b16 %v2202
    %v2825 = vunpack.c.h.b16 %v2202
    %v2826 = vunpack.c.l.b16 %v2203
    %v2827 = vunpack.c.h.b16 %v2203
    %v2828 = vunpack.c.l.b16 %v2204
    %v2829 = vunpack.c.h.b16 %v2204
    %v2830 = vunpack.c.l.b16 %v2205
    %v2831 = vunpack.c.h.b16 %v2205
    %v2832 = vunpack.c.l.b16 %v2206
    %v2833 = vunpack.c.h.b16 %v2206
    %v2834 = vunpack.c.l.b16 %v2207
    %v2835 = vunpack.c.h.b16 %v2207
    %v2836 = vunpack.c.l.b16 %v2208
    %v2837 = vunpack.c.h.b16 %v2208
    %v2838 = vunpack.c.l.b16 %v2209
    %v2839 = vunpack.c.h.b16 %v2209
    %v2840 = vunpack.c.l.b16 %v2210
    %v2841 = vunpack.c.h.b16 %v2210
    %v2842 = vunpack.c.l.b16 %v2211
    %v2843 = vunpack.c.h.b16 %v2211
    %v2844 = vunpack.c.l.b16 %v2212
    %v2845 = vunpack.c.h.b16 %v2212
    %v2846 = vunpack.c.l.b16 %v2213
    %v2847 = vunpack.c.h.b16 %v2213
    %v2848 = vunpack.c.l.b16 %v2214
    %v2849 = vunpack.c.h.b16 %v2214
    %v2850 = vunpack.c.l.b16 %v2215
    %v2851 = vunpack.c.h.b16 %v2215
    %v2852 = vunpack.c.l.b16 %v2216
    %v2853 = vunpack.c.h.b16 %v2216
    %v2854 = vunpack.c.l.b16 %v2217
    %v2855 = vunpack.c.h.b16 %v2217
    %v2856 = vunpack.c.l.b16 %v2218
    %v2857 = vunpack.c.h.b16 %v2218
    %v2858 = vunpack.c.l.b16 %v2219
    %v2859 = vunpack.c.h.b16 %v2219
    %v2860 = vunpack.c.l.b16 %v2220
    %v2861 = vunpack.c.h.b16 %v2220
    %v2862 = vunpack.c.l.b16 %v2221
    %v2863 = vunpack.c.h.b16 %v2221
    %v2864 = vunpack.c.l.b16 %v2222
    %v2865 = vunpack.c.h.b16 %v2222
    %v2866 = vunpack.c.l.b16 %v2223
    %v2867 = vunpack.c.h.b16 %v2223
    %v2868 = vunpack.c.l.b16 %v2224
    %v2869 = vunpack.c.h.b16 %v2224
    %v2870 = vunpack.c.l.b16 %v2225
    %v2871 = vunpack.c.h.b16 %v2225
    %v2872 = vunpack.c.l.b16 %v2226
    %v2873 = vunpack.c.h.b16 %v2226
    %v2874 = vunpack.c.l.b16 %v2227
    %v2875 = vunpack.c.h.b16 %v2227
    %v2876 = vunpack.c.l.b16 %v2228
    %v2877 = vunpack.c.h.b16 %v2228
    %v2878 = vunpack.c.l.b16 %v2229
    %v2879 = vunpack.c.h.b16 %v2229
    %v2880 = vunpack.c.l.b16 %v2230
    %v2881 = vunpack.c.h.b16 %v2230
    %v2882 = vunpack.c.l.b16 %v2231
    %v2883 = vunpack.c.h.b16 %v2231
    %v2884 = vunpack.c.l.b16 %v2232
    %v2885 = vunpack.c.h.b16 %v2232
    %v2886 = vunpack.c.l.b16 %v2233
    %v2887 = vunpack.c.h.b16 %v2233
    %v2888 = vunpack.c.l.b16 %v2234
    %v2889 = vunpack.c.h.b16 %v2234
    %v2890 = vunpack.c.l.b16 %v2235
    %v2891 = vunpack.c.h.b16 %v2235
    %v2892 = vunpack.c.l.b16 %v2236
    %v2893 = vunpack.c.h.b16 %v2236
    %v2894 = vunpack.c.l.b16 %v2237
    %v2895 = vunpack.c.h.b16 %v2237
    %v2896 = vunpack.c.l.b16 %v2238
    %v2897 = vunpack.c.h.b16 %v2238
    %v2898 = vunpack.c.l.b16 %v2239
    %v2899 = vunpack.c.h.b16 %v2239
    %v2900 = vunpack.c.l.b16 %v2240
    %v2901 = vunpack.c.h.b16 %v2240
    %v2902 = vunpack.c.l.b16 %v2241
    %v2903 = vunpack.c.h.b16 %v2241
    %v2904 = vunpack.c.l.b16 %v2242
    %v2905 = vunpack.c.h.b16 %v2242
    %v2906 = vunpack.c.l.b16 %v2243
    %v2907 = vunpack.c.h.b16 %v2243
    %v2908 = vunpack.c.l.b16 %v2244
    %v2909 = vunpack.c.h.b16 %v2244
    %v2910 = vunpack.c.l.b16 %v2245
    %v2911 = vunpack.c.h.b16 %v2245
    %v2912 = vunpack.c.l.b16 %v2246
    %v2913 = vunpack.c.h.b16 %v2246
    %v2914 = vunpack.c.l.b16 %v2247
    %v2915 = vunpack.c.h.b16 %v2247
    %v2916 = vunpack.c.l.b16 %v2248
    %v2917 = vunpack.c.h.b16 %v2248
    %v2918 = vunpack.c.l.b16 %v2249
    %v2919 = vunpack.c.h.b16 %v2249
    %v2920 = vunpack.c.l.b16 %v2250
    %v2921 = vunpack.c.h.b16 %v2250
    %v2922 = vunpack.c.l.b16 %v2251
    %v2923 = vunpack.c.h.b16 %v2251
    %v2924 = vunpack.c.l.b16 %v2252
    %v2925 = vunpack.c.h.b16 %v2252
    %v2926 = vunpack.c.l.b16 %v2253
    %v2927 = vunpack.c.h.b16 %v2253
    %v2928 = vunpack.c.l.b16 %v2254
    %v2929 = vunpack.c.h.b16 %v2254
    %v2930 = vunpack.c.l.b16 %v2255
    %v2931 = vunpack.c.h.b16 %v2255
    %v2932 = vunpack.c.l.b16 %v2256
    %v2933 = vunpack.c.h.b16 %v2256
    %v2934 = vunpack.c.l.b16 %v2257
    %v2935 = vunpack.c.h.b16 %v2257
    %v2936 = vunpack.c.l.b16 %v2258
    %v2937 = vunpack.c.h.b16 %v2258
    %v2938 = vunpack.c.l.b16 %v2259
    %v2939 = vunpack.c.h.b16 %v2259
    %v2940 = vunpack.c.l.b16 %v2260
    %v2941 = vunpack.c.h.b16 %v2260
    %v2942 = vunpack.c.l.b16 %v2261
    %v2943 = vunpack.c.h.b16 %v2261
    %v2944 = vunpack.c.l.b16 %v2262
    %v2945 = vunpack.c.h.b16 %v2262
    %v2946 = vunpack.c.l.b16 %v2263
    %v2947 = vunpack.c.h.b16 %v2263
    %v2948 = vunpack.c.l.b16 %v2264
    %v2949 = vunpack.c.h.b16 %v2264
    %v2950 = vunpack.c.l.b16 %v2265
    %v2951 = vunpack.c.h.b16 %v2265
    %v2952 = vunpack.c.l.b16 %v2266
    %v2953 = vunpack.c.h.b16 %v2266
    %v2954 = vunpack.c.l.b16 %v2267
    %v2955 = vunpack.c.h.b16 %v2267
    %v2956 = vunpack.c.l.b16 %v2268
    %v2957 = vunpack.c.h.b16 %v2268
    %v2958 = vunpack.c.l.b16 %v2269
    %v2959 = vunpack.c.h.b16 %v2269
    %v2960 = vunpack.c.l.b16 %v2270
    %v2961 = vunpack.c.h.b16 %v2270
    %v2962 = vunpack.c.l.b16 %v2271
    %v2963 = vunpack.c.h.b16 %v2271
    %v2964 = vunpack.c.l.b16 %v2272
    %v2965 = vunpack.c.h.b16 %v2272
    %v2966 = vunpack.c.l.b16 %v2273
    %v2967 = vunpack.c.h.b16 %v2273
    %v2968 = vunpack.c.l.b16 %v2274
    %v2969 = vunpack.c.h.b16 %v2274
    %v2970 = vunpack.c.l.b16 %v2275
    %v2971 = vunpack.c.h.b16 %v2275
    %v2972 = vunpack.c.l.b16 %v2276
    %v2973 = vunpack.c.h.b16 %v2276
    %v2974 = vunpack.c.l.b16 %v2277
    %v2975 = vunpack.c.h.b16 %v2277
    %v2976 = vunpack.c.l.b16 %v2278
    %v2977 = vunpack.c.h.b16 %v2278
    %v2978 = vunpack.c.l.b16 %v2279
    %v2979 = vunpack.c.h.b16 %v2279
    %v2980 = vunpack.c.l.b16 %v2280
    %v2981 = vunpack.c.h.b16 %v2280
    %v2982 = vunpack.c.l.b16 %v2281
    %v2983 = vunpack.c.h.b16 %v2281
    %v2984 = vunpack.c.l.b16 %v2282
    %v2985 = vunpack.c.h.b16 %v2282
    %v2986 = vunpack.c.l.b16 %v2283
    %v2987 = vunpack.c.h.b16 %v2283
    %v2988 = vunpack.c.l.b16 %v2284
    %v2989 = vunpack.c.h.b16 %v2284
    %v2990 = vunpack.c.l.b16 %v2285
    %v2991 = vunpack.c.h.b16 %v2285
    %v2992 = vunpack.c.l.b16 %v2286
    %v2993 = vunpack.c.h.b16 %v2286
    %v2994 = vunpack.c.l.b16 %v2287
    %v2995 = vunpack.c.h.b16 %v2287
    %v2996 = vunpack.c.l.b16 %v2288
    %v2997 = vunpack.c.h.b16 %v2288
    %v2998 = vunpack.c.l.b16 %v2289
    %v2999 = vunpack.c.h.b16 %v2289
    %v3000 = vunpack.c.l.b16 %v2290
    %v3001 = vunpack.c.h.b16 %v2290
    %v3002 = vunpack.c.l.b16 %v2291
    %v3003 = vunpack.c.h.b16 %v2291
    %v3004 = vunpack.c.l.b16 %v2292
    %v3005 = vunpack.c.h.b16 %v2292
    %v3006 = vunpack.c.l.b16 %v2293
    %v3007 = vunpack.c.h.b16 %v2293
    %v3008 = vunpack.c.l.b16 %v2294
    %v3009 = vunpack.c.h.b16 %v2294
    %v3010 = vunpack.c.l.b16 %v2295
    %v3011 = vunpack.c.h.b16 %v2295
    %v3012 = vunpack.c.l.b16 %v2296
    %v3013 = vunpack.c.h.b16 %v2296
    %v3014 = vunpack.c.l.b16 %v2297
    %v3015 = vunpack.c.h.b16 %v2297
    %v3016 = vunpack.c.l.b16 %v2298
    %v3017 = vunpack.c.h.b16 %v2298
    %v3018 = vunpack.c.l.b16 %v2299
    %v3019 = vunpack.c.h.b16 %v2299
    %v3020 = vunpack.c.l.b16 %v2300
    %v3021 = vunpack.c.h.b16 %v2300
    %v3022 = vunpack.c.l.b16 %v2301
    %v3023 = vunpack.c.h.b16 %v2301
    %v3024 = vunpack.c.l.b16 %v2302
    %v3025 = vunpack.c.h.b16 %v2302
    %v3026 = vunpack.c.l.b16 %v2303
    %v3027 = vunpack.c.h.b16 %v2303
    %v3028 = vunpack.c.l.b16 %v2304
    %v3029 = vunpack.c.h.b16 %v2304
    %v3030 = vunpack.c.l.b16 %v2305
    %v3031 = vunpack.c.h.b16 %v2305
    %v3032 = vunpack.c.l.b16 %v2306
    %v3033 = vunpack.c.h.b16 %v2306
    %v3034 = vunpack.c.l.b16 %v2307
    %v3035 = vunpack.c.h.b16 %v2307
    %v3036 = vunpack.c.l.b16 %v2308
    %v3037 = vunpack.c.h.b16 %v2308
    %v3038 = vunpack.c.l.b16 %v2309
    %v3039 = vunpack.c.h.b16 %v2309
    %v3040 = vunpack.c.l.b16 %v2310
    %v3041 = vunpack.c.h.b16 %v2310
    %v3042 = vunpack.c.l.b16 %v2311
    %v3043 = vunpack.c.h.b16 %v2311
    %v3044 = vunpack.c.l.b16 %v2312
    %v3045 = vunpack.c.h.b16 %v2312
    %v3046 = vunpack.c.l.b16 %v2313
    %v3047 = vunpack.c.h.b16 %v2313
    %v3048 = vunpack.c.l.b16 %v2314
    %v3049 = vunpack.c.h.b16 %v2314
    %v3050 = vunpack.c.l.b16 %v2315
    %v3051 = vunpack.c.h.b16 %v2315
    %v3052 = vunpack.c.l.b16 %v2316
    %v3053 = vunpack.c.h.b16 %v2316
    %v3054 = vunpack.c.l.b16 %v2317
    %v3055 = vunpack.c.h.b16 %v2317
    %v3056 = vunpack.c.l.b16 %v2318
    %v3057 = vunpack.c.h.b16 %v2318
    %v3058 = vunpack.c.l.b16 %v2319
    %v3059 = vunpack.c.h.b16 %v2319
    %v3060 = vunpack.c.l.b16 %v2320
    %v3061 = vunpack.c.h.b16 %v2320
    %v3062 = vunpack.c.l.b16 %v2321
    %v3063 = vunpack.c.h.b16 %v2321
    %v3064 = vunpack.c.l.b16 %v2322
    %v3065 = vunpack.c.h.b16 %v2322
    %v3066 = vunpack.c.l.b16 %v2323
    %v3067 = vunpack.c.h.b16 %v2323
    %v3068 = vunpack.c.l.b16 %v2324
    %v3069 = vunpack.c.h.b16 %v2324
    %v3070 = vunpack.c.l.b16 %v2325
    %v3071 = vunpack.c.h.b16 %v2325
    %v3072 = vunpack.c.l.b16 %v2326
    %v3073 = vunpack.c.h.b16 %v2326
    %v3074 = vunpack.c.l.b16 %v2327
    %v3075 = vunpack.c.h.b16 %v2327
    %v3076 = vunpack.c.l.b16 %v2328
    %v3077 = vunpack.c.h.b16 %v2328
    %v3078 = vunpack.c.l.b16 %v2329
    %v3079 = vunpack.c.h.b16 %v2329
    %v3080 = vunpack.c.l.b16 %v2330
    %v3081 = vunpack.c.h.b16 %v2330
    %v3082 = vunpack.c.l.b16 %v2331
    %v3083 = vunpack.c.h.b16 %v2331
    %v3084 = vunpack.c.l.b16 %v2332
    %v3085 = vunpack.c.h.b16 %v2332
    %v3086 = vunpack.c.l.b16 %v2333
    %v3087 = vunpack.c.h.b16 %v2333
    %v3088 = vunpack.c.l.b16 %v2334
    %v3089 = vunpack.c.h.b16 %v2334
    %v3090 = vunpack.c.l.b16 %v2335
    %v3091 = vunpack.c.h.b16 %v2335
    %v3092 = vunpack.c.l.b16 %v2336
    %v3093 = vunpack.c.h.b16 %v2336
    %v3094 = vunpack.c.l.b16 %v2337
    %v3095 = vunpack.c.h.b16 %v2337
    %v3096 = vunpack.c.l.b16 %v2338
    %v3097 = vunpack.c.h.b16 %v2338
    %v3098 = vunpack.c.l.b16 %v2339
    %v3099 = vunpack.c.h.b16 %v2339
    %v3100 = vunpack.c.l.b16 %v2340
    %v3101 = vunpack.c.h.b16 %v2340
    %v3102 = vunpack.c.l.b16 %v2341
    %v3103 = vunpack.c.h.b16 %v2341
    %v3104 = vunpack.c.l.b16 %v2342
    %v3105 = vunpack.c.h.b16 %v2342
    %v3106 = vunpack.c.l.b16 %v2343
    %v3107 = vunpack.c.h.b16 %v2343
    %v3108 = vunpack.c.l.b16 %v2344
    %v3109 = vunpack.c.h.b16 %v2344
    %v3110 = vunpack.c.l.b16 %v2345
    %v3111 = vunpack.c.h.b16 %v2345
    %v3112 = vunpack.c.l.b16 %v2346
    %v3113 = vunpack.c.h.b16 %v2346
    %v3114 = vunpack.c.l.b16 %v2347
    %v3115 = vunpack.c.h.b16 %v2347
    %v3116 = vunpack.c.l.b16 %v2348
    %v3117 = vunpack.c.h.b16 %v2348
    %v3118 = vunpack.c.l.b16 %v2349
    %v3119 = vunpack.c.h.b16 %v2349
    %v3120 = vunpack.c.l.b16 %v2350
    %v3121 = vunpack.c.h.b16 %v2350
    %v3122 = vunpack.c.l.b16 %v2351
    %v3123 = vunpack.c.h.b16 %v2351
    %v3124 = vunpack.c.l.b16 %v2352
    %v3125 = vunpack.c.h.b16 %v2352
    %v3126 = vunpack.c.l.b16 %v2353
    %v3127 = vunpack.c.h.b16 %v2353
    %v3128 = vunpack.c.l.b16 %v2354
    %v3129 = vunpack.c.h.b16 %v2354
    %v3130 = vunpack.c.l.b16 %v2355
    %v3131 = vunpack.c.h.b16 %v2355
    %v3132 = vunpack.c.l.b16 %v2356
    %v3133 = vunpack.c.h.b16 %v2356
    %v3134 = vunpack.c.l.b16 %v2357
    %v3135 = vunpack.c.h.b16 %v2357
    %v3136 = vpack.c.b16 %v2628, %v2624
    %v3137 = vpack.c.b16 %v2629, %v2625
    %v3138 = vpack.c.b16 %v2630, %v2626
    %v3139 = vpack.c.b16 %v2631, %v2627
    %v3140 = vpack.c.b16 %v2636, %v2632
    %v3141 = vpack.c.b16 %v2637, %v2633
    %v3142 = vpack.c.b16 %v2638, %v2634
    %v3143 = vpack.c.b16 %v2639, %v2635
    %v3144 = vpack.c.b16 %v2644, %v2640
    %v3145 = vpack.c.b16 %v2645, %v2641
    %v3146 = vpack.c.b16 %v2646, %v2642
    %v3147 = vpack.c.b16 %v2647, %v2643
    %v3148 = vpack.c.b16 %v2652, %v2648
    %v3149 = vpack.c.b16 %v2653, %v2649
    %v3150 = vpack.c.b16 %v2654, %v2650
    %v3151 = vpack.c.b16 %v2655, %v2651
    %v3152 = vpack.c.b16 %v2660, %v2656
    %v3153 = vpack.c.b16 %v2661, %v2657
    %v3154 = vpack.c.b16 %v2662, %v2658
    %v3155 = vpack.c.b16 %v2663, %v2659
    %v3156 = vpack.c.b16 %v2668, %v2664
    %v3157 = vpack.c.b16 %v2669, %v2665
    %v3158 = vpack.c.b16 %v2670, %v2666
    %v3159 = vpack.c.b16 %v2671, %v2667
    %v3160 = vpack.c.b16 %v2676, %v2672
    %v3161 = vpack.c.b16 %v2677, %v2673
    %v3162 = vpack.c.b16 %v2678, %v2674
    %v3163 = vpack.c.b16 %v2679, %v2675
    %v3164 = vpack.c.b16 %v2684, %v2680
    %v3165 = vpack.c.b16 %v2685, %v2681
    %v3166 = vpack.c.b16 %v2686, %v2682
    %v3167 = vpack.c.b16 %v2687, %v2683
    %v3168 = vpack.c.b16 %v2692, %v2688
    %v3169 = vpack.c.b16 %v2693, %v2689
    %v3170 = vpack.c.b16 %v2694, %v2690
    %v3171 = vpack.c.b16 %v2695, %v2691
    %v3172 = vpack.c.b16 %v2700, %v2696
    %v3173 = vpack.c.b16 %v2701, %v2697
    %v3174 = vpack.c.b16 %v2702, %v2698
    %v3175 = vpack.c.b16 %v2703, %v2699
    %v3176 = vpack.c.b16 %v2708, %v2704
    %v3177 = vpack.c.b16 %v2709, %v2705
    %v3178 = vpack.c.b16 %v2710, %v2706
    %v3179 = vpack.c.b16 %v2711, %v2707
    %v3180 = vpack.c.b16 %v2716, %v2712
    %v3181 = vpack.c.b16 %v2717, %v2713
    %v3182 = vpack.c.b16 %v2718, %v2714
    %v3183 = vpack.c.b16 %v2719, %v2715
    %v3184 = vpack.c.b16 %v2724, %v2720
    %v3185 = vpack.c.b16 %v2725, %v2721
    %v3186 = vpack.c.b16 %v2726, %v2722
    %v3187 = vpack.c.b16 %v2727, %v2723
    %v3188 = vpack.c.b16 %v2732, %v2728
    %v3189 = vpack.c.b16 %v2733, %v2729
    %v3190 = vpack.c.b16 %v2734, %v2730
    %v3191 = vpack.c.b16 %v2735, %v2731
    %v3192 = vpack.c.b16 %v2740, %v2736
    %v3193 = vpack.c.b16 %v2741, %v2737
    %v3194 = vpack.c.b16 %v2742, %v2738
    %v3195 = vpack.c.b16 %v2743, %v2739
    %v3196 = vpack.c.b16 %v2748, %v2744
    %v3197 = vpack.c.b16 %v2749, %v2745
    %v3198 = vpack.c.b16 %v2750, %v2746
    %v3199 = vpack.c.b16 %v2751, %v2747
    %v3200 = vpack.c.b16 %v2756, %v2752
    %v3201 = vpack.c.b16 %v2757, %v2753
    %v3202 = vpack.c.b16 %v2758, %v2754
    %v3203 = vpack.c.b16 %v2759, %v2755
    %v3204 = vpack.c.b16 %v2764, %v2760
    %v3205 = vpack.c.b16 %v2765, %v2761
    %v3206 = vpack.c.b16 %v2766, %v2762
    %v3207 = vpack.c.b16 %v2767, %v2763
    %v3208 = vpack.c.b16 %v2772, %v2768
    %v3209 = vpack.c.b16 %v2773, %v2769
    %v3210 = vpack.c.b16 %v2774, %v2770
    %v3211 = vpack.c.b16 %v2775, %v2771
    %v3212 = vpack.c.b16 %v2780, %v2776
    %v3213 = vpack.c.b16 %v2781, %v2777
    %v3214 = vpack.c.b16 %v2782, %v2778
    %v3215 = vpack.c.b16 %v2783, %v2779
    %v3216 = vpack.c.b16 %v2788, %v2784
    %v3217 = vpack.c.b16 %v2789, %v2785
    %v3218 = vpack.c.b16 %v2790, %v2786
    %v3219 = vpack.c.b16 %v2791, %v2787
    %v3220 = vpack.c.b16 %v2796, %v2792
    %v3221 = vpack.c.b16 %v2797, %v2793
    %v3222 = vpack.c.b16 %v2798, %v2794
    %v3223 = vpack.c.b16 %v2799, %v2795
    %v3224 = vpack.c.b16 %v2804, %v2800
    %v3225 = vpack.c.b16 %v2805, %v2801
    %v3226 = vpack.c.b16 %v2806, %v2802
    %v3227 = vpack.c.b16 %v2807, %v2803
    %v3228 = vpack.c.b16 %v2812, %v2808
    %v3229 = vpack.c.b16 %v2813, %v2809
    %v3230 = vpack.c.b16 %v2814, %v2810
    %v3231 = vpack.c.b16 %v2815, %v2811
    %v3232 = vpack.c.b16 %v2820, %v2816
    %v3233 = vpack.c.b16 %v2821, %v2817
    %v3234 = vpack.c.b16 %v2822, %v2818
    %v3235 = vpack.c.b16 %v2823, %v2819
    %v3236 = vpack.c.b16 %v2828, %v2824
    %v3237 = vpack.c.b16 %v2829, %v2825
    %v3238 = vpack.c.b16 %v2830, %v2826
    %v3239 = vpack.c.b16 %v2831, %v2827
    %v3240 = vpack.c.b16 %v2836, %v2832
    %v3241 = vpack.c.b16 %v2837, %v2833
    %v3242 = vpack.c.b16 %v2838, %v2834
    %v3243 = vpack.c.b16 %v2839, %v2835
    %v3244 = vpack.c.b16 %v2844, %v2840
    %v3245 = vpack.c.b16 %v2845, %v2841
    %v3246 = vpack.c.b16 %v2846, %v2842
    %v3247 = vpack.c.b16 %v2847, %v2843
    %v3248 = vpack.c.b16 %v2852, %v2848
    %v3249 = vpack.c.b16 %v2853, %v2849
    %v3250 = vpack.c.b16 %v2854, %v2850
    %v3251 = vpack.c.b16 %v2855, %v2851
    %v3252 = vpack.c.b16 %v2860, %v2856
    %v3253 = vpack.c.b16 %v2861, %v2857
    %v3254 = vpack.c.b16 %v2862, %v2858
    %v3255 = vpack.c.b16 %v2863, %v2859
    %v3256 = vpack.c.b16 %v2868, %v2864
    %v3257 = vpack.c.b16 %v2869, %v2865
    %v3258 = vpack.c.b16 %v2870, %v2866
    %v3259 = vpack.c.b16 %v2871, %v2867
    %v3260 = vpack.c.b16 %v2876, %v2872
    %v3261 = vpack.c.b16 %v2877, %v2873
    %v3262 = vpack.c.b16 %v2878, %v2874
    %v3263 = vpack.c.b16 %v2879, %v2875
    %v3264 = vpack.c.b16 %v2884, %v2880
    %v3265 = vpack.c.b16 %v2885, %v2881
    %v3266 = vpack.c.b16 %v2886, %v2882
    %v3267 = vpack.c.b16 %v2887, %v2883
    %v3268 = vpack.c.b16 %v2892, %v2888
    %v3269 = vpack.c.b16 %v2893, %v2889
    %v3270 = vpack.c.b16 %v2894, %v2890
    %v3271 = vpack.c.b16 %v2895, %v2891
    %v3272 = vpack.c.b16 %v2900, %v2896
    %v3273 = vpack.c.b16 %v2901, %v2897
    %v3274 = vpack.c.b16 %v2902, %v2898
    %v3275 = vpack.c.b16 %v2903, %v2899
    %v3276 = vpack.c.b16 %v2908, %v2904
    %v3277 = vpack.c.b16 %v2909, %v2905
    %v3278 = vpack.c.b16 %v2910, %v2906
    %v3279 = vpack.c.b16 %v2911, %v2907
    %v3280 = vpack.c.b16 %v2916, %v2912
    %v3281 = vpack.c.b16 %v2917, %v2913
    %v3282 = vpack.c.b16 %v2918, %v2914
    %v3283 = vpack.c.b16 %v2919, %v2915
    %v3284 = vpack.c.b16 %v2924, %v2920
    %v3285 = vpack.c.b16 %v2925, %v2921
    %v3286 = vpack.c.b16 %v2926, %v2922
    %v3287 = vpack.c.b16 %v2927, %v2923
    %v3288 = vpack.c.b16 %v2932, %v2928
    %v3289 = vpack.c.b16 %v2933, %v2929
    %v3290 = vpack.c.b16 %v2934, %v2930
    %v3291 = vpack.c.b16 %v2935, %v2931
    %v3292 = vpack.c.b16 %v2940, %v2936
    %v3293 = vpack.c.b16 %v2941, %v2937
    %v3294 = vpack.c.b16 %v2942, %v2938
    %v3295 = vpack.c.b16 %v2943, %v2939
    %v3296 = vpack.c.b16 %v2948, %v2944
    %v3297 = vpack.c.b16 %v2949, %v2945
    %v3298 = vpack.c.b16 %v2950, %v2946
    %v3299 = vpack.c.b16 %v2951, %v2947
    %v3300 = vpack.c.b16 %v2956, %v2952
    %v3301 = vpack.c.b16 %v2957, %v2953
    %v3302 = vpack.c.b16 %v2958, %v2954
    %v3303 = vpack.c.b16 %v2959, %v2955
    %v3304 = vpack.c.b16 %v2964, %v2960
    %v3305 = vpack.c.b16 %v2965, %v2961
    %v3306 = vpack.c.b16 %v2966, %v2962
    %v3307 = vpack.c.b16 %v2967, %v2963
    %v3308 = vpack.c.b16 %v2972, %v2968
    %v3309 = vpack.c.b16 %v2973, %v2969
    %v3310 = vpack.c.b16 %v2974, %v2970
    %v3311 = vpack.c.b16 %v2975, %v2971
    %v3312 = vpack.c.b16 %v2980, %v2976
    %v3313 = vpack.c.b16 %v2981, %v2977
    %v3314 = vpack.c.b16 %v2982, %v2978
    %v3315 = vpack.c.b16 %v2983, %v2979
    %v3316 = vpack.c.b16 %v2988, %v2984
    %v3317 = vpack.c.b16 %v2989, %v2985
    %v3318 = vpack.c.b16 %v2990, %v2986
    %v3319 = vpack.c.b16 %v2991, %v2987
    %v3320 = vpack.c.b16 %v2996, %v2992
    %v3321 = vpack.c.b16 %v2997, %v2993
    %v3322 = vpack.c.b16 %v2998, %v2994
    %v3323 = vpack.c.b16 %v2999, %v2995
    %v3324 = vpack.c.b16 %v3004, %v3000
    %v3325 = vpack.c.b16 %v3005, %v3001
    %v3326 = vpack.c.b16 %v3006, %v3002
    %v3327 = vpack.c.b16 %v3007, %v3003
    %v3328 = vpack.c.b16 %v3012, %v3008
    %v3329 = vpack.c.b16 %v3013, %v3009
    %v3330 = vpack.c.b16 %v3014, %v3010
    %v3331 = vpack.c.b16 %v3015, %v3011
    %v3332 = vpack.c.b16 %v3020, %v3016
    %v3333 = vpack.c.b16 %v3021, %v3017
    %v3334 = vpack.c.b16 %v3022, %v3018
    %v3335 = vpack.c.b16 %v3023, %v3019
    %v3336 = vpack.c.b16 %v3028, %v3024
    %v3337 = vpack.c.b16 %v3029, %v3025
    %v3338 = vpack.c.b16 %v3030, %v3026
    %v3339 = vpack.c.b16 %v3031, %v3027
    %v3340 = vpack.c.b16 %v3036, %v3032
    %v3341 = vpack.c.b16 %v3037, %v3033
    %v3342 = vpack.c.b16 %v3038, %v3034
    %v3343 = vpack.c.b16 %v3039, %v3035
    %v3344 = vpack.c.b16 %v3044, %v3040
    %v3345 = vpack.c.b16 %v3045, %v3041
    %v3346 = vpack.c.b16 %v3046, %v3042
    %v3347 = vpack.c.b16 %v3047, %v3043
    %v3348 = vpack.c.b16 %v3052, %v3048
    %v3349 = vpack.c.b16 %v3053, %v3049
    %v3350 = vpack.c.b16 %v3054, %v3050
    %v3351 = vpack.c.b16 %v3055, %v3051
    %v3352 = vpack.c.b16 %v3060, %v3056
    %v3353 = vpack.c.b16 %v3061, %v3057
    %v3354 = vpack.c.b16 %v3062, %v3058
    %v3355 = vpack.c.b16 %v3063, %v3059
    %v3356 = vpack.c.b16 %v3068, %v3064
    %v3357 = vpack.c.b16 %v3069, %v3065
    %v3358 = vpack.c.b16 %v3070, %v3066
    %v3359 = vpack.c.b16 %v3071, %v3067
    %v3360 = vpack.c.b16 %v3076, %v3072
    %v3361 = vpack.c.b16 %v3077, %v3073
    %v3362 = vpack.c.b16 %v3078, %v3074
    %v3363 = vpack.c.b16 %v3079, %v3075
    %v3364 = vpack.c.b16 %v3084, %v3080
    %v3365 = vpack.c.b16 %v3085, %v3081
    %v3366 = vpack.c.b16 %v3086, %v3082
    %v3367 = vpack.c.b16 %v3087, %v3083
    %v3368 = vpack.c.b16 %v3092, %v3088
    %v3369 = vpack.c.b16 %v3093, %v3089
    %v3370 = vpack.c.b16 %v3094, %v3090
    %v3371 = vpack.c.b16 %v3095, %v3091
    %v3372 = vpack.c.b16 %v3100, %v3096
    %v3373 = vpack.c.b16 %v3101, %v3097
    %v3374 = vpack.c.b16 %v3102, %v3098
    %v3375 = vpack.c.b16 %v3103, %v3099
    %v3376 = vpack.c.b16 %v3108, %v3104
    %v3377 = vpack.c.b16 %v3109, %v3105
    %v3378 = vpack.c.b16 %v3110, %v3106
    %v3379 = vpack.c.b16 %v3111, %v3107
    %v3380 = vpack.c.b16 %v3116, %v3112
    %v3381 = vpack.c.b16 %v3117, %v3113
    %v3382 = vpack.c.b16 %v3118, %v3114
    %v3383 = vpack.c.b16 %v3119, %v3115
    %v3384 = vpack.c.b16 %v3124, %v3120
    %v3385 = vpack.c.b16 %v3125, %v3121
    %v3386 = vpack.c.b16 %v3126, %v3122
    %v3387 = vpack.c.b16 %v3127, %v3123
    %v3388 = vpack.c.b16 %v3132, %v3128
    %v3389 = vpack.c.b16 %v3133, %v3129
    %v3390 = vpack.c.b16 %v3134, %v3130
    %v3391 = vpack.c.b16 %v3135, %v3131
    %3648 = vmatpush.bf16.msra.mxu0 %v3164
    %3649 = vmatpush.bf16.msra.mxu0 %v3160
    %3650 = vmatpush.bf16.msra.mxu0 %v3156
    %3651 = vmatpush.bf16.msra.mxu0 %v3152
    %3652 = vmatpush.bf16.msra.mxu0 %v3148
    %3653 = vmatpush.bf16.msra.mxu0 %v3144
    %3654 = vmatpush.bf16.msra.mxu0 %v3140
    %3655 = vmatpush.bf16.msra.mxu0 %v3136
    %3656 = vmatmul.bf16.gmra.mxu0 %v2094
    %v3657 = vpop.f32.mrf.mxu0
    %v3658 = vadd.f32 %v2360, %v3657
    %v3659 = vpop.f32.mrf.mxu0
    %3660 = vdwg.mxu0
    %3661 = vmatpush.bf16.msra.mxu0 %v3196
    %3662 = vmatpush.bf16.msra.mxu0 %v3192
    %3663 = vmatpush.bf16.msra.mxu0 %v3188
    %3664 = vmatpush.bf16.msra.mxu0 %v3184
    %3665 = vmatpush.bf16.msra.mxu0 %v3180
    %3666 = vmatpush.bf16.msra.mxu0 %v3176
    %3667 = vmatpush.bf16.msra.mxu0 %v3172
    %3668 = vmatpush.bf16.msra.mxu0 %v3168
    %3669 = vmatmul.bf16.gmra.mxu0 %v2095
    %v3670 = vpop.f32.mrf.mxu0
    %v3671 = vadd.f32 %v3658, %v3670
    %v3672 = vpop.f32.mrf.mxu0
    %3673 = vdwg.mxu0
    %3674 = vmatpush.bf16.msra.mxu0 %v3228
    %3675 = vmatpush.bf16.msra.mxu0 %v3224
    %3676 = vmatpush.bf16.msra.mxu0 %v3220
    %3677 = vmatpush.bf16.msra.mxu0 %v3216
    %3678 = vmatpush.bf16.msra.mxu0 %v3212
    %3679 = vmatpush.bf16.msra.mxu0 %v3208
    %3680 = vmatpush.bf16.msra.mxu0 %v3204
    %3681 = vmatpush.bf16.msra.mxu0 %v3200
    %3682 = vmatmul.bf16.gmra.mxu0 %v2096
    %v3683 = vpop.f32.mrf.mxu0
    %v3684 = vadd.f32 %v3671, %v3683
    %v3685 = vpop.f32.mrf.mxu0
    %3686 = vdwg.mxu0
    %3687 = vmatpush.bf16.msra.mxu0 %v3260
    %3688 = vmatpush.bf16.msra.mxu0 %v3256
    %3689 = vmatpush.bf16.msra.mxu0 %v3252
    %3690 = vmatpush.bf16.msra.mxu0 %v3248
    %3691 = vmatpush.bf16.msra.mxu0 %v3244
    %3692 = vmatpush.bf16.msra.mxu0 %v3240
    %3693 = vmatpush.bf16.msra.mxu0 %v3236
    %3694 = vmatpush.bf16.msra.mxu0 %v3232
    %3695 = vmatmul.bf16.gmra.mxu0 %v2097
    %v3696 = vpop.f32.mrf.mxu0
    %v3697 = vadd.f32 %v3684, %v3696
    %v3698 = vpop.f32.mrf.mxu0
    %3699 = vdwg.mxu0
    %3700 = vmatpush.bf16.msra.mxu0 %v3292
    %3701 = vmatpush.bf16.msra.mxu0 %v3288
    %3702 = vmatpush.bf16.msra.mxu0 %v3284
    %3703 = vmatpush.bf16.msra.mxu0 %v3280
    %3704 = vmatpush.bf16.msra.mxu0 %v3276
    %3705 = vmatpush.bf16.msra.mxu0 %v3272
    %3706 = vmatpush.bf16.msra.mxu0 %v3268
    %3707 = vmatpush.bf16.msra.mxu0 %v3264
    %3708 = vmatmul.bf16.gmra.mxu0 %v2098
    %v3709 = vpop.f32.mrf.mxu0
    %v3710 = vadd.f32 %v3697, %v3709
    %v3711 = vpop.f32.mrf.mxu0
    %3712 = vdwg.mxu0
    %3713 = vmatpush.bf16.msra.mxu0 %v3324
    %3714 = vmatpush.bf16.msra.mxu0 %v3320
    %3715 = vmatpush.bf16.msra.mxu0 %v3316
    %3716 = vmatpush.bf16.msra.mxu0 %v3312
    %3717 = vmatpush.bf16.msra.mxu0 %v3308
    %3718 = vmatpush.bf16.msra.mxu0 %v3304
    %3719 = vmatpush.bf16.msra.mxu0 %v3300
    %3720 = vmatpush.bf16.msra.mxu0 %v3296
    %3721 = vmatmul.bf16.gmra.mxu0 %v2099
    %v3722 = vpop.f32.mrf.mxu0
    %v3723 = vadd.f32 %v3710, %v3722
    %v3724 = vpop.f32.mrf.mxu0
    %3725 = vdwg.mxu0
    %3726 = vmatpush.bf16.msra.mxu0 %v3356
    %3727 = vmatpush.bf16.msra.mxu0 %v3352
    %3728 = vmatpush.bf16.msra.mxu0 %v3348
    %3729 = vmatpush.bf16.msra.mxu0 %v3344
    %3730 = vmatpush.bf16.msra.mxu0 %v3340
    %3731 = vmatpush.bf16.msra.mxu0 %v3336
    %3732 = vmatpush.bf16.msra.mxu0 %v3332
    %3733 = vmatpush.bf16.msra.mxu0 %v3328
    %3734 = vmatmul.bf16.gmra.mxu0 %v2100
    %v3735 = vpop.f32.mrf.mxu0
    %v3736 = vadd.f32 %v3723, %v3735
    %v3737 = vpop.f32.mrf.mxu0
    %3738 = vdwg.mxu0
    %3739 = vmatpush.bf16.msra.mxu0 %v3388
    %3740 = vmatpush.bf16.msra.mxu0 %v3384
    %3741 = vmatpush.bf16.msra.mxu0 %v3380
    %3742 = vmatpush.bf16.msra.mxu0 %v3376
    %3743 = vmatpush.bf16.msra.mxu0 %v3372
    %3744 = vmatpush.bf16.msra.mxu0 %v3368
    %3745 = vmatpush.bf16.msra.mxu0 %v3364
    %3746 = vmatpush.bf16.msra.mxu0 %v3360
    %3747 = vmatmul.bf16.gmra.mxu0 %v2101
    %v3748 = vpop.f32.mrf.mxu0
    %v3749 = vadd.f32 %v3736, %v3748
    %v3750 = vpop.f32.mrf.mxu0
    %3751 = vdwg.mxu0
    %3752 = vmatpush.bf16.msra.mxu0 %v3165
    %3753 = vmatpush.bf16.msra.mxu0 %v3161
    %3754 = vmatpush.bf16.msra.mxu0 %v3157
    %3755 = vmatpush.bf16.msra.mxu0 %v3153
    %3756 = vmatpush.bf16.msra.mxu0 %v3149
    %3757 = vmatpush.bf16.msra.mxu0 %v3145
    %3758 = vmatpush.bf16.msra.mxu0 %v3141
    %3759 = vmatpush.bf16.msra.mxu0 %v3137
    %3760 = vmatmul.bf16.gmra.mxu0 %v2094
    %v3761 = vpop.f32.mrf.mxu0
    %v3762 = vadd.f32 %v2361, %v3761
    %v3763 = vpop.f32.mrf.mxu0
    %3764 = vdwg.mxu0
    %3765 = vmatpush.bf16.msra.mxu0 %v3197
    %3766 = vmatpush.bf16.msra.mxu0 %v3193
    %3767 = vmatpush.bf16.msra.mxu0 %v3189
    %3768 = vmatpush.bf16.msra.mxu0 %v3185
    %3769 = vmatpush.bf16.msra.mxu0 %v3181
    %3770 = vmatpush.bf16.msra.mxu0 %v3177
    %3771 = vmatpush.bf16.msra.mxu0 %v3173
    %3772 = vmatpush.bf16.msra.mxu0 %v3169
    %3773 = vmatmul.bf16.gmra.mxu0 %v2095
    %v3774 = vpop.f32.mrf.mxu0
    %v3775 = vadd.f32 %v3762, %v3774
    %v3776 = vpop.f32.mrf.mxu0
    %3777 = vdwg.mxu0
    %3778 = vmatpush.bf16.msra.mxu0 %v3229
    %3779 = vmatpush.bf16.msra.mxu0 %v3225
    %3780 = vmatpush.bf16.msra.mxu0 %v3221
    %3781 = vmatpush.bf16.msra.mxu0 %v3217
    %3782 = vmatpush.bf16.msra.mxu0 %v3213
    %3783 = vmatpush.bf16.msra.mxu0 %v3209
    %3784 = vmatpush.bf16.msra.mxu0 %v3205
    %3785 = vmatpush.bf16.msra.mxu0 %v3201
    %3786 = vmatmul.bf16.gmra.mxu0 %v2096
    %v3787 = vpop.f32.mrf.mxu0
    %v3788 = vadd.f32 %v3775, %v3787
    %v3789 = vpop.f32.mrf.mxu0
    %3790 = vdwg.mxu0
    %3791 = vmatpush.bf16.msra.mxu0 %v3261
    %3792 = vmatpush.bf16.msra.mxu0 %v3257
    %3793 = vmatpush.bf16.msra.mxu0 %v3253
    %3794 = vmatpush.bf16.msra.mxu0 %v3249
    %3795 = vmatpush.bf16.msra.mxu0 %v3245
    %3796 = vmatpush.bf16.msra.mxu0 %v3241
    %3797 = vmatpush.bf16.msra.mxu0 %v3237
    %3798 = vmatpush.bf16.msra.mxu0 %v3233
    %3799 = vmatmul.bf16.gmra.mxu0 %v2097
    %v3800 = vpop.f32.mrf.mxu0
    %v3801 = vadd.f32 %v3788, %v3800
    %v3802 = vpop.f32.mrf.mxu0
    %3803 = vdwg.mxu0
    %3804 = vmatpush.bf16.msra.mxu0 %v3293
    %3805 = vmatpush.bf16.msra.mxu0 %v3289
    %3806 = vmatpush.bf16.msra.mxu0 %v3285
    %3807 = vmatpush.bf16.msra.mxu0 %v3281
    %3808 = vmatpush.bf16.msra.mxu0 %v3277
    %3809 = vmatpush.bf16.msra.mxu0 %v3273
    %3810 = vmatpush.bf16.msra.mxu0 %v3269
    %3811 = vmatpush.bf16.msra.mxu0 %v3265
    %3812 = vmatmul.bf16.gmra.mxu0 %v2098
    %v3813 = vpop.f32.mrf.mxu0
    %v3814 = vadd.f32 %v3801, %v3813
    %v3815 = vpop.f32.mrf.mxu0
    %3816 = vdwg.mxu0
    %3817 = vmatpush.bf16.msra.mxu0 %v3325
    %3818 = vmatpush.bf16.msra.mxu0 %v3321
    %3819 = vmatpush.bf16.msra.mxu0 %v3317
    %3820 = vmatpush.bf16.msra.mxu0 %v3313
    %3821 = vmatpush.bf16.msra.mxu0 %v3309
    %3822 = vmatpush.bf16.msra.mxu0 %v3305
    %3823 = vmatpush.bf16.msra.mxu0 %v3301
    %3824 = vmatpush.bf16.msra.mxu0 %v3297
    %3825 = vmatmul.bf16.gmra.mxu0 %v2099
    %v3826 = vpop.f32.mrf.mxu0
    %v3827 = vadd.f32 %v3814, %v3826
    %v3828 = vpop.f32.mrf.mxu0
    %3829 = vdwg.mxu0
    %3830 = vmatpush.bf16.msra.mxu0 %v3357
    %3831 = vmatpush.bf16.msra.mxu0 %v3353
    %3832 = vmatpush.bf16.msra.mxu0 %v3349
    %3833 = vmatpush.bf16.msra.mxu0 %v3345
    %3834 = vmatpush.bf16.msra.mxu0 %v3341
    %3835 = vmatpush.bf16.msra.mxu0 %v3337
    %3836 = vmatpush.bf16.msra.mxu0 %v3333
    %3837 = vmatpush.bf16.msra.mxu0 %v3329
    %3838 = vmatmul.bf16.gmra.mxu0 %v2100
    %v3839 = vpop.f32.mrf.mxu0
    %v3840 = vadd.f32 %v3827, %v3839
    %v3841 = vpop.f32.mrf.mxu0
    %3842 = vdwg.mxu0
    %3843 = vmatpush.bf16.msra.mxu0 %v3389
    %3844 = vmatpush.bf16.msra.mxu0 %v3385
    %3845 = vmatpush.bf16.msra.mxu0 %v3381
    %3846 = vmatpush.bf16.msra.mxu0 %v3377
    %3847 = vmatpush.bf16.msra.mxu0 %v3373
    %3848 = vmatpush.bf16.msra.mxu0 %v3369
    %3849 = vmatpush.bf16.msra.mxu0 %v3365
    %3850 = vmatpush.bf16.msra.mxu0 %v3361
    %3851 = vmatmul.bf16.gmra.mxu0 %v2101
    %v3852 = vpop.f32.mrf.mxu0
    %v3853 = vadd.f32 %v3840, %v3852
    %v3854 = vpop.f32.mrf.mxu0
    %3855 = vdwg.mxu0
    %3856 = vmatpush.bf16.msra.mxu0 %v3166
    %3857 = vmatpush.bf16.msra.mxu0 %v3162
    %3858 = vmatpush.bf16.msra.mxu0 %v3158
    %3859 = vmatpush.bf16.msra.mxu0 %v3154
    %3860 = vmatpush.bf16.msra.mxu0 %v3150
    %3861 = vmatpush.bf16.msra.mxu0 %v3146
    %3862 = vmatpush.bf16.msra.mxu0 %v3142
    %3863 = vmatpush.bf16.msra.mxu0 %v3138
    %3864 = vmatmul.bf16.gmra.mxu0 %v2094
    %v3865 = vpop.f32.mrf.mxu0
    %v3866 = vadd.f32 %v2362, %v3865
    %v3867 = vpop.f32.mrf.mxu0
    %3868 = vdwg.mxu0
    %3869 = vmatpush.bf16.msra.mxu0 %v3198
    %3870 = vmatpush.bf16.msra.mxu0 %v3194
    %3871 = vmatpush.bf16.msra.mxu0 %v3190
    %3872 = vmatpush.bf16.msra.mxu0 %v3186
    %3873 = vmatpush.bf16.msra.mxu0 %v3182
    %3874 = vmatpush.bf16.msra.mxu0 %v3178
    %3875 = vmatpush.bf16.msra.mxu0 %v3174
    %3876 = vmatpush.bf16.msra.mxu0 %v3170
    %3877 = vmatmul.bf16.gmra.mxu0 %v2095
    %v3878 = vpop.f32.mrf.mxu0
    %v3879 = vadd.f32 %v3866, %v3878
    %v3880 = vpop.f32.mrf.mxu0
    %3881 = vdwg.mxu0
    %3882 = vmatpush.bf16.msra.mxu0 %v3230
    %3883 = vmatpush.bf16.msra.mxu0 %v3226
    %3884 = vmatpush.bf16.msra.mxu0 %v3222
    %3885 = vmatpush.bf16.msra.mxu0 %v3218
    %3886 = vmatpush.bf16.msra.mxu0 %v3214
    %3887 = vmatpush.bf16.msra.mxu0 %v3210
    %3888 = vmatpush.bf16.msra.mxu0 %v3206
    %3889 = vmatpush.bf16.msra.mxu0 %v3202
    %3890 = vmatmul.bf16.gmra.mxu0 %v2096
    %v3891 = vpop.f32.mrf.mxu0
    %v3892 = vadd.f32 %v3879, %v3891
    %v3893 = vpop.f32.mrf.mxu0
    %3894 = vdwg.mxu0
    %3895 = vmatpush.bf16.msra.mxu0 %v3262
    %3896 = vmatpush.bf16.msra.mxu0 %v3258
    %3897 = vmatpush.bf16.msra.mxu0 %v3254
    %3898 = vmatpush.bf16.msra.mxu0 %v3250
    %3899 = vmatpush.bf16.msra.mxu0 %v3246
    %3900 = vmatpush.bf16.msra.mxu0 %v3242
    %3901 = vmatpush.bf16.msra.mxu0 %v3238
    %3902 = vmatpush.bf16.msra.mxu0 %v3234
    %3903 = vmatmul.bf16.gmra.mxu0 %v2097
    %v3904 = vpop.f32.mrf.mxu0
    %v3905 = vadd.f32 %v3892, %v3904
    %v3906 = vpop.f32.mrf.mxu0
    %3907 = vdwg.mxu0
    %3908 = vmatpush.bf16.msra.mxu0 %v3294
    %3909 = vmatpush.bf16.msra.mxu0 %v3290
    %3910 = vmatpush.bf16.msra.mxu0 %v3286
    %3911 = vmatpush.bf16.msra.mxu0 %v3282
    %3912 = vmatpush.bf16.msra.mxu0 %v3278
    %3913 = vmatpush.bf16.msra.mxu0 %v3274
    %3914 = vmatpush.bf16.msra.mxu0 %v3270
    %3915 = vmatpush.bf16.msra.mxu0 %v3266
    %3916 = vmatmul.bf16.gmra.mxu0 %v2098
    %v3917 = vpop.f32.mrf.mxu0
    %v3918 = vadd.f32 %v3905, %v3917
    %v3919 = vpop.f32.mrf.mxu0
    %3920 = vdwg.mxu0
    %3921 = vmatpush.bf16.msra.mxu0 %v3326
    %3922 = vmatpush.bf16.msra.mxu0 %v3322
    %3923 = vmatpush.bf16.msra.mxu0 %v3318
    %3924 = vmatpush.bf16.msra.mxu0 %v3314
    %3925 = vmatpush.bf16.msra.mxu0 %v3310
    %3926 = vmatpush.bf16.msra.mxu0 %v3306
    %3927 = vmatpush.bf16.msra.mxu0 %v3302
    %3928 = vmatpush.bf16.msra.mxu0 %v3298
    %3929 = vmatmul.bf16.gmra.mxu0 %v2099
    %v3930 = vpop.f32.mrf.mxu0
    %v3931 = vadd.f32 %v3918, %v3930
    %v3932 = vpop.f32.mrf.mxu0
    %3933 = vdwg.mxu0
    %3934 = vmatpush.bf16.msra.mxu0 %v3358
    %3935 = vmatpush.bf16.msra.mxu0 %v3354
    %3936 = vmatpush.bf16.msra.mxu0 %v3350
    %3937 = vmatpush.bf16.msra.mxu0 %v3346
    %3938 = vmatpush.bf16.msra.mxu0 %v3342
    %3939 = vmatpush.bf16.msra.mxu0 %v3338
    %3940 = vmatpush.bf16.msra.mxu0 %v3334
    %3941 = vmatpush.bf16.msra.mxu0 %v3330
    %3942 = vmatmul.bf16.gmra.mxu0 %v2100
    %v3943 = vpop.f32.mrf.mxu0
    %v3944 = vadd.f32 %v3931, %v3943
    %v3945 = vpop.f32.mrf.mxu0
    %3946 = vdwg.mxu0
    %3947 = vmatpush.bf16.msra.mxu0 %v3390
    %3948 = vmatpush.bf16.msra.mxu0 %v3386
    %3949 = vmatpush.bf16.msra.mxu0 %v3382
    %3950 = vmatpush.bf16.msra.mxu0 %v3378
    %3951 = vmatpush.bf16.msra.mxu0 %v3374
    %3952 = vmatpush.bf16.msra.mxu0 %v3370
    %3953 = vmatpush.bf16.msra.mxu0 %v3366
    %3954 = vmatpush.bf16.msra.mxu0 %v3362
    %3955 = vmatmul.bf16.gmra.mxu0 %v2101
    %v3956 = vpop.f32.mrf.mxu0
    %v3957 = vadd.f32 %v3944, %v3956
    %v3958 = vpop.f32.mrf.mxu0
    %3959 = vdwg.mxu0
    %3960 = vmatpush.bf16.msra.mxu0 %v3167
    %3961 = vmatpush.bf16.msra.mxu0 %v3163
    %3962 = vmatpush.bf16.msra.mxu0 %v3159
    %3963 = vmatpush.bf16.msra.mxu0 %v3155
    %3964 = vmatpush.bf16.msra.mxu0 %v3151
    %3965 = vmatpush.bf16.msra.mxu0 %v3147
    %3966 = vmatpush.bf16.msra.mxu0 %v3143
    %3967 = vmatpush.bf16.msra.mxu0 %v3139
    %3968 = vmatmul.bf16.gmra.mxu0 %v2094
    %v3969 = vpop.f32.mrf.mxu0
    %v3970 = vadd.f32 %v2363, %v3969
    %v3971 = vpop.f32.mrf.mxu0
    %3972 = vdwg.mxu0
    %3973 = vmatpush.bf16.msra.mxu0 %v3199
    %3974 = vmatpush.bf16.msra.mxu0 %v3195
    %3975 = vmatpush.bf16.msra.mxu0 %v3191
    %3976 = vmatpush.bf16.msra.mxu0 %v3187
    %3977 = vmatpush.bf16.msra.mxu0 %v3183
    %3978 = vmatpush.bf16.msra.mxu0 %v3179
    %3979 = vmatpush.bf16.msra.mxu0 %v3175
    %3980 = vmatpush.bf16.msra.mxu0 %v3171
    %3981 = vmatmul.bf16.gmra.mxu0 %v2095
    %v3982 = vpop.f32.mrf.mxu0
    %v3983 = vadd.f32 %v3970, %v3982
    %v3984 = vpop.f32.mrf.mxu0
    %3985 = vdwg.mxu0
    %3986 = vmatpush.bf16.msra.mxu0 %v3231
    %3987 = vmatpush.bf16.msra.mxu0 %v3227
    %3988 = vmatpush.bf16.msra.mxu0 %v3223
    %3989 = vmatpush.bf16.msra.mxu0 %v3219
    %3990 = vmatpush.bf16.msra.mxu0 %v3215
    %3991 = vmatpush.bf16.msra.mxu0 %v3211
    %3992 = vmatpush.bf16.msra.mxu0 %v3207
    %3993 = vmatpush.bf16.msra.mxu0 %v3203
    %3994 = vmatmul.bf16.gmra.mxu0 %v2096
    %v3995 = vpop.f32.mrf.mxu0
    %v3996 = vadd.f32 %v3983, %v3995
    %v3997 = vpop.f32.mrf.mxu0
    %3998 = vdwg.mxu0
    %3999 = vmatpush.bf16.msra.mxu0 %v3263
    %4000 = vmatpush.bf16.msra.mxu0 %v3259
    %4001 = vmatpush.bf16.msra.mxu0 %v3255
    %4002 = vmatpush.bf16.msra.mxu0 %v3251
    %4003 = vmatpush.bf16.msra.mxu0 %v3247
    %4004 = vmatpush.bf16.msra.mxu0 %v3243
    %4005 = vmatpush.bf16.msra.mxu0 %v3239
    %4006 = vmatpush.bf16.msra.mxu0 %v3235
    %4007 = vmatmul.bf16.gmra.mxu0 %v2097
    %v4008 = vpop.f32.mrf.mxu0
    %v4009 = vadd.f32 %v3996, %v4008
    %v4010 = vpop.f32.mrf.mxu0
    %4011 = vdwg.mxu0
    %4012 = vmatpush.bf16.msra.mxu0 %v3295
    %4013 = vmatpush.bf16.msra.mxu0 %v3291
    %4014 = vmatpush.bf16.msra.mxu0 %v3287
    %4015 = vmatpush.bf16.msra.mxu0 %v3283
    %4016 = vmatpush.bf16.msra.mxu0 %v3279
    %4017 = vmatpush.bf16.msra.mxu0 %v3275
    %4018 = vmatpush.bf16.msra.mxu0 %v3271
    %4019 = vmatpush.bf16.msra.mxu0 %v3267
    %4020 = vmatmul.bf16.gmra.mxu0 %v2098
    %v4021 = vpop.f32.mrf.mxu0
    %v4022 = vadd.f32 %v4009, %v4021
    %v4023 = vpop.f32.mrf.mxu0
    %4024 = vdwg.mxu0
    %4025 = vmatpush.bf16.msra.mxu0 %v3327
    %4026 = vmatpush.bf16.msra.mxu0 %v3323
    %4027 = vmatpush.bf16.msra.mxu0 %v3319
    %4028 = vmatpush.bf16.msra.mxu0 %v3315
    %4029 = vmatpush.bf16.msra.mxu0 %v3311
    %4030 = vmatpush.bf16.msra.mxu0 %v3307
    %4031 = vmatpush.bf16.msra.mxu0 %v3303
    %4032 = vmatpush.bf16.msra.mxu0 %v3299
    %4033 = vmatmul.bf16.gmra.mxu0 %v2099
    %v4034 = vpop.f32.mrf.mxu0
    %v4035 = vadd.f32 %v4022, %v4034
    %v4036 = vpop.f32.mrf.mxu0
    %4037 = vdwg.mxu0
    %4038 = vmatpush.bf16.msra.mxu0 %v3359
    %4039 = vmatpush.bf16.msra.mxu0 %v3355
    %4040 = vmatpush.bf16.msra.mxu0 %v3351
    %4041 = vmatpush.bf16.msra.mxu0 %v3347
    %4042 = vmatpush.bf16.msra.mxu0 %v3343
    %4043 = vmatpush.bf16.msra.mxu0 %v3339
    %4044 = vmatpush.bf16.msra.mxu0 %v3335
    %4045 = vmatpush.bf16.msra.mxu0 %v3331
    %4046 = vmatmul.bf16.gmra.mxu0 %v2100
    %v4047 = vpop.f32.mrf.mxu0
    %v4048 = vadd.f32 %v4035, %v4047
    %v4049 = vpop.f32.mrf.mxu0
    %4050 = vdwg.mxu0
    %4051 = vmatpush.bf16.msra.mxu0 %v3391
    %4052 = vmatpush.bf16.msra.mxu0 %v3387
    %4053 = vmatpush.bf16.msra.mxu0 %v3383
    %4054 = vmatpush.bf16.msra.mxu0 %v3379
    %4055 = vmatpush.bf16.msra.mxu0 %v3375
    %4056 = vmatpush.bf16.msra.mxu0 %v3371
    %4057 = vmatpush.bf16.msra.mxu0 %v3367
    %4058 = vmatpush.bf16.msra.mxu0 %v3363
    %4059 = vmatmul.bf16.gmra.mxu0 %v2101
    %v4060 = vpop.f32.mrf.mxu0
    %v4061 = vadd.f32 %v4048, %v4060
    %v4062 = vpop.f32.mrf.mxu0
    %4063 = vdwg.mxu0
    %v4064 = vmax.f32 %v3749, 0.0
    %v4065 = vmax.f32 %v3853, 0.0
    %v4066 = vmax.f32 %v3957, 0.0
    %v4067 = vmax.f32 %v4061, 0.0
    %v4068 = vpack.c.bf16 %v4064, %v4064
    %v4069 = vpack.c.bf16 %v4065, %v4065
    %v4070 = vpack.c.bf16 %v4066, %v4066
    %v4071 = vpack.c.bf16 %v4067, %v4067
    %v4072 = vld [vmem:[#allocation10] sm:$0xff]
    %v4073 = vld [vmem:[#allocation10 + $0x8] sm:$0xff]
    %v4074 = vld [vmem:[#allocation10 + $0x10] sm:$0xff]
    %v4075 = vld [vmem:[#allocation10 + $0x18] sm:$0xff]
    %v4076 = vld [vmem:[#allocation10 + $0x20] sm:$0xff]
    %v4077 = vld [vmem:[#allocation10 + $0x28] sm:$0xff]
    %v4078 = vld [vmem:[#allocation10 + $0x30] sm:$0xff]
    %v4079 = vld [vmem:[#allocation10 + $0x38] sm:$0xff]
    %v4080 = vld [vmem:[#allocation10 + $0x40] sm:$0xff]
    %v4081 = vld [vmem:[#allocation10 + $0x48] sm:$0xff]
    %v4082 = vld [vmem:[#allocation10 + $0x50] sm:$0xff]
    %v4083 = vld [vmem:[#allocation10 + $0x58] sm:$0xff]
    %v4084 = vld [vmem:[#allocation10 + $0x60] sm:$0xff]
    %v4085 = vld [vmem:[#allocation10 + $0x68] sm:$0xff]
    %v4086 = vld [vmem:[#allocation10 + $0x70] sm:$0xff]
    %v4087 = vld [vmem:[#allocation10 + $0x78] sm:$0xff]
    %v4088 = vld [vmem:[#allocation10 + $0x80] sm:$0xff]
    %v4089 = vld [vmem:[#allocation10 + $0x88] sm:$0xff]
    %v4090 = vld [vmem:[#allocation10 + $0x90] sm:$0xff]
    %v4091 = vld [vmem:[#allocation10 + $0x98] sm:$0xff]
    %v4092 = vld [vmem:[#allocation10 + $0xa0] sm:$0xff]
    %v4093 = vld [vmem:[#allocation10 + $0xa8] sm:$0xff]
    %v4094 = vld [vmem:[#allocation10 + $0xb0] sm:$0xff]
    %v4095 = vld [vmem:[#allocation10 + $0xb8] sm:$0xff]
    %v4096 = vld [vmem:[#allocation10 + $0xc0] sm:$0xff]
    %v4097 = vld [vmem:[#allocation10 + $0xc8] sm:$0xff]
    %v4098 = vld [vmem:[#allocation10 + $0xd0] sm:$0xff]
    %v4099 = vld [vmem:[#allocation10 + $0xd8] sm:$0xff]
    %v4100 = vld [vmem:[#allocation10 + $0xe0] sm:$0xff]
    %v4101 = vld [vmem:[#allocation10 + $0xe8] sm:$0xff]
    %v4102 = vld [vmem:[#allocation10 + $0xf0] sm:$0xff]
    %v4103 = vld [vmem:[#allocation10 + $0xf8] sm:$0xff]
    %v4104 = vld [vmem:[#allocation10 + $0x100] sm:$0xff]
    %v4105 = vld [vmem:[#allocation10 + $0x108] sm:$0xff]
    %v4106 = vld [vmem:[#allocation10 + $0x110] sm:$0xff]
    %v4107 = vld [vmem:[#allocation10 + $0x118] sm:$0xff]
    %v4108 = vld [vmem:[#allocation10 + $0x120] sm:$0xff]
    %v4109 = vld [vmem:[#allocation10 + $0x128] sm:$0xff]
    %v4110 = vld [vmem:[#allocation10 + $0x130] sm:$0xff]
    %v4111 = vld [vmem:[#allocation10 + $0x138] sm:$0xff]
    %v4112 = vld [vmem:[#allocation10 + $0x140] sm:$0xff]
    %v4113 = vld [vmem:[#allocation10 + $0x148] sm:$0xff]
    %v4114 = vld [vmem:[#allocation10 + $0x150] sm:$0xff]
    %v4115 = vld [vmem:[#allocation10 + $0x158] sm:$0xff]
    %v4116 = vld [vmem:[#allocation10 + $0x160] sm:$0xff]
    %v4117 = vld [vmem:[#allocation10 + $0x168] sm:$0xff]
    %v4118 = vld [vmem:[#allocation10 + $0x170] sm:$0xff]
    %v4119 = vld [vmem:[#allocation10 + $0x178] sm:$0xff]
    %v4120 = vld [vmem:[#allocation10 + $0x180] sm:$0xff]
    %v4121 = vld [vmem:[#allocation10 + $0x188] sm:$0xff]
    %v4122 = vld [vmem:[#allocation10 + $0x190] sm:$0xff]
    %v4123 = vld [vmem:[#allocation10 + $0x198] sm:$0xff]
    %v4124 = vld [vmem:[#allocation10 + $0x1a0] sm:$0xff]
    %v4125 = vld [vmem:[#allocation10 + $0x1a8] sm:$0xff]
    %v4126 = vld [vmem:[#allocation10 + $0x1b0] sm:$0xff]
    %v4127 = vld [vmem:[#allocation10 + $0x1b8] sm:$0xff]
    %v4128 = vld [vmem:[#allocation10 + $0x1c0] sm:$0xff]
    %v4129 = vld [vmem:[#allocation10 + $0x1c8] sm:$0xff]
    %v4130 = vld [vmem:[#allocation10 + $0x1d0] sm:$0xff]
    %v4131 = vld [vmem:[#allocation10 + $0x1d8] sm:$0xff]
    %v4132 = vld [vmem:[#allocation10 + $0x1e0] sm:$0xff]
    %v4133 = vld [vmem:[#allocation10 + $0x1e8] sm:$0xff]
    %v4134 = vld [vmem:[#allocation10 + $0x1f0] sm:$0xff]
    %v4135 = vld [vmem:[#allocation10 + $0x1f8] sm:$0xff]
    %v4136 = vld [vmem:[%s6] sm:$0x3]
    %v4138 = vperm.slane %v4136, 0
    %v4139 = vperm.slane %v4136, 1
    %v4206 = vunpack.c.l.b16 %v4072
    %v4207 = vunpack.c.h.b16 %v4072
    %v4208 = vunpack.c.l.b16 %v4073
    %v4209 = vunpack.c.h.b16 %v4073
    %v4210 = vunpack.c.l.b16 %v4074
    %v4211 = vunpack.c.h.b16 %v4074
    %v4212 = vunpack.c.l.b16 %v4075
    %v4213 = vunpack.c.h.b16 %v4075
    %v4214 = vunpack.c.l.b16 %v4076
    %v4215 = vunpack.c.h.b16 %v4076
    %v4216 = vunpack.c.l.b16 %v4077
    %v4217 = vunpack.c.h.b16 %v4077
    %v4218 = vunpack.c.l.b16 %v4078
    %v4219 = vunpack.c.h.b16 %v4078
    %v4220 = vunpack.c.l.b16 %v4079
    %v4221 = vunpack.c.h.b16 %v4079
    %v4222 = vunpack.c.l.b16 %v4080
    %v4223 = vunpack.c.h.b16 %v4080
    %v4224 = vunpack.c.l.b16 %v4081
    %v4225 = vunpack.c.h.b16 %v4081
    %v4226 = vunpack.c.l.b16 %v4082
    %v4227 = vunpack.c.h.b16 %v4082
    %v4228 = vunpack.c.l.b16 %v4083
    %v4229 = vunpack.c.h.b16 %v4083
    %v4230 = vunpack.c.l.b16 %v4084
    %v4231 = vunpack.c.h.b16 %v4084
    %v4232 = vunpack.c.l.b16 %v4085
    %v4233 = vunpack.c.h.b16 %v4085
    %v4234 = vunpack.c.l.b16 %v4086
    %v4235 = vunpack.c.h.b16 %v4086
    %v4236 = vunpack.c.l.b16 %v4087
    %v4237 = vunpack.c.h.b16 %v4087
    %v4238 = vunpack.c.l.b16 %v4088
    %v4239 = vunpack.c.h.b16 %v4088
    %v4240 = vunpack.c.l.b16 %v4089
    %v4241 = vunpack.c.h.b16 %v4089
    %v4242 = vunpack.c.l.b16 %v4090
    %v4243 = vunpack.c.h.b16 %v4090
    %v4244 = vunpack.c.l.b16 %v4091
    %v4245 = vunpack.c.h.b16 %v4091
    %v4246 = vunpack.c.l.b16 %v4092
    %v4247 = vunpack.c.h.b16 %v4092
    %v4248 = vunpack.c.l.b16 %v4093
    %v4249 = vunpack.c.h.b16 %v4093
    %v4250 = vunpack.c.l.b16 %v4094
    %v4251 = vunpack.c.h.b16 %v4094
    %v4252 = vunpack.c.l.b16 %v4095
    %v4253 = vunpack.c.h.b16 %v4095
    %v4254 = vunpack.c.l.b16 %v4096
    %v4255 = vunpack.c.h.b16 %v4096
    %v4256 = vunpack.c.l.b16 %v4097
    %v4257 = vunpack.c.h.b16 %v4097
    %v4258 = vunpack.c.l.b16 %v4098
    %v4259 = vunpack.c.h.b16 %v4098
    %v4260 = vunpack.c.l.b16 %v4099
    %v4261 = vunpack.c.h.b16 %v4099
    %v4262 = vunpack.c.l.b16 %v4100
    %v4263 = vunpack.c.h.b16 %v4100
    %v4264 = vunpack.c.l.b16 %v4101
    %v4265 = vunpack.c.h.b16 %v4101
    %v4266 = vunpack.c.l.b16 %v4102
    %v4267 = vunpack.c.h.b16 %v4102
    %v4268 = vunpack.c.l.b16 %v4103
    %v4269 = vunpack.c.h.b16 %v4103
    %v4270 = vunpack.c.l.b16 %v4104
    %v4271 = vunpack.c.h.b16 %v4104
    %v4272 = vunpack.c.l.b16 %v4105
    %v4273 = vunpack.c.h.b16 %v4105
    %v4274 = vunpack.c.l.b16 %v4106
    %v4275 = vunpack.c.h.b16 %v4106
    %v4276 = vunpack.c.l.b16 %v4107
    %v4277 = vunpack.c.h.b16 %v4107
    %v4278 = vunpack.c.l.b16 %v4108
    %v4279 = vunpack.c.h.b16 %v4108
    %v4280 = vunpack.c.l.b16 %v4109
    %v4281 = vunpack.c.h.b16 %v4109
    %v4282 = vunpack.c.l.b16 %v4110
    %v4283 = vunpack.c.h.b16 %v4110
    %v4284 = vunpack.c.l.b16 %v4111
    %v4285 = vunpack.c.h.b16 %v4111
    %v4286 = vunpack.c.l.b16 %v4112
    %v4287 = vunpack.c.h.b16 %v4112
    %v4288 = vunpack.c.l.b16 %v4113
    %v4289 = vunpack.c.h.b16 %v4113
    %v4290 = vunpack.c.l.b16 %v4114
    %v4291 = vunpack.c.h.b16 %v4114
    %v4292 = vunpack.c.l.b16 %v4115
    %v4293 = vunpack.c.h.b16 %v4115
    %v4294 = vunpack.c.l.b16 %v4116
    %v4295 = vunpack.c.h.b16 %v4116
    %v4296 = vunpack.c.l.b16 %v4117
    %v4297 = vunpack.c.h.b16 %v4117
    %v4298 = vunpack.c.l.b16 %v4118
    %v4299 = vunpack.c.h.b16 %v4118
    %v4300 = vunpack.c.l.b16 %v4119
    %v4301 = vunpack.c.h.b16 %v4119
    %v4302 = vunpack.c.l.b16 %v4120
    %v4303 = vunpack.c.h.b16 %v4120
    %v4304 = vunpack.c.l.b16 %v4121
    %v4305 = vunpack.c.h.b16 %v4121
    %v4306 = vunpack.c.l.b16 %v4122
    %v4307 = vunpack.c.h.b16 %v4122
    %v4308 = vunpack.c.l.b16 %v4123
    %v4309 = vunpack.c.h.b16 %v4123
    %v4310 = vunpack.c.l.b16 %v4124
    %v4311 = vunpack.c.h.b16 %v4124
    %v4312 = vunpack.c.l.b16 %v4125
    %v4313 = vunpack.c.h.b16 %v4125
    %v4314 = vunpack.c.l.b16 %v4126
    %v4315 = vunpack.c.h.b16 %v4126
    %v4316 = vunpack.c.l.b16 %v4127
    %v4317 = vunpack.c.h.b16 %v4127
    %v4318 = vunpack.c.l.b16 %v4128
    %v4319 = vunpack.c.h.b16 %v4128
    %v4320 = vunpack.c.l.b16 %v4129
    %v4321 = vunpack.c.h.b16 %v4129
    %v4322 = vunpack.c.l.b16 %v4130
    %v4323 = vunpack.c.h.b16 %v4130
    %v4324 = vunpack.c.l.b16 %v4131
    %v4325 = vunpack.c.h.b16 %v4131
    %v4326 = vunpack.c.l.b16 %v4132
    %v4327 = vunpack.c.h.b16 %v4132
    %v4328 = vunpack.c.l.b16 %v4133
    %v4329 = vunpack.c.h.b16 %v4133
    %v4330 = vunpack.c.l.b16 %v4134
    %v4331 = vunpack.c.h.b16 %v4134
    %v4332 = vunpack.c.l.b16 %v4135
    %v4333 = vunpack.c.h.b16 %v4135
    %v4334 = vpack.c.b16 %v4208, %v4206
    %v4335 = vpack.c.b16 %v4209, %v4207
    %v4336 = vpack.c.b16 %v4212, %v4210
    %v4337 = vpack.c.b16 %v4213, %v4211
    %v4338 = vpack.c.b16 %v4216, %v4214
    %v4339 = vpack.c.b16 %v4217, %v4215
    %v4340 = vpack.c.b16 %v4220, %v4218
    %v4341 = vpack.c.b16 %v4221, %v4219
    %v4342 = vpack.c.b16 %v4224, %v4222
    %v4343 = vpack.c.b16 %v4225, %v4223
    %v4344 = vpack.c.b16 %v4228, %v4226
    %v4345 = vpack.c.b16 %v4229, %v4227
    %v4346 = vpack.c.b16 %v4232, %v4230
    %v4347 = vpack.c.b16 %v4233, %v4231
    %v4348 = vpack.c.b16 %v4236, %v4234
    %v4349 = vpack.c.b16 %v4237, %v4235
    %v4350 = vpack.c.b16 %v4240, %v4238
    %v4351 = vpack.c.b16 %v4241, %v4239
    %v4352 = vpack.c.b16 %v4244, %v4242
    %v4353 = vpack.c.b16 %v4245, %v4243
    %v4354 = vpack.c.b16 %v4248, %v4246
    %v4355 = vpack.c.b16 %v4249, %v4247
    %v4356 = vpack.c.b16 %v4252, %v4250
    %v4357 = vpack.c.b16 %v4253, %v4251
    %v4358 = vpack.c.b16 %v4256, %v4254
    %v4359 = vpack.c.b16 %v4257, %v4255
    %v4360 = vpack.c.b16 %v4260, %v4258
    %v4361 = vpack.c.b16 %v4261, %v4259
    %v4362 = vpack.c.b16 %v4264, %v4262
    %v4363 = vpack.c.b16 %v4265, %v4263
    %v4364 = vpack.c.b16 %v4268, %v4266
    %v4365 = vpack.c.b16 %v4269, %v4267
    %v4366 = vpack.c.b16 %v4272, %v4270
    %v4367 = vpack.c.b16 %v4273, %v4271
    %v4368 = vpack.c.b16 %v4276, %v4274
    %v4369 = vpack.c.b16 %v4277, %v4275
    %v4370 = vpack.c.b16 %v4280, %v4278
    %v4371 = vpack.c.b16 %v4281, %v4279
    %v4372 = vpack.c.b16 %v4284, %v4282
    %v4373 = vpack.c.b16 %v4285, %v4283
    %v4374 = vpack.c.b16 %v4288, %v4286
    %v4375 = vpack.c.b16 %v4289, %v4287
    %v4376 = vpack.c.b16 %v4292, %v4290
    %v4377 = vpack.c.b16 %v4293, %v4291
    %v4378 = vpack.c.b16 %v4296, %v4294
    %v4379 = vpack.c.b16 %v4297, %v4295
    %v4380 = vpack.c.b16 %v4300, %v4298
    %v4381 = vpack.c.b16 %v4301, %v4299
    %v4382 = vpack.c.b16 %v4304, %v4302
    %v4383 = vpack.c.b16 %v4305, %v4303
    %v4384 = vpack.c.b16 %v4308, %v4306
    %v4385 = vpack.c.b16 %v4309, %v4307
    %v4386 = vpack.c.b16 %v4312, %v4310
    %v4387 = vpack.c.b16 %v4313, %v4311
    %v4388 = vpack.c.b16 %v4316, %v4314
    %v4389 = vpack.c.b16 %v4317, %v4315
    %v4390 = vpack.c.b16 %v4320, %v4318
    %v4391 = vpack.c.b16 %v4321, %v4319
    %v4392 = vpack.c.b16 %v4324, %v4322
    %v4393 = vpack.c.b16 %v4325, %v4323
    %v4394 = vpack.c.b16 %v4328, %v4326
    %v4395 = vpack.c.b16 %v4329, %v4327
    %v4396 = vpack.c.b16 %v4332, %v4330
    %v4397 = vpack.c.b16 %v4333, %v4331
    %4462 = vmatpush.bf16.msra.mxu0 %v4348
    %4463 = vmatpush.bf16.msra.mxu0 %v4346
    %4464 = vmatpush.bf16.msra.mxu0 %v4344
    %4465 = vmatpush.bf16.msra.mxu0 %v4342
    %4466 = vmatpush.bf16.msra.mxu0 %v4340
    %4467 = vmatpush.bf16.msra.mxu0 %v4338
    %4468 = vmatpush.bf16.msra.mxu0 %v4336
    %4469 = vmatpush.bf16.msra.mxu0 %v4334
    %4470 = vmatmul.bf16.gmra.mxu0 %v4068
    %v4471 = vpop.f32.mrf.mxu0
    %v4472 = vadd.f32 %v4138, %v4471
    %v4473 = vpop.f32.mrf.mxu0
    %4474 = vdwg.mxu0
    %4475 = vmatpush.bf16.msra.mxu0 %v4364
    %4476 = vmatpush.bf16.msra.mxu0 %v4362
    %4477 = vmatpush.bf16.msra.mxu0 %v4360
    %4478 = vmatpush.bf16.msra.mxu0 %v4358
    %4479 = vmatpush.bf16.msra.mxu0 %v4356
    %4480 = vmatpush.bf16.msra.mxu0 %v4354
    %4481 = vmatpush.bf16.msra.mxu0 %v4352
    %4482 = vmatpush.bf16.msra.mxu0 %v4350
    %4483 = vmatmul.bf16.gmra.mxu0 %v4069
    %v4484 = vpop.f32.mrf.mxu0
    %v4485 = vadd.f32 %v4472, %v4484
    %v4486 = vpop.f32.mrf.mxu0
    %4487 = vdwg.mxu0
    %4488 = vmatpush.bf16.msra.mxu0 %v4380
    %4489 = vmatpush.bf16.msra.mxu0 %v4378
    %4490 = vmatpush.bf16.msra.mxu0 %v4376
    %4491 = vmatpush.bf16.msra.mxu0 %v4374
    %4492 = vmatpush.bf16.msra.mxu0 %v4372
    %4493 = vmatpush.bf16.msra.mxu0 %v4370
    %4494 = vmatpush.bf16.msra.mxu0 %v4368
    %4495 = vmatpush.bf16.msra.mxu0 %v4366
    %4496 = vmatmul.bf16.gmra.mxu0 %v4070
    %v4497 = vpop.f32.mrf.mxu0
    %v4498 = vadd.f32 %v4485, %v4497
    %v4499 = vpop.f32.mrf.mxu0
    %4500 = vdwg.mxu0
    %4501 = vmatpush.bf16.msra.mxu0 %v4396
    %4502 = vmatpush.bf16.msra.mxu0 %v4394
    %4503 = vmatpush.bf16.msra.mxu0 %v4392
    %4504 = vmatpush.bf16.msra.mxu0 %v4390
    %4505 = vmatpush.bf16.msra.mxu0 %v4388
    %4506 = vmatpush.bf16.msra.mxu0 %v4386
    %4507 = vmatpush.bf16.msra.mxu0 %v4384
    %4508 = vmatpush.bf16.msra.mxu0 %v4382
    %4509 = vmatmul.bf16.gmra.mxu0 %v4071
    %v4510 = vpop.f32.mrf.mxu0
    %v4511 = vadd.f32 %v4498, %v4510
    %v4512 = vpop.f32.mrf.mxu0
    %4513 = vdwg.mxu0
    %4514 = vmatpush.bf16.msra.mxu0 %v4349
    %4515 = vmatpush.bf16.msra.mxu0 %v4347
    %4516 = vmatpush.bf16.msra.mxu0 %v4345
    %4517 = vmatpush.bf16.msra.mxu0 %v4343
    %4518 = vmatpush.bf16.msra.mxu0 %v4341
    %4519 = vmatpush.bf16.msra.mxu0 %v4339
    %4520 = vmatpush.bf16.msra.mxu0 %v4337
    %4521 = vmatpush.bf16.msra.mxu0 %v4335
    %4522 = vmatmul.bf16.gmra.mxu0 %v4068
    %v4523 = vpop.f32.mrf.mxu0
    %v4524 = vadd.f32 %v4139, %v4523
    %v4525 = vpop.f32.mrf.mxu0
    %4526 = vdwg.mxu0
    %4527 = vmatpush.bf16.msra.mxu0 %v4365
    %4528 = vmatpush.bf16.msra.mxu0 %v4363
    %4529 = vmatpush.bf16.msra.mxu0 %v4361
    %4530 = vmatpush.bf16.msra.mxu0 %v4359
    %4531 = vmatpush.bf16.msra.mxu0 %v4357
    %4532 = vmatpush.bf16.msra.mxu0 %v4355
    %4533 = vmatpush.bf16.msra.mxu0 %v4353
    %4534 = vmatpush.bf16.msra.mxu0 %v4351
    %4535 = vmatmul.bf16.gmra.mxu0 %v4069
    %v4536 = vpop.f32.mrf.mxu0
    %v4537 = vadd.f32 %v4524, %v4536
    %v4538 = vpop.f32.mrf.mxu0
    %4539 = vdwg.mxu0
    %4540 = vmatpush.bf16.msra.mxu0 %v4381
    %4541 = vmatpush.bf16.msra.mxu0 %v4379
    %4542 = vmatpush.bf16.msra.mxu0 %v4377
    %4543 = vmatpush.bf16.msra.mxu0 %v4375
    %4544 = vmatpush.bf16.msra.mxu0 %v4373
    %4545 = vmatpush.bf16.msra.mxu0 %v4371
    %4546 = vmatpush.bf16.msra.mxu0 %v4369
    %4547 = vmatpush.bf16.msra.mxu0 %v4367
    %4548 = vmatmul.bf16.gmra.mxu0 %v4070
    %v4549 = vpop.f32.mrf.mxu0
    %v4550 = vadd.f32 %v4537, %v4549
    %v4551 = vpop.f32.mrf.mxu0
    %4552 = vdwg.mxu0
    %4553 = vmatpush.bf16.msra.mxu0 %v4397
    %4554 = vmatpush.bf16.msra.mxu0 %v4395
    %4555 = vmatpush.bf16.msra.mxu0 %v4393
    %4556 = vmatpush.bf16.msra.mxu0 %v4391
    %4557 = vmatpush.bf16.msra.mxu0 %v4389
    %4558 = vmatpush.bf16.msra.mxu0 %v4387
    %4559 = vmatpush.bf16.msra.mxu0 %v4385
    %4560 = vmatpush.bf16.msra.mxu0 %v4383
    %4561 = vmatmul.bf16.gmra.mxu0 %v4071
    %v4562 = vpop.f32.mrf.mxu0
    %v4563 = vadd.f32 %v4550, %v4562
    %v4564 = vpop.f32.mrf.mxu0
    %4565 = vdwg.mxu0
    %v4566 = vmax.f32 %v4511, 0.0
    %v4567 = vmax.f32 %v4563, 0.0
    %v4568 = vld [vmem:[%s7] sm:$0x3]
    %v4569 = vunpack.c.l.bf16 %v4568
    %v4571 = vperm.slane %v4569, 0
    %v4572 = vperm.slane %v4569, 2
    %v4575 = vperm.slane %v4571, 0
    %v4576 = vperm.slane %v4572, 0
    %v4577 = vmul.f32 %v4566, %v4575
    %v4578 = vmul.f32 %v4567, %v4576
    %v4579 = vadd.f32 %v4577, %v4578
    %4580 = vadd.xlane.f32.xlu0 %v4579
    %v4581 = vpop.xlane.xlu0 %4580
    %v4582 = vld [vmem:[#allocation2] sm:$0x1]
    %v4584 = vperm.slane %v4582, 0
    %v4586 = vadd.f32 %v4581, %v4584
    %vm4587 = vcmask 7168
    %4588 = vst.msk [vmem:[%s9] sm:$0xff] %vm4587, %v4586
    // Predicated region
    $region58: #{tpu_custom_call.1} parent=1 // pred_check
      _
    $region59: #{tpu_custom_call.1} parent=1 // pred_check_branch
      %4590 = sbr.rel (0) target = $region61
    $region60: #{tpu_custom_call.1} parent=1 // pred_region
      _
    $region61: #{tpu_custom_call.1} parent=1 // pred_fallthru
      _
    // Predicated region
    $region62: #{tpu_custom_call.1} parent=1 // pred_check
      _
    $region63: #{tpu_custom_call.1} parent=1 // pred_check_branch
      %4592 = sbr.rel (0) target = $region65
    $region64: #{tpu_custom_call.1} parent=1 // pred_region
      _
    $region65: #{tpu_custom_call.1} parent=1 // pred_fallthru
      _
    %4593 = vsyncpa [#allocation4], 1
    %4594 = vsyncpa [#allocation6], 1
    %4595 = vsyncpa [#allocation9], 1

</llo_original>
